<compile_context>
chip_gen: v7x
topology: tpu7x:2x2x1
jax: 0.10.0
libtpu: 0.0.40
codegen_flags: <defaults>
</compile_context>

<pallas_src>
import functools

import jax
import jax.numpy as jnp
from jax.experimental import pallas as pl
from jax.experimental.pallas import tpu as pltpu

_VMEM = pl.BlockSpec(memory_space=pltpu.MemorySpace.VMEM)
_SMEM = pl.BlockSpec(memory_space=pltpu.MemorySpace.SMEM)


# ----------------------------------------------------------------------------
# Fused kernel: all LSTM layers + final Linear in one invocation
# ----------------------------------------------------------------------------
def fused_net_kernel(x_ref, w_ref, b_ref, h0_ref, c0_ref, fcw_ref, fcb_ref, out_ref):
    """Whole network in one kernel; fully unrolled L*T cell graph (wavefront ILP).

    x_ref   : (T, B, Hp)      f32 time-major input, features zero-padded to Hp lanes
    w_ref   : (L, 2*Hp, 4*Hp) bf16 [W_ih ; W_hh] stacked on rows; gate k occupies
                              lanes [k*Hp,(k+1)*Hp), gate order [i, f, o, g]
    b_ref   : (L, 1, 4*Hp)    f32 b_ih + b_hh, same gate layout
    h0_ref  : (L, B, Hp)      f32 initial hidden states (cols H..Hp zero)
    c0_ref  : (L, B, Hp)      f32 initial cell states   (cols H..Hp zero)
    fcw_ref : (Hp, Op)        bf16 final Linear weight (rows H..Hp / cols O..Op zero)
    fcb_ref : (1,)            f32 final Linear bias (SMEM scalar)
    out_ref : (B, Op)         f32 prediction at the last timestep (lane-padded)
    """
    L, B, Hp = h0_ref.shape
    T = x_ref.shape[0]

    # Current layer's per-timestep inputs (values, not refs); starts as raw input.
    xs = [x_ref[t] for t in range(T)]

    h = None
    for l in range(L):                   # static unroll: 6 layers x 3 steps = 18 cells
        w = w_ref[l]                     # (2Hp, 4Hp) bf16
        b = b_ref[l]                     # (1, 4Hp)  f32
        h = h0_ref[l]                    # (B, Hp)   f32
        c = c0_ref[l]                    # (B, Hp)   f32
        outs = []
        for t in range(T):
            # One fused MXU matmul per cell: [x_t ; h_{t-1}] @ [W_ih ; W_hh].
            xh = jnp.concatenate([xs[t], h], axis=-1).astype(jnp.bfloat16)   # (B, 2Hp)
            gates = jnp.dot(xh, w, preferred_element_type=jnp.float32) + b   # (B, 4Hp)
            sig = jax.nn.sigmoid(gates[:, :3 * Hp])        # i | f | o in one sweep
            i_g = sig[:, 0 * Hp:1 * Hp]
            f_g = sig[:, 1 * Hp:2 * Hp]
            o_g = sig[:, 2 * Hp:3 * Hp]
            g_g = jnp.tanh(gates[:, 3 * Hp:4 * Hp])
            c = f_g * c + i_g * g_g
            h = o_g * jnp.tanh(c)
            if l < L - 1:                # last layer's per-step outputs are dead
                outs.append(h)
        if l < L - 1:
            xs = outs

    # Dropout(0.2): identity in eval mode.
    # TODO(synk): training-mode dropout mask (pltpu.prng_*) not applied.
    out_ref[...] = (jnp.dot(h.astype(jnp.bfloat16), fcw_ref[...],
                            preferred_element_type=jnp.float32) + fcb_ref[0])


# ----------------------------------------------------------------------------
# Wrapper
# ----------------------------------------------------------------------------
@functools.partial(jax.jit, static_argnames=("output_size",))
def net_forward(x, packed, h0, c0, output_size):
    """x: (batch, input_size, seq_len); h0/c0: (L, batch, H). Returns (batch, output)."""
    B, F, T = x.shape
    L, _, H = h0.shape
    Hp = packed["w"].shape[1] // 2
    Op = packed["fc_w"].shape[1]

    # Module glue: permute(0, 2, 1) -> (B, T, F); additionally go time-major and
    # zero-pad features / hidden state to the lane-aligned width Hp.
    x_tbf = jnp.transpose(x, (2, 0, 1)).astype(jnp.float32)            # (T, B, F)
    x_pad = jnp.pad(x_tbf, ((0, 0), (0, 0), (0, Hp - F)))              # (T, B, Hp)
    h0_pad = jnp.pad(h0.astype(jnp.float32), ((0, 0), (0, 0), (0, Hp - H)))
    c0_pad = jnp.pad(c0.astype(jnp.float32), ((0, 0), (0, 0), (0, Hp - H)))

    out_pad = pl.pallas_call(
        fused_net_kernel,
        out_shape=jax.ShapeDtypeStruct((B, Op), jnp.float32),
        in_specs=[_VMEM, _VMEM, _VMEM, _VMEM, _VMEM, _VMEM, _SMEM],
        out_specs=_VMEM,
        compiler_params=pltpu.CompilerParams(vmem_limit_bytes=8 * 1024 * 1024),
    )(x_pad, packed["w"], packed["b"], h0_pad, c0_pad,
      packed["fc_w"], packed["fc_b"])
    return out_pad[:, :output_size]


# ----------------------------------------------------------------------------
# Parameter init (PyTorch-style uniform(-1/sqrt(H), 1/sqrt(H)), torch layouts)
# ----------------------------------------------------------------------------
def init_raw_params(key, input_size, hidden_size, num_layers, output_size):
    bound = 1.0 / (hidden_size ** 0.5)
    lstm = []
    for l in range(num_layers):
        in_f = input_size if l == 0 else hidden_size
        key, k1, k2, k3, k4 = jax.random.split(key, 5)
        w_ih = jax.random.uniform(k1, (4 * hidden_size, in_f), jnp.float32, -bound, bound)
        w_hh = jax.random.uniform(k2, (4 * hidden_size, hidden_size), jnp.float32,
                                  -bound, bound)
        b_ih = jax.random.uniform(k3, (4 * hidden_size,), jnp.float32, -bound, bound)
        b_hh = jax.random.uniform(k4, (4 * hidden_size,), jnp.float32, -bound, bound)
        lstm.append((w_ih, w_hh, b_ih, b_hh))
    key, k5, k6 = jax.random.split(key, 3)
    fc_w = jax.random.uniform(k5, (output_size, hidden_size), jnp.float32, -bound, bound)
    fc_b = jax.random.uniform(k6, (output_size,), jnp.float32, -bound, bound)
    return {"lstm": lstm, "fc": (fc_w, fc_b)}


def pack_params(raw, hidden_size, output_size, hp=128, op=128):
    """Pad/stack torch-layout params into lane-aligned bf16 arrays for the kernel.

    Per layer one (2*hp, 4*hp) weight: rows [0,hp) = W_ih^T, rows [hp,2hp) = W_hh^T.
    Gate lane order is [i, f, o, g] (torch order is [i, f, g, o]); gate k occupies
    lanes [k*hp, k*hp+H) and the padded tail stays exactly zero.
    """
    H = hidden_size
    gate_src = (0, 1, 3, 2)              # dest gate slot k -> torch gate index
    w_l, b_l = [], []
    for (w_ih, w_hh, b_ih, b_hh) in raw["lstm"]:
        in_f = w_ih.shape[1]
        w_ih_t, w_hh_t, b = w_ih.T, w_hh.T, b_ih + b_hh
        w_p = jnp.zeros((2 * hp, 4 * hp), jnp.float32)
        b_p = jnp.zeros((1, 4 * hp), jnp.float32)
        for k, src in enumerate(gate_src):
            w_p = w_p.at[:in_f, k * hp:k * hp + H].set(w_ih_t[:, src * H:(src + 1) * H])
            w_p = w_p.at[hp:hp + H, k * hp:k * hp + H].set(w_hh_t[:, src * H:(src + 1) * H])
            b_p = b_p.at[:, k * hp:k * hp + H].set(b[None, src * H:(src + 1) * H])
        w_l.append(w_p)
        b_l.append(b_p)
    fc_w, fc_b = raw["fc"]
    fcw_p = jnp.zeros((hp, op), jnp.float32).at[:H, :output_size].set(fc_w.T)
    return {"w": jnp.stack(w_l).astype(jnp.bfloat16),
            "b": jnp.stack(b_l),                              # f32
            "fc_w": fcw_p.astype(jnp.bfloat16),
            "fc_b": fc_b.astype(jnp.float32)}                 # (output_size,) in SMEM


# ----------------------------------------------------------------------------
# Pure-JAX reference (unpadded f32, torch-equivalent math) for correctness check
# ----------------------------------------------------------------------------
def reference_forward(x, raw, h0, c0):
    H = h0.shape[-1]
    out = jnp.transpose(x, (0, 2, 1)).astype(jnp.float32)   # (B, T, F)
    T = out.shape[1]
    for l, (w_ih, w_hh, b_ih, b_hh) in enumerate(raw["lstm"]):
        h, c = h0[l], c0[l]
        b = (b_ih + b_hh)[None, :]
        ys = []
        for t in range(T):
            gates = out[:, t, :] @ w_ih.T + h @ w_hh.T + b
            i_g = jax.nn.sigmoid(gates[:, 0 * H:1 * H])
            f_g = jax.nn.sigmoid(gates[:, 1 * H:2 * H])
            g_g = jnp.tanh(gates[:, 2 * H:3 * H])
            o_g = jax.nn.sigmoid(gates[:, 3 * H:4 * H])
            c = f_g * c + i_g * g_g
            h = o_g * jnp.tanh(c)
            ys.append(h)
        out = jnp.stack(ys, axis=1)
    fc_w, fc_b = raw["fc"]
    return out[:, -1, :] @ fc_w.T + fc_b[None, :]


# ----------------------------------------------------------------------------
if __name__ == "__main__":
    input_size = 3
    hidden_size = 50
    num_layers = 6
    output_size = 1
    seq_len = 3
    batch_size = 8   # small, sublane-aligned test batch

    key = jax.random.PRNGKey(0)
    key, kx, kh, kc, kp = jax.random.split(key, 5)

    # Module-level input layout: (batch, input_size, seq_len)
    x = jax.random.normal(kx, (batch_size, input_size, seq_len), jnp.float32)
    # Deterministic stand-ins for the module's torch.randn h_0 / c_0.
    h0 = jax.random.normal(kh, (num_layers, batch_size, hidden_size), jnp.float32)
    c0 = jax.random.normal(kc, (num_layers, batch_size, hidden_size), jnp.float32)

    raw = init_raw_params(kp, input_size, hidden_size, num_layers, output_size)
    packed = pack_params(raw, hidden_size, output_size, hp=128, op=128)

    pred = jax.block_until_ready(net_forward(x, packed, h0, c0, output_size))
    ref = reference_forward(x, raw, h0, c0)

    assert pred.shape == (batch_size, output_size)
    # bf16 matmul operands (f32 accumulate / elementwise) => looser tolerance vs f32 ref.
    assert jnp.allclose(pred, ref, atol=3e-2, rtol=3e-2), "mismatch vs reference"
    print("KERNEL_OK")
</pallas_src>

<mosaic_0001>
module attributes {stable_mosaic.version = 11 : i64} {
  func.func @fused_net_kernel(%arg0: memref<3x8x128xf32, #tpu.memory_space<vmem>>, %arg1: memref<6x256x512xbf16, #tpu.memory_space<vmem>>, %arg2: memref<6x1x512xf32, #tpu.memory_space<vmem>>, %arg3: memref<6x8x128xf32, #tpu.memory_space<vmem>>, %arg4: memref<6x8x128xf32, #tpu.memory_space<vmem>>, %arg5: memref<128x128xbf16, #tpu.memory_space<vmem>>, %arg6: memref<1xf32, #tpu.memory_space<smem>>, %arg7: memref<8x128xf32, #tpu.memory_space<vmem>>) attributes {dimension_semantics = [], scalar_prefetch = 0 : i64, scratch_operands = 0 : i64, tpu.core_type = #tpu.core_type<tc>} {
    %c0 = arith.constant 0 : index
    %c0_0 = arith.constant 0 : index
    %c0_1 = arith.constant 0 : index
    %0 = vector.load %arg0[%c0, %c0_0, %c0_1] : memref<3x8x128xf32, #tpu.memory_space<vmem>>, vector<1x8x128xf32>
    %1 = vector.shape_cast %0 : vector<1x8x128xf32> to vector<8x128xf32>
    %c1 = arith.constant 1 : index
    %c0_2 = arith.constant 0 : index
    %c0_3 = arith.constant 0 : index
    %2 = vector.load %arg0[%c1, %c0_2, %c0_3] : memref<3x8x128xf32, #tpu.memory_space<vmem>>, vector<1x8x128xf32>
    %3 = vector.shape_cast %2 : vector<1x8x128xf32> to vector<8x128xf32>
    %c2 = arith.constant 2 : index
    %c0_4 = arith.constant 0 : index
    %c0_5 = arith.constant 0 : index
    %4 = vector.load %arg0[%c2, %c0_4, %c0_5] : memref<3x8x128xf32, #tpu.memory_space<vmem>>, vector<1x8x128xf32>
    %5 = vector.shape_cast %4 : vector<1x8x128xf32> to vector<8x128xf32>
    %c0_6 = arith.constant 0 : index
    %c0_7 = arith.constant 0 : index
    %c0_8 = arith.constant 0 : index
    %6 = vector.load %arg1[%c0_6, %c0_7, %c0_8] : memref<6x256x512xbf16, #tpu.memory_space<vmem>>, vector<1x256x512xbf16>
    %7 = vector.shape_cast %6 : vector<1x256x512xbf16> to vector<256x512xbf16>
    %c0_9 = arith.constant 0 : index
    %c0_10 = arith.constant 0 : index
    %c0_11 = arith.constant 0 : index
    %8 = vector.load %arg2[%c0_9, %c0_10, %c0_11] : memref<6x1x512xf32, #tpu.memory_space<vmem>>, vector<1x1x512xf32>
    %9 = vector.shape_cast %8 : vector<1x1x512xf32> to vector<1x512xf32>
    %c0_12 = arith.constant 0 : index
    %c0_13 = arith.constant 0 : index
    %c0_14 = arith.constant 0 : index
    %10 = vector.load %arg3[%c0_12, %c0_13, %c0_14] : memref<6x8x128xf32, #tpu.memory_space<vmem>>, vector<1x8x128xf32>
    %11 = vector.shape_cast %10 : vector<1x8x128xf32> to vector<8x128xf32>
    %c0_15 = arith.constant 0 : index
    %c0_16 = arith.constant 0 : index
    %c0_17 = arith.constant 0 : index
    %12 = vector.load %arg4[%c0_15, %c0_16, %c0_17] : memref<6x8x128xf32, #tpu.memory_space<vmem>>, vector<1x8x128xf32>
    %13 = vector.shape_cast %12 : vector<1x8x128xf32> to vector<8x128xf32>
    %14 = tpu.concatenate %1, %11 in 1 : vector<8x128xf32>, vector<8x128xf32> -> vector<8x256xf32>
    %15 = arith.truncf %14 : vector<8x256xf32> to vector<8x256xbf16>
    %cst = arith.constant dense<0.000000e+00> : vector<8x512xf32>
    %16 = tpu.matmul %15, %7, %cst {dimension_numbers = #tpu.dot_dimension_numbers<[1], [0], [0], [1], [0, 0, 1, 1], [], []>} : vector<8x256xbf16>, vector<256x512xbf16>, vector<8x512xf32> -> vector<8x512xf32>
    %17 = vector.broadcast %9 : vector<1x512xf32> to vector<8x512xf32>
    %18 = arith.addf %16, %17 : vector<8x512xf32>
    %19 = vector.extract_strided_slice %18 {offsets = [0, 0], sizes = [8, 384], strides = [1, 1]} : vector<8x512xf32> to vector<8x384xf32>
    %20 = arith.negf %19 : vector<8x384xf32>
    %21 = math.exp %20 : vector<8x384xf32>
    %cst_18 = arith.constant 1.000000e+00 : f32
    %22 = vector.broadcast %cst_18 : f32 to vector<8x384xf32>
    %23 = arith.addf %22, %21 : vector<8x384xf32>
    %24 = arith.divf %22, %23 : vector<8x384xf32>
    %25 = vector.extract_strided_slice %24 {offsets = [0, 0], sizes = [8, 128], strides = [1, 1]} : vector<8x384xf32> to vector<8x128xf32>
    %26 = vector.extract_strided_slice %24 {offsets = [0, 128], sizes = [8, 128], strides = [1, 1]} : vector<8x384xf32> to vector<8x128xf32>
    %27 = vector.extract_strided_slice %24 {offsets = [0, 256], sizes = [8, 128], strides = [1, 1]} : vector<8x384xf32> to vector<8x128xf32>
    %28 = vector.extract_strided_slice %18 {offsets = [0, 384], sizes = [8, 128], strides = [1, 1]} : vector<8x512xf32> to vector<8x128xf32>
    %29 = math.tanh %28 : vector<8x128xf32>
    %30 = arith.mulf %26, %13 : vector<8x128xf32>
    %31 = arith.mulf %25, %29 : vector<8x128xf32>
    %32 = arith.addf %30, %31 : vector<8x128xf32>
    %33 = math.tanh %32 : vector<8x128xf32>
    %34 = arith.mulf %27, %33 : vector<8x128xf32>
    %35 = tpu.concatenate %3, %34 in 1 : vector<8x128xf32>, vector<8x128xf32> -> vector<8x256xf32>
    %36 = arith.truncf %35 : vector<8x256xf32> to vector<8x256xbf16>
    %cst_19 = arith.constant dense<0.000000e+00> : vector<8x512xf32>
    %37 = tpu.matmul %36, %7, %cst_19 {dimension_numbers = #tpu.dot_dimension_numbers<[1], [0], [0], [1], [0, 0, 1, 1], [], []>} : vector<8x256xbf16>, vector<256x512xbf16>, vector<8x512xf32> -> vector<8x512xf32>
    %38 = vector.broadcast %9 : vector<1x512xf32> to vector<8x512xf32>
    %39 = arith.addf %37, %38 : vector<8x512xf32>
    %40 = vector.extract_strided_slice %39 {offsets = [0, 0], sizes = [8, 384], strides = [1, 1]} : vector<8x512xf32> to vector<8x384xf32>
    %41 = arith.negf %40 : vector<8x384xf32>
    %42 = math.exp %41 : vector<8x384xf32>
    %cst_20 = arith.constant 1.000000e+00 : f32
    %43 = vector.broadcast %cst_20 : f32 to vector<8x384xf32>
    %44 = arith.addf %43, %42 : vector<8x384xf32>
    %45 = arith.divf %43, %44 : vector<8x384xf32>
    %46 = vector.extract_strided_slice %45 {offsets = [0, 0], sizes = [8, 128], strides = [1, 1]} : vector<8x384xf32> to vector<8x128xf32>
    %47 = vector.extract_strided_slice %45 {offsets = [0, 128], sizes = [8, 128], strides = [1, 1]} : vector<8x384xf32> to vector<8x128xf32>
    %48 = vector.extract_strided_slice %45 {offsets = [0, 256], sizes = [8, 128], strides = [1, 1]} : vector<8x384xf32> to vector<8x128xf32>
    %49 = vector.extract_strided_slice %39 {offsets = [0, 384], sizes = [8, 128], strides = [1, 1]} : vector<8x512xf32> to vector<8x128xf32>
    %50 = math.tanh %49 : vector<8x128xf32>
    %51 = arith.mulf %47, %32 : vector<8x128xf32>
    %52 = arith.mulf %46, %50 : vector<8x128xf32>
    %53 = arith.addf %51, %52 : vector<8x128xf32>
    %54 = math.tanh %53 : vector<8x128xf32>
    %55 = arith.mulf %48, %54 : vector<8x128xf32>
    %56 = tpu.concatenate %5, %55 in 1 : vector<8x128xf32>, vector<8x128xf32> -> vector<8x256xf32>
    %57 = arith.truncf %56 : vector<8x256xf32> to vector<8x256xbf16>
    %cst_21 = arith.constant dense<0.000000e+00> : vector<8x512xf32>
    %58 = tpu.matmul %57, %7, %cst_21 {dimension_numbers = #tpu.dot_dimension_numbers<[1], [0], [0], [1], [0, 0, 1, 1], [], []>} : vector<8x256xbf16>, vector<256x512xbf16>, vector<8x512xf32> -> vector<8x512xf32>
    %59 = vector.broadcast %9 : vector<1x512xf32> to vector<8x512xf32>
    %60 = arith.addf %58, %59 : vector<8x512xf32>
    %61 = vector.extract_strided_slice %60 {offsets = [0, 0], sizes = [8, 384], strides = [1, 1]} : vector<8x512xf32> to vector<8x384xf32>
    %62 = arith.negf %61 : vector<8x384xf32>
    %63 = math.exp %62 : vector<8x384xf32>
    %cst_22 = arith.constant 1.000000e+00 : f32
    %64 = vector.broadcast %cst_22 : f32 to vector<8x384xf32>
    %65 = arith.addf %64, %63 : vector<8x384xf32>
    %66 = arith.divf %64, %65 : vector<8x384xf32>
    %67 = vector.extract_strided_slice %66 {offsets = [0, 0], sizes = [8, 128], strides = [1, 1]} : vector<8x384xf32> to vector<8x128xf32>
    %68 = vector.extract_strided_slice %66 {offsets = [0, 128], sizes = [8, 128], strides = [1, 1]} : vector<8x384xf32> to vector<8x128xf32>
    %69 = vector.extract_strided_slice %66 {offsets = [0, 256], sizes = [8, 128], strides = [1, 1]} : vector<8x384xf32> to vector<8x128xf32>
    %70 = vector.extract_strided_slice %60 {offsets = [0, 384], sizes = [8, 128], strides = [1, 1]} : vector<8x512xf32> to vector<8x128xf32>
    %71 = math.tanh %70 : vector<8x128xf32>
    %72 = arith.mulf %68, %53 : vector<8x128xf32>
    %73 = arith.mulf %67, %71 : vector<8x128xf32>
    %74 = arith.addf %72, %73 : vector<8x128xf32>
    %75 = math.tanh %74 : vector<8x128xf32>
    %76 = arith.mulf %69, %75 : vector<8x128xf32>
    %c1_23 = arith.constant 1 : index
    %c0_24 = arith.constant 0 : index
    %c0_25 = arith.constant 0 : index
    %77 = vector.load %arg1[%c1_23, %c0_24, %c0_25] : memref<6x256x512xbf16, #tpu.memory_space<vmem>>, vector<1x256x512xbf16>
    %78 = vector.shape_cast %77 : vector<1x256x512xbf16> to vector<256x512xbf16>
    %c1_26 = arith.constant 1 : index
    %c0_27 = arith.constant 0 : index
    %c0_28 = arith.constant 0 : index
    %79 = vector.load %arg2[%c1_26, %c0_27, %c0_28] : memref<6x1x512xf32, #tpu.memory_space<vmem>>, vector<1x1x512xf32>
    %80 = vector.shape_cast %79 : vector<1x1x512xf32> to vector<1x512xf32>
    %c1_29 = arith.constant 1 : index
    %c0_30 = arith.constant 0 : index
    %c0_31 = arith.constant 0 : index
    %81 = vector.load %arg3[%c1_29, %c0_30, %c0_31] : memref<6x8x128xf32, #tpu.memory_space<vmem>>, vector<1x8x128xf32>
    %82 = vector.shape_cast %81 : vector<1x8x128xf32> to vector<8x128xf32>
    %c1_32 = arith.constant 1 : index
    %c0_33 = arith.constant 0 : index
    %c0_34 = arith.constant 0 : index
    %83 = vector.load %arg4[%c1_32, %c0_33, %c0_34] : memref<6x8x128xf32, #tpu.memory_space<vmem>>, vector<1x8x128xf32>
    %84 = vector.shape_cast %83 : vector<1x8x128xf32> to vector<8x128xf32>
    %85 = tpu.concatenate %34, %82 in 1 : vector<8x128xf32>, vector<8x128xf32> -> vector<8x256xf32>
    %86 = arith.truncf %85 : vector<8x256xf32> to vector<8x256xbf16>
    %cst_35 = arith.constant dense<0.000000e+00> : vector<8x512xf32>
    %87 = tpu.matmul %86, %78, %cst_35 {dimension_numbers = #tpu.dot_dimension_numbers<[1], [0], [0], [1], [0, 0, 1, 1], [], []>} : vector<8x256xbf16>, vector<256x512xbf16>, vector<8x512xf32> -> vector<8x512xf32>
    %88 = vector.broadcast %80 : vector<1x512xf32> to vector<8x512xf32>
    %89 = arith.addf %87, %88 : vector<8x512xf32>
    %90 = vector.extract_strided_slice %89 {offsets = [0, 0], sizes = [8, 384], strides = [1, 1]} : vector<8x512xf32> to vector<8x384xf32>
    %91 = arith.negf %90 : vector<8x384xf32>
    %92 = math.exp %91 : vector<8x384xf32>
    %cst_36 = arith.constant 1.000000e+00 : f32
    %93 = vector.broadcast %cst_36 : f32 to vector<8x384xf32>
    %94 = arith.addf %93, %92 : vector<8x384xf32>
    %95 = arith.divf %93, %94 : vector<8x384xf32>
    %96 = vector.extract_strided_slice %95 {offsets = [0, 0], sizes = [8, 128], strides = [1, 1]} : vector<8x384xf32> to vector<8x128xf32>
    %97 = vector.extract_strided_slice %95 {offsets = [0, 128], sizes = [8, 128], strides = [1, 1]} : vector<8x384xf32> to vector<8x128xf32>
    %98 = vector.extract_strided_slice %95 {offsets = [0, 256], sizes = [8, 128], strides = [1, 1]} : vector<8x384xf32> to vector<8x128xf32>
    %99 = vector.extract_strided_slice %89 {offsets = [0, 384], sizes = [8, 128], strides = [1, 1]} : vector<8x512xf32> to vector<8x128xf32>
    %100 = math.tanh %99 : vector<8x128xf32>
    %101 = arith.mulf %97, %84 : vector<8x128xf32>
    %102 = arith.mulf %96, %100 : vector<8x128xf32>
    %103 = arith.addf %101, %102 : vector<8x128xf32>
    %104 = math.tanh %103 : vector<8x128xf32>
    %105 = arith.mulf %98, %104 : vector<8x128xf32>
    %106 = tpu.concatenate %55, %105 in 1 : vector<8x128xf32>, vector<8x128xf32> -> vector<8x256xf32>
    %107 = arith.truncf %106 : vector<8x256xf32> to vector<8x256xbf16>
    %cst_37 = arith.constant dense<0.000000e+00> : vector<8x512xf32>
    %108 = tpu.matmul %107, %78, %cst_37 {dimension_numbers = #tpu.dot_dimension_numbers<[1], [0], [0], [1], [0, 0, 1, 1], [], []>} : vector<8x256xbf16>, vector<256x512xbf16>, vector<8x512xf32> -> vector<8x512xf32>
    %109 = vector.broadcast %80 : vector<1x512xf32> to vector<8x512xf32>
    %110 = arith.addf %108, %109 : vector<8x512xf32>
    %111 = vector.extract_strided_slice %110 {offsets = [0, 0], sizes = [8, 384], strides = [1, 1]} : vector<8x512xf32> to vector<8x384xf32>
    %112 = arith.negf %111 : vector<8x384xf32>
    %113 = math.exp %112 : vector<8x384xf32>
    %cst_38 = arith.constant 1.000000e+00 : f32
    %114 = vector.broadcast %cst_38 : f32 to vector<8x384xf32>
    %115 = arith.addf %114, %113 : vector<8x384xf32>
    %116 = arith.divf %114, %115 : vector<8x384xf32>
    %117 = vector.extract_strided_slice %116 {offsets = [0, 0], sizes = [8, 128], strides = [1, 1]} : vector<8x384xf32> to vector<8x128xf32>
    %118 = vector.extract_strided_slice %116 {offsets = [0, 128], sizes = [8, 128], strides = [1, 1]} : vector<8x384xf32> to vector<8x128xf32>
    %119 = vector.extract_strided_slice %116 {offsets = [0, 256], sizes = [8, 128], strides = [1, 1]} : vector<8x384xf32> to vector<8x128xf32>
    %120 = vector.extract_strided_slice %110 {offsets = [0, 384], sizes = [8, 128], strides = [1, 1]} : vector<8x512xf32> to vector<8x128xf32>
    %121 = math.tanh %120 : vector<8x128xf32>
    %122 = arith.mulf %118, %103 : vector<8x128xf32>
    %123 = arith.mulf %117, %121 : vector<8x128xf32>
    %124 = arith.addf %122, %123 : vector<8x128xf32>
    %125 = math.tanh %124 : vector<8x128xf32>
    %126 = arith.mulf %119, %125 : vector<8x128xf32>
    %127 = tpu.concatenate %76, %126 in 1 : vector<8x128xf32>, vector<8x128xf32> -> vector<8x256xf32>
    %128 = arith.truncf %127 : vector<8x256xf32> to vector<8x256xbf16>
    %cst_39 = arith.constant dense<0.000000e+00> : vector<8x512xf32>
    %129 = tpu.matmul %128, %78, %cst_39 {dimension_numbers = #tpu.dot_dimension_numbers<[1], [0], [0], [1], [0, 0, 1, 1], [], []>} : vector<8x256xbf16>, vector<256x512xbf16>, vector<8x512xf32> -> vector<8x512xf32>
    %130 = vector.broadcast %80 : vector<1x512xf32> to vector<8x512xf32>
    %131 = arith.addf %129, %130 : vector<8x512xf32>
    %132 = vector.extract_strided_slice %131 {offsets = [0, 0], sizes = [8, 384], strides = [1, 1]} : vector<8x512xf32> to vector<8x384xf32>
    %133 = arith.negf %132 : vector<8x384xf32>
    %134 = math.exp %133 : vector<8x384xf32>
    %cst_40 = arith.constant 1.000000e+00 : f32
    %135 = vector.broadcast %cst_40 : f32 to vector<8x384xf32>
    %136 = arith.addf %135, %134 : vector<8x384xf32>
    %137 = arith.divf %135, %136 : vector<8x384xf32>
    %138 = vector.extract_strided_slice %137 {offsets = [0, 0], sizes = [8, 128], strides = [1, 1]} : vector<8x384xf32> to vector<8x128xf32>
    %139 = vector.extract_strided_slice %137 {offsets = [0, 128], sizes = [8, 128], strides = [1, 1]} : vector<8x384xf32> to vector<8x128xf32>
    %140 = vector.extract_strided_slice %137 {offsets = [0, 256], sizes = [8, 128], strides = [1, 1]} : vector<8x384xf32> to vector<8x128xf32>
    %141 = vector.extract_strided_slice %131 {offsets = [0, 384], sizes = [8, 128], strides = [1, 1]} : vector<8x512xf32> to vector<8x128xf32>
    %142 = math.tanh %141 : vector<8x128xf32>
    %143 = arith.mulf %139, %124 : vector<8x128xf32>
    %144 = arith.mulf %138, %142 : vector<8x128xf32>
    %145 = arith.addf %143, %144 : vector<8x128xf32>
    %146 = math.tanh %145 : vector<8x128xf32>
    %147 = arith.mulf %140, %146 : vector<8x128xf32>
    %c2_41 = arith.constant 2 : index
    %c0_42 = arith.constant 0 : index
    %c0_43 = arith.constant 0 : index
    %148 = vector.load %arg1[%c2_41, %c0_42, %c0_43] : memref<6x256x512xbf16, #tpu.memory_space<vmem>>, vector<1x256x512xbf16>
    %149 = vector.shape_cast %148 : vector<1x256x512xbf16> to vector<256x512xbf16>
    %c2_44 = arith.constant 2 : index
    %c0_45 = arith.constant 0 : index
    %c0_46 = arith.constant 0 : index
    %150 = vector.load %arg2[%c2_44, %c0_45, %c0_46] : memref<6x1x512xf32, #tpu.memory_space<vmem>>, vector<1x1x512xf32>
    %151 = vector.shape_cast %150 : vector<1x1x512xf32> to vector<1x512xf32>
    %c2_47 = arith.constant 2 : index
    %c0_48 = arith.constant 0 : index
    %c0_49 = arith.constant 0 : index
    %152 = vector.load %arg3[%c2_47, %c0_48, %c0_49] : memref<6x8x128xf32, #tpu.memory_space<vmem>>, vector<1x8x128xf32>
    %153 = vector.shape_cast %152 : vector<1x8x128xf32> to vector<8x128xf32>
    %c2_50 = arith.constant 2 : index
    %c0_51 = arith.constant 0 : index
    %c0_52 = arith.constant 0 : index
    %154 = vector.load %arg4[%c2_50, %c0_51, %c0_52] : memref<6x8x128xf32, #tpu.memory_space<vmem>>, vector<1x8x128xf32>
    %155 = vector.shape_cast %154 : vector<1x8x128xf32> to vector<8x128xf32>
    %156 = tpu.concatenate %105, %153 in 1 : vector<8x128xf32>, vector<8x128xf32> -> vector<8x256xf32>
    %157 = arith.truncf %156 : vector<8x256xf32> to vector<8x256xbf16>
    %cst_53 = arith.constant dense<0.000000e+00> : vector<8x512xf32>
    %158 = tpu.matmul %157, %149, %cst_53 {dimension_numbers = #tpu.dot_dimension_numbers<[1], [0], [0], [1], [0, 0, 1, 1], [], []>} : vector<8x256xbf16>, vector<256x512xbf16>, vector<8x512xf32> -> vector<8x512xf32>
    %159 = vector.broadcast %151 : vector<1x512xf32> to vector<8x512xf32>
    %160 = arith.addf %158, %159 : vector<8x512xf32>
    %161 = vector.extract_strided_slice %160 {offsets = [0, 0], sizes = [8, 384], strides = [1, 1]} : vector<8x512xf32> to vector<8x384xf32>
    %162 = arith.negf %161 : vector<8x384xf32>
    %163 = math.exp %162 : vector<8x384xf32>
    %cst_54 = arith.constant 1.000000e+00 : f32
    %164 = vector.broadcast %cst_54 : f32 to vector<8x384xf32>
    %165 = arith.addf %164, %163 : vector<8x384xf32>
    %166 = arith.divf %164, %165 : vector<8x384xf32>
    %167 = vector.extract_strided_slice %166 {offsets = [0, 0], sizes = [8, 128], strides = [1, 1]} : vector<8x384xf32> to vector<8x128xf32>
    %168 = vector.extract_strided_slice %166 {offsets = [0, 128], sizes = [8, 128], strides = [1, 1]} : vector<8x384xf32> to vector<8x128xf32>
    %169 = vector.extract_strided_slice %166 {offsets = [0, 256], sizes = [8, 128], strides = [1, 1]} : vector<8x384xf32> to vector<8x128xf32>
    %170 = vector.extract_strided_slice %160 {offsets = [0, 384], sizes = [8, 128], strides = [1, 1]} : vector<8x512xf32> to vector<8x128xf32>
    %171 = math.tanh %170 : vector<8x128xf32>
    %172 = arith.mulf %168, %155 : vector<8x128xf32>
    %173 = arith.mulf %167, %171 : vector<8x128xf32>
    %174 = arith.addf %172, %173 : vector<8x128xf32>
    %175 = math.tanh %174 : vector<8x128xf32>
    %176 = arith.mulf %169, %175 : vector<8x128xf32>
    %177 = tpu.concatenate %126, %176 in 1 : vector<8x128xf32>, vector<8x128xf32> -> vector<8x256xf32>
    %178 = arith.truncf %177 : vector<8x256xf32> to vector<8x256xbf16>
    %cst_55 = arith.constant dense<0.000000e+00> : vector<8x512xf32>
    %179 = tpu.matmul %178, %149, %cst_55 {dimension_numbers = #tpu.dot_dimension_numbers<[1], [0], [0], [1], [0, 0, 1, 1], [], []>} : vector<8x256xbf16>, vector<256x512xbf16>, vector<8x512xf32> -> vector<8x512xf32>
    %180 = vector.broadcast %151 : vector<1x512xf32> to vector<8x512xf32>
    %181 = arith.addf %179, %180 : vector<8x512xf32>
    %182 = vector.extract_strided_slice %181 {offsets = [0, 0], sizes = [8, 384], strides = [1, 1]} : vector<8x512xf32> to vector<8x384xf32>
    %183 = arith.negf %182 : vector<8x384xf32>
    %184 = math.exp %183 : vector<8x384xf32>
    %cst_56 = arith.constant 1.000000e+00 : f32
    %185 = vector.broadcast %cst_56 : f32 to vector<8x384xf32>
    %186 = arith.addf %185, %184 : vector<8x384xf32>
    %187 = arith.divf %185, %186 : vector<8x384xf32>
    %188 = vector.extract_strided_slice %187 {offsets = [0, 0], sizes = [8, 128], strides = [1, 1]} : vector<8x384xf32> to vector<8x128xf32>
    %189 = vector.extract_strided_slice %187 {offsets = [0, 128], sizes = [8, 128], strides = [1, 1]} : vector<8x384xf32> to vector<8x128xf32>
    %190 = vector.extract_strided_slice %187 {offsets = [0, 256], sizes = [8, 128], strides = [1, 1]} : vector<8x384xf32> to vector<8x128xf32>
    %191 = vector.extract_strided_slice %181 {offsets = [0, 384], sizes = [8, 128], strides = [1, 1]} : vector<8x512xf32> to vector<8x128xf32>
    %192 = math.tanh %191 : vector<8x128xf32>
    %193 = arith.mulf %189, %174 : vector<8x128xf32>
    %194 = arith.mulf %188, %192 : vector<8x128xf32>
    %195 = arith.addf %193, %194 : vector<8x128xf32>
    %196 = math.tanh %195 : vector<8x128xf32>
    %197 = arith.mulf %190, %196 : vector<8x128xf32>
    %198 = tpu.concatenate %147, %197 in 1 : vector<8x128xf32>, vector<8x128xf32> -> vector<8x256xf32>
    %199 = arith.truncf %198 : vector<8x256xf32> to vector<8x256xbf16>
    %cst_57 = arith.constant dense<0.000000e+00> : vector<8x512xf32>
    %200 = tpu.matmul %199, %149, %cst_57 {dimension_numbers = #tpu.dot_dimension_numbers<[1], [0], [0], [1], [0, 0, 1, 1], [], []>} : vector<8x256xbf16>, vector<256x512xbf16>, vector<8x512xf32> -> vector<8x512xf32>
    %201 = vector.broadcast %151 : vector<1x512xf32> to vector<8x512xf32>
    %202 = arith.addf %200, %201 : vector<8x512xf32>
    %203 = vector.extract_strided_slice %202 {offsets = [0, 0], sizes = [8, 384], strides = [1, 1]} : vector<8x512xf32> to vector<8x384xf32>
    %204 = arith.negf %203 : vector<8x384xf32>
    %205 = math.exp %204 : vector<8x384xf32>
    %cst_58 = arith.constant 1.000000e+00 : f32
    %206 = vector.broadcast %cst_58 : f32 to vector<8x384xf32>
    %207 = arith.addf %206, %205 : vector<8x384xf32>
    %208 = arith.divf %206, %207 : vector<8x384xf32>
    %209 = vector.extract_strided_slice %208 {offsets = [0, 0], sizes = [8, 128], strides = [1, 1]} : vector<8x384xf32> to vector<8x128xf32>
    %210 = vector.extract_strided_slice %208 {offsets = [0, 128], sizes = [8, 128], strides = [1, 1]} : vector<8x384xf32> to vector<8x128xf32>
    %211 = vector.extract_strided_slice %208 {offsets = [0, 256], sizes = [8, 128], strides = [1, 1]} : vector<8x384xf32> to vector<8x128xf32>
    %212 = vector.extract_strided_slice %202 {offsets = [0, 384], sizes = [8, 128], strides = [1, 1]} : vector<8x512xf32> to vector<8x128xf32>
    %213 = math.tanh %212 : vector<8x128xf32>
    %214 = arith.mulf %210, %195 : vector<8x128xf32>
    %215 = arith.mulf %209, %213 : vector<8x128xf32>
    %216 = arith.addf %214, %215 : vector<8x128xf32>
    %217 = math.tanh %216 : vector<8x128xf32>
    %218 = arith.mulf %211, %217 : vector<8x128xf32>
    %c3 = arith.constant 3 : index
    %c0_59 = arith.constant 0 : index
    %c0_60 = arith.constant 0 : index
    %219 = vector.load %arg1[%c3, %c0_59, %c0_60] : memref<6x256x512xbf16, #tpu.memory_space<vmem>>, vector<1x256x512xbf16>
    %220 = vector.shape_cast %219 : vector<1x256x512xbf16> to vector<256x512xbf16>
    %c3_61 = arith.constant 3 : index
    %c0_62 = arith.constant 0 : index
    %c0_63 = arith.constant 0 : index
    %221 = vector.load %arg2[%c3_61, %c0_62, %c0_63] : memref<6x1x512xf32, #tpu.memory_space<vmem>>, vector<1x1x512xf32>
    %222 = vector.shape_cast %221 : vector<1x1x512xf32> to vector<1x512xf32>
    %c3_64 = arith.constant 3 : index
    %c0_65 = arith.constant 0 : index
    %c0_66 = arith.constant 0 : index
    %223 = vector.load %arg3[%c3_64, %c0_65, %c0_66] : memref<6x8x128xf32, #tpu.memory_space<vmem>>, vector<1x8x128xf32>
    %224 = vector.shape_cast %223 : vector<1x8x128xf32> to vector<8x128xf32>
    %c3_67 = arith.constant 3 : index
    %c0_68 = arith.constant 0 : index
    %c0_69 = arith.constant 0 : index
    %225 = vector.load %arg4[%c3_67, %c0_68, %c0_69] : memref<6x8x128xf32, #tpu.memory_space<vmem>>, vector<1x8x128xf32>
    %226 = vector.shape_cast %225 : vector<1x8x128xf32> to vector<8x128xf32>
    %227 = tpu.concatenate %176, %224 in 1 : vector<8x128xf32>, vector<8x128xf32> -> vector<8x256xf32>
    %228 = arith.truncf %227 : vector<8x256xf32> to vector<8x256xbf16>
    %cst_70 = arith.constant dense<0.000000e+00> : vector<8x512xf32>
    %229 = tpu.matmul %228, %220, %cst_70 {dimension_numbers = #tpu.dot_dimension_numbers<[1], [0], [0], [1], [0, 0, 1, 1], [], []>} : vector<8x256xbf16>, vector<256x512xbf16>, vector<8x512xf32> -> vector<8x512xf32>
    %230 = vector.broadcast %222 : vector<1x512xf32> to vector<8x512xf32>
    %231 = arith.addf %229, %230 : vector<8x512xf32>
    %232 = vector.extract_strided_slice %231 {offsets = [0, 0], sizes = [8, 384], strides = [1, 1]} : vector<8x512xf32> to vector<8x384xf32>
    %233 = arith.negf %232 : vector<8x384xf32>
    %234 = math.exp %233 : vector<8x384xf32>
    %cst_71 = arith.constant 1.000000e+00 : f32
    %235 = vector.broadcast %cst_71 : f32 to vector<8x384xf32>
    %236 = arith.addf %235, %234 : vector<8x384xf32>
    %237 = arith.divf %235, %236 : vector<8x384xf32>
    %238 = vector.extract_strided_slice %237 {offsets = [0, 0], sizes = [8, 128], strides = [1, 1]} : vector<8x384xf32> to vector<8x128xf32>
    %239 = vector.extract_strided_slice %237 {offsets = [0, 128], sizes = [8, 128], strides = [1, 1]} : vector<8x384xf32> to vector<8x128xf32>
    %240 = vector.extract_strided_slice %237 {offsets = [0, 256], sizes = [8, 128], strides = [1, 1]} : vector<8x384xf32> to vector<8x128xf32>
    %241 = vector.extract_strided_slice %231 {offsets = [0, 384], sizes = [8, 128], strides = [1, 1]} : vector<8x512xf32> to vector<8x128xf32>
    %242 = math.tanh %241 : vector<8x128xf32>
    %243 = arith.mulf %239, %226 : vector<8x128xf32>
    %244 = arith.mulf %238, %242 : vector<8x128xf32>
    %245 = arith.addf %243, %244 : vector<8x128xf32>
    %246 = math.tanh %245 : vector<8x128xf32>
    %247 = arith.mulf %240, %246 : vector<8x128xf32>
    %248 = tpu.concatenate %197, %247 in 1 : vector<8x128xf32>, vector<8x128xf32> -> vector<8x256xf32>
    %249 = arith.truncf %248 : vector<8x256xf32> to vector<8x256xbf16>
    %cst_72 = arith.constant dense<0.000000e+00> : vector<8x512xf32>
    %250 = tpu.matmul %249, %220, %cst_72 {dimension_numbers = #tpu.dot_dimension_numbers<[1], [0], [0], [1], [0, 0, 1, 1], [], []>} : vector<8x256xbf16>, vector<256x512xbf16>, vector<8x512xf32> -> vector<8x512xf32>
    %251 = vector.broadcast %222 : vector<1x512xf32> to vector<8x512xf32>
    %252 = arith.addf %250, %251 : vector<8x512xf32>
    %253 = vector.extract_strided_slice %252 {offsets = [0, 0], sizes = [8, 384], strides = [1, 1]} : vector<8x512xf32> to vector<8x384xf32>
    %254 = arith.negf %253 : vector<8x384xf32>
    %255 = math.exp %254 : vector<8x384xf32>
    %cst_73 = arith.constant 1.000000e+00 : f32
    %256 = vector.broadcast %cst_73 : f32 to vector<8x384xf32>
    %257 = arith.addf %256, %255 : vector<8x384xf32>
    %258 = arith.divf %256, %257 : vector<8x384xf32>
    %259 = vector.extract_strided_slice %258 {offsets = [0, 0], sizes = [8, 128], strides = [1, 1]} : vector<8x384xf32> to vector<8x128xf32>
    %260 = vector.extract_strided_slice %258 {offsets = [0, 128], sizes = [8, 128], strides = [1, 1]} : vector<8x384xf32> to vector<8x128xf32>
    %261 = vector.extract_strided_slice %258 {offsets = [0, 256], sizes = [8, 128], strides = [1, 1]} : vector<8x384xf32> to vector<8x128xf32>
    %262 = vector.extract_strided_slice %252 {offsets = [0, 384], sizes = [8, 128], strides = [1, 1]} : vector<8x512xf32> to vector<8x128xf32>
    %263 = math.tanh %262 : vector<8x128xf32>
    %264 = arith.mulf %260, %245 : vector<8x128xf32>
    %265 = arith.mulf %259, %263 : vector<8x128xf32>
    %266 = arith.addf %264, %265 : vector<8x128xf32>
    %267 = math.tanh %266 : vector<8x128xf32>
    %268 = arith.mulf %261, %267 : vector<8x128xf32>
    %269 = tpu.concatenate %218, %268 in 1 : vector<8x128xf32>, vector<8x128xf32> -> vector<8x256xf32>
    %270 = arith.truncf %269 : vector<8x256xf32> to vector<8x256xbf16>
    %cst_74 = arith.constant dense<0.000000e+00> : vector<8x512xf32>
    %271 = tpu.matmul %270, %220, %cst_74 {dimension_numbers = #tpu.dot_dimension_numbers<[1], [0], [0], [1], [0, 0, 1, 1], [], []>} : vector<8x256xbf16>, vector<256x512xbf16>, vector<8x512xf32> -> vector<8x512xf32>
    %272 = vector.broadcast %222 : vector<1x512xf32> to vector<8x512xf32>
    %273 = arith.addf %271, %272 : vector<8x512xf32>
    %274 = vector.extract_strided_slice %273 {offsets = [0, 0], sizes = [8, 384], strides = [1, 1]} : vector<8x512xf32> to vector<8x384xf32>
    %275 = arith.negf %274 : vector<8x384xf32>
    %276 = math.exp %275 : vector<8x384xf32>
    %cst_75 = arith.constant 1.000000e+00 : f32
    %277 = vector.broadcast %cst_75 : f32 to vector<8x384xf32>
    %278 = arith.addf %277, %276 : vector<8x384xf32>
    %279 = arith.divf %277, %278 : vector<8x384xf32>
    %280 = vector.extract_strided_slice %279 {offsets = [0, 0], sizes = [8, 128], strides = [1, 1]} : vector<8x384xf32> to vector<8x128xf32>
    %281 = vector.extract_strided_slice %279 {offsets = [0, 128], sizes = [8, 128], strides = [1, 1]} : vector<8x384xf32> to vector<8x128xf32>
    %282 = vector.extract_strided_slice %279 {offsets = [0, 256], sizes = [8, 128], strides = [1, 1]} : vector<8x384xf32> to vector<8x128xf32>
    %283 = vector.extract_strided_slice %273 {offsets = [0, 384], sizes = [8, 128], strides = [1, 1]} : vector<8x512xf32> to vector<8x128xf32>
    %284 = math.tanh %283 : vector<8x128xf32>
    %285 = arith.mulf %281, %266 : vector<8x128xf32>
    %286 = arith.mulf %280, %284 : vector<8x128xf32>
    %287 = arith.addf %285, %286 : vector<8x128xf32>
    %288 = math.tanh %287 : vector<8x128xf32>
    %289 = arith.mulf %282, %288 : vector<8x128xf32>
    %c4 = arith.constant 4 : index
    %c0_76 = arith.constant 0 : index
    %c0_77 = arith.constant 0 : index
    %290 = vector.load %arg1[%c4, %c0_76, %c0_77] : memref<6x256x512xbf16, #tpu.memory_space<vmem>>, vector<1x256x512xbf16>
    %291 = vector.shape_cast %290 : vector<1x256x512xbf16> to vector<256x512xbf16>
    %c4_78 = arith.constant 4 : index
    %c0_79 = arith.constant 0 : index
    %c0_80 = arith.constant 0 : index
    %292 = vector.load %arg2[%c4_78, %c0_79, %c0_80] : memref<6x1x512xf32, #tpu.memory_space<vmem>>, vector<1x1x512xf32>
    %293 = vector.shape_cast %292 : vector<1x1x512xf32> to vector<1x512xf32>
    %c4_81 = arith.constant 4 : index
    %c0_82 = arith.constant 0 : index
    %c0_83 = arith.constant 0 : index
    %294 = vector.load %arg3[%c4_81, %c0_82, %c0_83] : memref<6x8x128xf32, #tpu.memory_space<vmem>>, vector<1x8x128xf32>
    %295 = vector.shape_cast %294 : vector<1x8x128xf32> to vector<8x128xf32>
    %c4_84 = arith.constant 4 : index
    %c0_85 = arith.constant 0 : index
    %c0_86 = arith.constant 0 : index
    %296 = vector.load %arg4[%c4_84, %c0_85, %c0_86] : memref<6x8x128xf32, #tpu.memory_space<vmem>>, vector<1x8x128xf32>
    %297 = vector.shape_cast %296 : vector<1x8x128xf32> to vector<8x128xf32>
    %298 = tpu.concatenate %247, %295 in 1 : vector<8x128xf32>, vector<8x128xf32> -> vector<8x256xf32>
    %299 = arith.truncf %298 : vector<8x256xf32> to vector<8x256xbf16>
    %cst_87 = arith.constant dense<0.000000e+00> : vector<8x512xf32>
    %300 = tpu.matmul %299, %291, %cst_87 {dimension_numbers = #tpu.dot_dimension_numbers<[1], [0], [0], [1], [0, 0, 1, 1], [], []>} : vector<8x256xbf16>, vector<256x512xbf16>, vector<8x512xf32> -> vector<8x512xf32>
    %301 = vector.broadcast %293 : vector<1x512xf32> to vector<8x512xf32>
    %302 = arith.addf %300, %301 : vector<8x512xf32>
    %303 = vector.extract_strided_slice %302 {offsets = [0, 0], sizes = [8, 384], strides = [1, 1]} : vector<8x512xf32> to vector<8x384xf32>
    %304 = arith.negf %303 : vector<8x384xf32>
    %305 = math.exp %304 : vector<8x384xf32>
    %cst_88 = arith.constant 1.000000e+00 : f32
    %306 = vector.broadcast %cst_88 : f32 to vector<8x384xf32>
    %307 = arith.addf %306, %305 : vector<8x384xf32>
    %308 = arith.divf %306, %307 : vector<8x384xf32>
    %309 = vector.extract_strided_slice %308 {offsets = [0, 0], sizes = [8, 128], strides = [1, 1]} : vector<8x384xf32> to vector<8x128xf32>
    %310 = vector.extract_strided_slice %308 {offsets = [0, 128], sizes = [8, 128], strides = [1, 1]} : vector<8x384xf32> to vector<8x128xf32>
    %311 = vector.extract_strided_slice %308 {offsets = [0, 256], sizes = [8, 128], strides = [1, 1]} : vector<8x384xf32> to vector<8x128xf32>
    %312 = vector.extract_strided_slice %302 {offsets = [0, 384], sizes = [8, 128], strides = [1, 1]} : vector<8x512xf32> to vector<8x128xf32>
    %313 = math.tanh %312 : vector<8x128xf32>
    %314 = arith.mulf %310, %297 : vector<8x128xf32>
    %315 = arith.mulf %309, %313 : vector<8x128xf32>
    %316 = arith.addf %314, %315 : vector<8x128xf32>
    %317 = math.tanh %316 : vector<8x128xf32>
    %318 = arith.mulf %311, %317 : vector<8x128xf32>
    %319 = tpu.concatenate %268, %318 in 1 : vector<8x128xf32>, vector<8x128xf32> -> vector<8x256xf32>
    %320 = arith.truncf %319 : vector<8x256xf32> to vector<8x256xbf16>
    %cst_89 = arith.constant dense<0.000000e+00> : vector<8x512xf32>
    %321 = tpu.matmul %320, %291, %cst_89 {dimension_numbers = #tpu.dot_dimension_numbers<[1], [0], [0], [1], [0, 0, 1, 1], [], []>} : vector<8x256xbf16>, vector<256x512xbf16>, vector<8x512xf32> -> vector<8x512xf32>
    %322 = vector.broadcast %293 : vector<1x512xf32> to vector<8x512xf32>
    %323 = arith.addf %321, %322 : vector<8x512xf32>
    %324 = vector.extract_strided_slice %323 {offsets = [0, 0], sizes = [8, 384], strides = [1, 1]} : vector<8x512xf32> to vector<8x384xf32>
    %325 = arith.negf %324 : vector<8x384xf32>
    %326 = math.exp %325 : vector<8x384xf32>
    %cst_90 = arith.constant 1.000000e+00 : f32
    %327 = vector.broadcast %cst_90 : f32 to vector<8x384xf32>
    %328 = arith.addf %327, %326 : vector<8x384xf32>
    %329 = arith.divf %327, %328 : vector<8x384xf32>
    %330 = vector.extract_strided_slice %329 {offsets = [0, 0], sizes = [8, 128], strides = [1, 1]} : vector<8x384xf32> to vector<8x128xf32>
    %331 = vector.extract_strided_slice %329 {offsets = [0, 128], sizes = [8, 128], strides = [1, 1]} : vector<8x384xf32> to vector<8x128xf32>
    %332 = vector.extract_strided_slice %329 {offsets = [0, 256], sizes = [8, 128], strides = [1, 1]} : vector<8x384xf32> to vector<8x128xf32>
    %333 = vector.extract_strided_slice %323 {offsets = [0, 384], sizes = [8, 128], strides = [1, 1]} : vector<8x512xf32> to vector<8x128xf32>
    %334 = math.tanh %333 : vector<8x128xf32>
    %335 = arith.mulf %331, %316 : vector<8x128xf32>
    %336 = arith.mulf %330, %334 : vector<8x128xf32>
    %337 = arith.addf %335, %336 : vector<8x128xf32>
    %338 = math.tanh %337 : vector<8x128xf32>
    %339 = arith.mulf %332, %338 : vector<8x128xf32>
    %340 = tpu.concatenate %289, %339 in 1 : vector<8x128xf32>, vector<8x128xf32> -> vector<8x256xf32>
    %341 = arith.truncf %340 : vector<8x256xf32> to vector<8x256xbf16>
    %cst_91 = arith.constant dense<0.000000e+00> : vector<8x512xf32>
    %342 = tpu.matmul %341, %291, %cst_91 {dimension_numbers = #tpu.dot_dimension_numbers<[1], [0], [0], [1], [0, 0, 1, 1], [], []>} : vector<8x256xbf16>, vector<256x512xbf16>, vector<8x512xf32> -> vector<8x512xf32>
    %343 = vector.broadcast %293 : vector<1x512xf32> to vector<8x512xf32>
    %344 = arith.addf %342, %343 : vector<8x512xf32>
    %345 = vector.extract_strided_slice %344 {offsets = [0, 0], sizes = [8, 384], strides = [1, 1]} : vector<8x512xf32> to vector<8x384xf32>
    %346 = arith.negf %345 : vector<8x384xf32>
    %347 = math.exp %346 : vector<8x384xf32>
    %cst_92 = arith.constant 1.000000e+00 : f32
    %348 = vector.broadcast %cst_92 : f32 to vector<8x384xf32>
    %349 = arith.addf %348, %347 : vector<8x384xf32>
    %350 = arith.divf %348, %349 : vector<8x384xf32>
    %351 = vector.extract_strided_slice %350 {offsets = [0, 0], sizes = [8, 128], strides = [1, 1]} : vector<8x384xf32> to vector<8x128xf32>
    %352 = vector.extract_strided_slice %350 {offsets = [0, 128], sizes = [8, 128], strides = [1, 1]} : vector<8x384xf32> to vector<8x128xf32>
    %353 = vector.extract_strided_slice %350 {offsets = [0, 256], sizes = [8, 128], strides = [1, 1]} : vector<8x384xf32> to vector<8x128xf32>
    %354 = vector.extract_strided_slice %344 {offsets = [0, 384], sizes = [8, 128], strides = [1, 1]} : vector<8x512xf32> to vector<8x128xf32>
    %355 = math.tanh %354 : vector<8x128xf32>
    %356 = arith.mulf %352, %337 : vector<8x128xf32>
    %357 = arith.mulf %351, %355 : vector<8x128xf32>
    %358 = arith.addf %356, %357 : vector<8x128xf32>
    %359 = math.tanh %358 : vector<8x128xf32>
    %360 = arith.mulf %353, %359 : vector<8x128xf32>
    %c5 = arith.constant 5 : index
    %c0_93 = arith.constant 0 : index
    %c0_94 = arith.constant 0 : index
    %361 = vector.load %arg1[%c5, %c0_93, %c0_94] : memref<6x256x512xbf16, #tpu.memory_space<vmem>>, vector<1x256x512xbf16>
    %362 = vector.shape_cast %361 : vector<1x256x512xbf16> to vector<256x512xbf16>
    %c5_95 = arith.constant 5 : index
    %c0_96 = arith.constant 0 : index
    %c0_97 = arith.constant 0 : index
    %363 = vector.load %arg2[%c5_95, %c0_96, %c0_97] : memref<6x1x512xf32, #tpu.memory_space<vmem>>, vector<1x1x512xf32>
    %364 = vector.shape_cast %363 : vector<1x1x512xf32> to vector<1x512xf32>
    %c5_98 = arith.constant 5 : index
    %c0_99 = arith.constant 0 : index
    %c0_100 = arith.constant 0 : index
    %365 = vector.load %arg3[%c5_98, %c0_99, %c0_100] : memref<6x8x128xf32, #tpu.memory_space<vmem>>, vector<1x8x128xf32>
    %366 = vector.shape_cast %365 : vector<1x8x128xf32> to vector<8x128xf32>
    %c5_101 = arith.constant 5 : index
    %c0_102 = arith.constant 0 : index
    %c0_103 = arith.constant 0 : index
    %367 = vector.load %arg4[%c5_101, %c0_102, %c0_103] : memref<6x8x128xf32, #tpu.memory_space<vmem>>, vector<1x8x128xf32>
    %368 = vector.shape_cast %367 : vector<1x8x128xf32> to vector<8x128xf32>
    %369 = tpu.concatenate %318, %366 in 1 : vector<8x128xf32>, vector<8x128xf32> -> vector<8x256xf32>
    %370 = arith.truncf %369 : vector<8x256xf32> to vector<8x256xbf16>
    %cst_104 = arith.constant dense<0.000000e+00> : vector<8x512xf32>
    %371 = tpu.matmul %370, %362, %cst_104 {dimension_numbers = #tpu.dot_dimension_numbers<[1], [0], [0], [1], [0, 0, 1, 1], [], []>} : vector<8x256xbf16>, vector<256x512xbf16>, vector<8x512xf32> -> vector<8x512xf32>
    %372 = vector.broadcast %364 : vector<1x512xf32> to vector<8x512xf32>
    %373 = arith.addf %371, %372 : vector<8x512xf32>
    %374 = vector.extract_strided_slice %373 {offsets = [0, 0], sizes = [8, 384], strides = [1, 1]} : vector<8x512xf32> to vector<8x384xf32>
    %375 = arith.negf %374 : vector<8x384xf32>
    %376 = math.exp %375 : vector<8x384xf32>
    %cst_105 = arith.constant 1.000000e+00 : f32
    %377 = vector.broadcast %cst_105 : f32 to vector<8x384xf32>
    %378 = arith.addf %377, %376 : vector<8x384xf32>
    %379 = arith.divf %377, %378 : vector<8x384xf32>
    %380 = vector.extract_strided_slice %379 {offsets = [0, 0], sizes = [8, 128], strides = [1, 1]} : vector<8x384xf32> to vector<8x128xf32>
    %381 = vector.extract_strided_slice %379 {offsets = [0, 128], sizes = [8, 128], strides = [1, 1]} : vector<8x384xf32> to vector<8x128xf32>
    %382 = vector.extract_strided_slice %379 {offsets = [0, 256], sizes = [8, 128], strides = [1, 1]} : vector<8x384xf32> to vector<8x128xf32>
    %383 = vector.extract_strided_slice %373 {offsets = [0, 384], sizes = [8, 128], strides = [1, 1]} : vector<8x512xf32> to vector<8x128xf32>
    %384 = math.tanh %383 : vector<8x128xf32>
    %385 = arith.mulf %381, %368 : vector<8x128xf32>
    %386 = arith.mulf %380, %384 : vector<8x128xf32>
    %387 = arith.addf %385, %386 : vector<8x128xf32>
    %388 = math.tanh %387 : vector<8x128xf32>
    %389 = arith.mulf %382, %388 : vector<8x128xf32>
    %390 = tpu.concatenate %339, %389 in 1 : vector<8x128xf32>, vector<8x128xf32> -> vector<8x256xf32>
    %391 = arith.truncf %390 : vector<8x256xf32> to vector<8x256xbf16>
    %cst_106 = arith.constant dense<0.000000e+00> : vector<8x512xf32>
    %392 = tpu.matmul %391, %362, %cst_106 {dimension_numbers = #tpu.dot_dimension_numbers<[1], [0], [0], [1], [0, 0, 1, 1], [], []>} : vector<8x256xbf16>, vector<256x512xbf16>, vector<8x512xf32> -> vector<8x512xf32>
    %393 = vector.broadcast %364 : vector<1x512xf32> to vector<8x512xf32>
    %394 = arith.addf %392, %393 : vector<8x512xf32>
    %395 = vector.extract_strided_slice %394 {offsets = [0, 0], sizes = [8, 384], strides = [1, 1]} : vector<8x512xf32> to vector<8x384xf32>
    %396 = arith.negf %395 : vector<8x384xf32>
    %397 = math.exp %396 : vector<8x384xf32>
    %cst_107 = arith.constant 1.000000e+00 : f32
    %398 = vector.broadcast %cst_107 : f32 to vector<8x384xf32>
    %399 = arith.addf %398, %397 : vector<8x384xf32>
    %400 = arith.divf %398, %399 : vector<8x384xf32>
    %401 = vector.extract_strided_slice %400 {offsets = [0, 0], sizes = [8, 128], strides = [1, 1]} : vector<8x384xf32> to vector<8x128xf32>
    %402 = vector.extract_strided_slice %400 {offsets = [0, 128], sizes = [8, 128], strides = [1, 1]} : vector<8x384xf32> to vector<8x128xf32>
    %403 = vector.extract_strided_slice %400 {offsets = [0, 256], sizes = [8, 128], strides = [1, 1]} : vector<8x384xf32> to vector<8x128xf32>
    %404 = vector.extract_strided_slice %394 {offsets = [0, 384], sizes = [8, 128], strides = [1, 1]} : vector<8x512xf32> to vector<8x128xf32>
    %405 = math.tanh %404 : vector<8x128xf32>
    %406 = arith.mulf %402, %387 : vector<8x128xf32>
    %407 = arith.mulf %401, %405 : vector<8x128xf32>
    %408 = arith.addf %406, %407 : vector<8x128xf32>
    %409 = math.tanh %408 : vector<8x128xf32>
    %410 = arith.mulf %403, %409 : vector<8x128xf32>
    %411 = tpu.concatenate %360, %410 in 1 : vector<8x128xf32>, vector<8x128xf32> -> vector<8x256xf32>
    %412 = arith.truncf %411 : vector<8x256xf32> to vector<8x256xbf16>
    %cst_108 = arith.constant dense<0.000000e+00> : vector<8x512xf32>
    %413 = tpu.matmul %412, %362, %cst_108 {dimension_numbers = #tpu.dot_dimension_numbers<[1], [0], [0], [1], [0, 0, 1, 1], [], []>} : vector<8x256xbf16>, vector<256x512xbf16>, vector<8x512xf32> -> vector<8x512xf32>
    %414 = vector.broadcast %364 : vector<1x512xf32> to vector<8x512xf32>
    %415 = arith.addf %413, %414 : vector<8x512xf32>
    %416 = vector.extract_strided_slice %415 {offsets = [0, 0], sizes = [8, 384], strides = [1, 1]} : vector<8x512xf32> to vector<8x384xf32>
    %417 = arith.negf %416 : vector<8x384xf32>
    %418 = math.exp %417 : vector<8x384xf32>
    %cst_109 = arith.constant 1.000000e+00 : f32
    %419 = vector.broadcast %cst_109 : f32 to vector<8x384xf32>
    %420 = arith.addf %419, %418 : vector<8x384xf32>
    %421 = arith.divf %419, %420 : vector<8x384xf32>
    %422 = vector.extract_strided_slice %421 {offsets = [0, 0], sizes = [8, 128], strides = [1, 1]} : vector<8x384xf32> to vector<8x128xf32>
    %423 = vector.extract_strided_slice %421 {offsets = [0, 128], sizes = [8, 128], strides = [1, 1]} : vector<8x384xf32> to vector<8x128xf32>
    %424 = vector.extract_strided_slice %421 {offsets = [0, 256], sizes = [8, 128], strides = [1, 1]} : vector<8x384xf32> to vector<8x128xf32>
    %425 = vector.extract_strided_slice %415 {offsets = [0, 384], sizes = [8, 128], strides = [1, 1]} : vector<8x512xf32> to vector<8x128xf32>
    %426 = math.tanh %425 : vector<8x128xf32>
    %427 = arith.mulf %423, %408 : vector<8x128xf32>
    %428 = arith.mulf %422, %426 : vector<8x128xf32>
    %429 = arith.addf %427, %428 : vector<8x128xf32>
    %430 = math.tanh %429 : vector<8x128xf32>
    %431 = arith.mulf %424, %430 : vector<8x128xf32>
    %432 = arith.truncf %431 : vector<8x128xf32> to vector<8x128xbf16>
    %c0_110 = arith.constant 0 : index
    %c0_111 = arith.constant 0 : index
    %433 = vector.load %arg5[%c0_110, %c0_111] : memref<128x128xbf16, #tpu.memory_space<vmem>>, vector<128x128xbf16>
    %cst_112 = arith.constant dense<0.000000e+00> : vector<8x128xf32>
    %434 = tpu.matmul %432, %433, %cst_112 {dimension_numbers = #tpu.dot_dimension_numbers<[1], [0], [0], [1], [0, 0, 1, 1], [], []>} : vector<8x128xbf16>, vector<128x128xbf16>, vector<8x128xf32> -> vector<8x128xf32>
    %c0_113 = arith.constant 0 : index
    %435 = memref.load %arg6[%c0_113] : memref<1xf32, #tpu.memory_space<smem>>
    %436 = vector.broadcast %435 : f32 to vector<8x128xf32>
    %437 = arith.addf %434, %436 : vector<8x128xf32>
    %c0_114 = arith.constant 0 : index
    %c0_115 = arith.constant 0 : index
    %438 = vector.load %arg7[%c0_114, %c0_115] : memref<8x128xf32, #tpu.memory_space<vmem>>, vector<8x128xf32>
    tpu.vector_store %arg7[%c0_114, %c0_115], %437 {strides = array<i32>} : memref<8x128xf32, #tpu.memory_space<vmem>>, vector<8x128xf32>,
    return
  }
}

</mosaic_0001>

<llo_original>
// kernel: net_forward.1
$region0: #{net_forward.1}
  #allocation0 [shape = 'u32[]', space=smem, size = 0x4, offset = 0x4, fixed_abs, tag = 'smem constant byte address 0x4 - core index']
  #allocation1 [shape = 'u32[144,128]{1,0:T(1,128)}', space=vmem, size = 0x12000, scoped, tag = 'internal scratch']
  #allocation2 [shape = 'f32[1]{0:T(128)S(6)}', space=smem, size = 0x200, scoped, tag = 'scoped memory for net_forward.1']
  %s0 = inlined_call_operand.vmem [shape: f32[3,8,128], index: 0, kind: input, shape index: {}]
  %s1 = inlined_call_operand.hbm [shape: bf16[6,256,512], index: 1, kind: input, shape index: {}]
  %s2 = inlined_call_operand.hbm [shape: f32[6,1,512], index: 2, kind: input, shape index: {}]
  %s3 = inlined_call_operand.vmem [shape: f32[6,8,128], index: 3, kind: input, shape index: {}]
  %s4 = inlined_call_operand.vmem [shape: f32[6,8,128], index: 4, kind: input, shape index: {}]
  %s5 = inlined_call_operand.hbm [shape: bf16[128,128], index: 5, kind: input, shape index: {}]
  %s6 = inlined_call_operand.<no memory space> [shape: f32[1], index: 6, kind: input, shape index: {}]
  %s7 = inlined_call_operand.vmem [shape: f32[8,128], index: 7, kind: output, shape index: {}]
  %s8 = sld [smem:[#allocation0]]
  $region50: #{net_forward.1} parent=0
    _
  %s10 = ssub.s32 1, %s8
  %s11 = scalar_select 0, %s10, %s8
  %12 = sst [smem:[#allocation2]] %s6
  $region1: #{net_forward.1} parent=0
    #allocation3 [shape = 'u8[1572864]{0}', space=vmem, size = 0x180000, scoped, tag = 'input window, operand 1, single buffered']
    #allocation4 [shape = 's32[1]{0}', space=sflag, size = 0x4, scoped, tag = 'scoped memory for net_forward.1']
    #allocation5 [shape = 'u8[12288]{0}', space=vmem, size = 0x3000, scoped, tag = 'input window, operand 2, single buffered']
    #allocation6 [shape = 's32[1]{0}', space=sflag, size = 0x4, scoped, tag = 'scoped memory for net_forward.1']
    #allocation7 [shape = 'u8[32768]{0}', space=vmem, size = 0x8000, scoped, tag = 'input window, operand 5, single buffered']
    %13 = vsyncpa [#allocation4], 0
    %14 = vsyncpa [#allocation6], 0
    // Predicated region
    $region2: #{net_forward.1} parent=1 // pred_check
      _
    $region3: #{net_forward.1} parent=1 // pred_check_branch
      %16 = sbr.rel (0) target = $region5
    $region4: #{net_forward.1} parent=1 // pred_region
      _
    $region5: #{net_forward.1} parent=1 // pred_fallthru
      _
    // Predicated region
    $region6: #{net_forward.1} parent=1 // pred_check
      _
    $region7: #{net_forward.1} parent=1 // pred_check_branch
      %18 = sbr.rel (0) target = $region9
    $region8: #{net_forward.1} parent=1 // pred_region
      %s20 = ssub.s32 49152, 49152
      %21 = vsyncadd [#allocation4], %s20
      %s22 = sshll.u32 [#allocation3], 4
      %s23 = int_to_ptr.vmem [resolvable:$true] %s22
      %28 = dma.hbm_to_vmem [thread:$0]  %s1, 49152, %s23, [#allocation4], 256, 256, 16
    $region9: #{net_forward.1} parent=1 // pred_fallthru
      _
    // Predicated region
    $region10: #{net_forward.1} parent=1 // pred_check
      _
    $region11: #{net_forward.1} parent=1 // pred_check_branch
      %30 = sbr.rel (0) target = $region13
    $region12: #{net_forward.1} parent=1 // pred_region
      %s32 = ssub.s32 384, 384
      %33 = vsyncadd [#allocation6], %s32
      %s34 = sshll.u32 [#allocation5], 4
      %s35 = int_to_ptr.vmem [resolvable:$true] %s34
      %40 = dma.hbm_to_vmem [thread:$0]  %s2, 384, %s35, [#allocation6], 64, 64, 4
    $region13: #{net_forward.1} parent=1 // pred_fallthru
      _
    // Predicated region
    $region14: #{net_forward.1} parent=1 // pred_check
      _
    $region15: #{net_forward.1} parent=1 // pred_check_branch
      %42 = sbr.rel (0) target = $region17
    $region16: #{net_forward.1} parent=1 // pred_region
      _
    $region17: #{net_forward.1} parent=1 // pred_fallthru
      _
    // Predicated region
    $region18: #{net_forward.1} parent=1 // pred_check
      _
    $region19: #{net_forward.1} parent=1 // pred_check_branch
      %44 = sbr.rel (0) target = $region21
    $region20: #{net_forward.1} parent=1 // pred_region
      _
    $region21: #{net_forward.1} parent=1 // pred_fallthru
      _
    // Predicated region
    $region22: #{net_forward.1} parent=1 // pred_check
      _
    $region23: #{net_forward.1} parent=1 // pred_check_branch
      %46 = sbr.rel (0) target = $region25
    $region24: #{net_forward.1} parent=1 // pred_region
      %s48 = ssub.s32 1024, 1024
      %49 = vsyncadd [#allocation6], %s48
      %s50 = sshll.u32 [#allocation7], 4
      %s51 = int_to_ptr.vmem [resolvable:$true] %s50
      %56 = dma.hbm_to_vmem [thread:$0]  %s5, 1024, %s51, [#allocation6], 64, 64, 4
    $region25: #{net_forward.1} parent=1 // pred_fallthru
      _
    // Predicated region
    $region26: #{net_forward.1} parent=1 // pred_check
      _
    $region27: #{net_forward.1} parent=1 // pred_check_branch
      %58 = sbr.rel (0) target = $region29
    $region28: #{net_forward.1} parent=1 // pred_region
      _
    $region29: #{net_forward.1} parent=1 // pred_fallthru
      _
    // Predicated region
    $region30: #{net_forward.1} parent=1 // pred_check
      _
    $region31: #{net_forward.1} parent=1 // pred_check_branch
      %60 = sbr.rel (0) target = $region33
    $region32: #{net_forward.1} parent=1 // pred_region
      %61 = dma.done [#allocation4], 49152
    $region33: #{net_forward.1} parent=1 // pred_fallthru
      _
    // Predicated region
    $region34: #{net_forward.1} parent=1 // pred_check
      _
    $region35: #{net_forward.1} parent=1 // pred_check_branch
      %63 = sbr.rel (0) target = $region37
    $region36: #{net_forward.1} parent=1 // pred_region
      %64 = dma.done [#allocation6], 384
    $region37: #{net_forward.1} parent=1 // pred_fallthru
      _
    // Predicated region
    $region38: #{net_forward.1} parent=1 // pred_check
      _
    $region39: #{net_forward.1} parent=1 // pred_check_branch
      %66 = sbr.rel (0) target = $region41
    $region40: #{net_forward.1} parent=1 // pred_region
      %67 = dma.done [#allocation6], 1024
    $region41: #{net_forward.1} parent=1 // pred_fallthru
      _
    %v69 = vld [vmem:[%s0] sm:$0xff]
    %s70 = scalar_lea.vmem %s0, 8
    %v71 = vld [vmem:[%s70] sm:$0xff]
    %s72 = scalar_lea.vmem %s0, 16
    %v73 = vld [vmem:[%s72] sm:$0xff]
    %v74 = vld [vmem:[#allocation3] sm:$0xff]
    %v75 = vld [vmem:[#allocation3 + $0x8] sm:$0xff]
    %v76 = vld [vmem:[#allocation3 + $0x10] sm:$0xff]
    %v77 = vld [vmem:[#allocation3 + $0x18] sm:$0xff]
    %v78 = vld [vmem:[#allocation3 + $0x20] sm:$0xff]
    %v79 = vld [vmem:[#allocation3 + $0x28] sm:$0xff]
    %v80 = vld [vmem:[#allocation3 + $0x30] sm:$0xff]
    %v81 = vld [vmem:[#allocation3 + $0x38] sm:$0xff]
    %v82 = vld [vmem:[#allocation3 + $0x40] sm:$0xff]
    %v83 = vld [vmem:[#allocation3 + $0x48] sm:$0xff]
    %v84 = vld [vmem:[#allocation3 + $0x50] sm:$0xff]
    %v85 = vld [vmem:[#allocation3 + $0x58] sm:$0xff]
    %v86 = vld [vmem:[#allocation3 + $0x60] sm:$0xff]
    %v87 = vld [vmem:[#allocation3 + $0x68] sm:$0xff]
    %v88 = vld [vmem:[#allocation3 + $0x70] sm:$0xff]
    %v89 = vld [vmem:[#allocation3 + $0x78] sm:$0xff]
    %v90 = vld [vmem:[#allocation3 + $0x80] sm:$0xff]
    %v91 = vld [vmem:[#allocation3 + $0x88] sm:$0xff]
    %v92 = vld [vmem:[#allocation3 + $0x90] sm:$0xff]
    %v93 = vld [vmem:[#allocation3 + $0x98] sm:$0xff]
    %v94 = vld [vmem:[#allocation3 + $0xa0] sm:$0xff]
    %v95 = vld [vmem:[#allocation3 + $0xa8] sm:$0xff]
    %v96 = vld [vmem:[#allocation3 + $0xb0] sm:$0xff]
    %v97 = vld [vmem:[#allocation3 + $0xb8] sm:$0xff]
    %v98 = vld [vmem:[#allocation3 + $0xc0] sm:$0xff]
    %v99 = vld [vmem:[#allocation3 + $0xc8] sm:$0xff]
    %v100 = vld [vmem:[#allocation3 + $0xd0] sm:$0xff]
    %v101 = vld [vmem:[#allocation3 + $0xd8] sm:$0xff]
    %v102 = vld [vmem:[#allocation3 + $0xe0] sm:$0xff]
    %v103 = vld [vmem:[#allocation3 + $0xe8] sm:$0xff]
    %v104 = vld [vmem:[#allocation3 + $0xf0] sm:$0xff]
    %v105 = vld [vmem:[#allocation3 + $0xf8] sm:$0xff]
    %v106 = vld [vmem:[#allocation3 + $0x100] sm:$0xff]
    %v107 = vld [vmem:[#allocation3 + $0x108] sm:$0xff]
    %v108 = vld [vmem:[#allocation3 + $0x110] sm:$0xff]
    %v109 = vld [vmem:[#allocation3 + $0x118] sm:$0xff]
    %v110 = vld [vmem:[#allocation3 + $0x120] sm:$0xff]
    %v111 = vld [vmem:[#allocation3 + $0x128] sm:$0xff]
    %v112 = vld [vmem:[#allocation3 + $0x130] sm:$0xff]
    %v113 = vld [vmem:[#allocation3 + $0x138] sm:$0xff]
    %v114 = vld [vmem:[#allocation3 + $0x140] sm:$0xff]
    %v115 = vld [vmem:[#allocation3 + $0x148] sm:$0xff]
    %v116 = vld [vmem:[#allocation3 + $0x150] sm:$0xff]
    %v117 = vld [vmem:[#allocation3 + $0x158] sm:$0xff]
    %v118 = vld [vmem:[#allocation3 + $0x160] sm:$0xff]
    %v119 = vld [vmem:[#allocation3 + $0x168] sm:$0xff]
    %v120 = vld [vmem:[#allocation3 + $0x170] sm:$0xff]
    %v121 = vld [vmem:[#allocation3 + $0x178] sm:$0xff]
    %v122 = vld [vmem:[#allocation3 + $0x180] sm:$0xff]
    %v123 = vld [vmem:[#allocation3 + $0x188] sm:$0xff]
    %v124 = vld [vmem:[#allocation3 + $0x190] sm:$0xff]
    %v125 = vld [vmem:[#allocation3 + $0x198] sm:$0xff]
    %v126 = vld [vmem:[#allocation3 + $0x1a0] sm:$0xff]
    %v127 = vld [vmem:[#allocation3 + $0x1a8] sm:$0xff]
    %v128 = vld [vmem:[#allocation3 + $0x1b0] sm:$0xff]
    %v129 = vld [vmem:[#allocation3 + $0x1b8] sm:$0xff]
    %v130 = vld [vmem:[#allocation3 + $0x1c0] sm:$0xff]
    %v131 = vld [vmem:[#allocation3 + $0x1c8] sm:$0xff]
    %v132 = vld [vmem:[#allocation3 + $0x1d0] sm:$0xff]
    %v133 = vld [vmem:[#allocation3 + $0x1d8] sm:$0xff]
    %v134 = vld [vmem:[#allocation3 + $0x1e0] sm:$0xff]
    %v135 = vld [vmem:[#allocation3 + $0x1e8] sm:$0xff]
    %v136 = vld [vmem:[#allocation3 + $0x1f0] sm:$0xff]
    %v137 = vld [vmem:[#allocation3 + $0x1f8] sm:$0xff]
    %v138 = vld [vmem:[#allocation5] sm:$0xf]
    %v139 = vld [vmem:[%s3] sm:$0xff]
    %v140 = vld [vmem:[%s4] sm:$0xff]
    %v141 = vpack.c.bf16 %v69, %v69
    %v142 = vpack.c.bf16 %v139, %v139
    %v144 = vlaneseq
    %v145 = vshrl.u32 %v144, 7
    %v146 = vsub.s32 0, %v145
    %v147 = vrot.slane %v138, %v146
    %v148 = vlaneseq
    %v149 = vshrl.u32 %v148, 7
    %v150 = vsub.s32 1, %v149
    %v151 = vrot.slane %v138, %v150
    %v152 = vlaneseq
    %v153 = vshrl.u32 %v152, 7
    %v154 = vsub.s32 2, %v153
    %v155 = vrot.slane %v138, %v154
    %v156 = vlaneseq
    %v157 = vshrl.u32 %v156, 7
    %v158 = vsub.s32 3, %v157
    %v159 = vrot.slane %v138, %v158
    %v228 = vunpack.c.l.b16 %v74
    %v229 = vunpack.c.h.b16 %v74
    %v230 = vunpack.c.l.b16 %v75
    %v231 = vunpack.c.h.b16 %v75
    %v232 = vunpack.c.l.b16 %v76
    %v233 = vunpack.c.h.b16 %v76
    %v234 = vunpack.c.l.b16 %v77
    %v235 = vunpack.c.h.b16 %v77
    %v236 = vunpack.c.l.b16 %v78
    %v237 = vunpack.c.h.b16 %v78
    %v238 = vunpack.c.l.b16 %v79
    %v239 = vunpack.c.h.b16 %v79
    %v240 = vunpack.c.l.b16 %v80
    %v241 = vunpack.c.h.b16 %v80
    %v242 = vunpack.c.l.b16 %v81
    %v243 = vunpack.c.h.b16 %v81
    %v244 = vunpack.c.l.b16 %v82
    %v245 = vunpack.c.h.b16 %v82
    %v246 = vunpack.c.l.b16 %v83
    %v247 = vunpack.c.h.b16 %v83
    %v248 = vunpack.c.l.b16 %v84
    %v249 = vunpack.c.h.b16 %v84
    %v250 = vunpack.c.l.b16 %v85
    %v251 = vunpack.c.h.b16 %v85
    %v252 = vunpack.c.l.b16 %v86
    %v253 = vunpack.c.h.b16 %v86
    %v254 = vunpack.c.l.b16 %v87
    %v255 = vunpack.c.h.b16 %v87
    %v256 = vunpack.c.l.b16 %v88
    %v257 = vunpack.c.h.b16 %v88
    %v258 = vunpack.c.l.b16 %v89
    %v259 = vunpack.c.h.b16 %v89
    %v260 = vunpack.c.l.b16 %v90
    %v261 = vunpack.c.h.b16 %v90
    %v262 = vunpack.c.l.b16 %v91
    %v263 = vunpack.c.h.b16 %v91
    %v264 = vunpack.c.l.b16 %v92
    %v265 = vunpack.c.h.b16 %v92
    %v266 = vunpack.c.l.b16 %v93
    %v267 = vunpack.c.h.b16 %v93
    %v268 = vunpack.c.l.b16 %v94
    %v269 = vunpack.c.h.b16 %v94
    %v270 = vunpack.c.l.b16 %v95
    %v271 = vunpack.c.h.b16 %v95
    %v272 = vunpack.c.l.b16 %v96
    %v273 = vunpack.c.h.b16 %v96
    %v274 = vunpack.c.l.b16 %v97
    %v275 = vunpack.c.h.b16 %v97
    %v276 = vunpack.c.l.b16 %v98
    %v277 = vunpack.c.h.b16 %v98
    %v278 = vunpack.c.l.b16 %v99
    %v279 = vunpack.c.h.b16 %v99
    %v280 = vunpack.c.l.b16 %v100
    %v281 = vunpack.c.h.b16 %v100
    %v282 = vunpack.c.l.b16 %v101
    %v283 = vunpack.c.h.b16 %v101
    %v284 = vunpack.c.l.b16 %v102
    %v285 = vunpack.c.h.b16 %v102
    %v286 = vunpack.c.l.b16 %v103
    %v287 = vunpack.c.h.b16 %v103
    %v288 = vunpack.c.l.b16 %v104
    %v289 = vunpack.c.h.b16 %v104
    %v290 = vunpack.c.l.b16 %v105
    %v291 = vunpack.c.h.b16 %v105
    %v292 = vunpack.c.l.b16 %v106
    %v293 = vunpack.c.h.b16 %v106
    %v294 = vunpack.c.l.b16 %v107
    %v295 = vunpack.c.h.b16 %v107
    %v296 = vunpack.c.l.b16 %v108
    %v297 = vunpack.c.h.b16 %v108
    %v298 = vunpack.c.l.b16 %v109
    %v299 = vunpack.c.h.b16 %v109
    %v300 = vunpack.c.l.b16 %v110
    %v301 = vunpack.c.h.b16 %v110
    %v302 = vunpack.c.l.b16 %v111
    %v303 = vunpack.c.h.b16 %v111
    %v304 = vunpack.c.l.b16 %v112
    %v305 = vunpack.c.h.b16 %v112
    %v306 = vunpack.c.l.b16 %v113
    %v307 = vunpack.c.h.b16 %v113
    %v308 = vunpack.c.l.b16 %v114
    %v309 = vunpack.c.h.b16 %v114
    %v310 = vunpack.c.l.b16 %v115
    %v311 = vunpack.c.h.b16 %v115
    %v312 = vunpack.c.l.b16 %v116
    %v313 = vunpack.c.h.b16 %v116
    %v314 = vunpack.c.l.b16 %v117
    %v315 = vunpack.c.h.b16 %v117
    %v316 = vunpack.c.l.b16 %v118
    %v317 = vunpack.c.h.b16 %v118
    %v318 = vunpack.c.l.b16 %v119
    %v319 = vunpack.c.h.b16 %v119
    %v320 = vunpack.c.l.b16 %v120
    %v321 = vunpack.c.h.b16 %v120
    %v322 = vunpack.c.l.b16 %v121
    %v323 = vunpack.c.h.b16 %v121
    %v324 = vunpack.c.l.b16 %v122
    %v325 = vunpack.c.h.b16 %v122
    %v326 = vunpack.c.l.b16 %v123
    %v327 = vunpack.c.h.b16 %v123
    %v328 = vunpack.c.l.b16 %v124
    %v329 = vunpack.c.h.b16 %v124
    %v330 = vunpack.c.l.b16 %v125
    %v331 = vunpack.c.h.b16 %v125
    %v332 = vunpack.c.l.b16 %v126
    %v333 = vunpack.c.h.b16 %v126
    %v334 = vunpack.c.l.b16 %v127
    %v335 = vunpack.c.h.b16 %v127
    %v336 = vunpack.c.l.b16 %v128
    %v337 = vunpack.c.h.b16 %v128
    %v338 = vunpack.c.l.b16 %v129
    %v339 = vunpack.c.h.b16 %v129
    %v340 = vunpack.c.l.b16 %v130
    %v341 = vunpack.c.h.b16 %v130
    %v342 = vunpack.c.l.b16 %v131
    %v343 = vunpack.c.h.b16 %v131
    %v344 = vunpack.c.l.b16 %v132
    %v345 = vunpack.c.h.b16 %v132
    %v346 = vunpack.c.l.b16 %v133
    %v347 = vunpack.c.h.b16 %v133
    %v348 = vunpack.c.l.b16 %v134
    %v349 = vunpack.c.h.b16 %v134
    %v350 = vunpack.c.l.b16 %v135
    %v351 = vunpack.c.h.b16 %v135
    %v352 = vunpack.c.l.b16 %v136
    %v353 = vunpack.c.h.b16 %v136
    %v354 = vunpack.c.l.b16 %v137
    %v355 = vunpack.c.h.b16 %v137
    %v356 = vpack.c.b16 %v232, %v228
    %v357 = vpack.c.b16 %v233, %v229
    %v358 = vpack.c.b16 %v234, %v230
    %v359 = vpack.c.b16 %v235, %v231
    %v360 = vpack.c.b16 %v240, %v236
    %v361 = vpack.c.b16 %v241, %v237
    %v362 = vpack.c.b16 %v242, %v238
    %v363 = vpack.c.b16 %v243, %v239
    %v364 = vpack.c.b16 %v248, %v244
    %v365 = vpack.c.b16 %v249, %v245
    %v366 = vpack.c.b16 %v250, %v246
    %v367 = vpack.c.b16 %v251, %v247
    %v368 = vpack.c.b16 %v256, %v252
    %v369 = vpack.c.b16 %v257, %v253
    %v370 = vpack.c.b16 %v258, %v254
    %v371 = vpack.c.b16 %v259, %v255
    %v372 = vpack.c.b16 %v264, %v260
    %v373 = vpack.c.b16 %v265, %v261
    %v374 = vpack.c.b16 %v266, %v262
    %v375 = vpack.c.b16 %v267, %v263
    %v376 = vpack.c.b16 %v272, %v268
    %v377 = vpack.c.b16 %v273, %v269
    %v378 = vpack.c.b16 %v274, %v270
    %v379 = vpack.c.b16 %v275, %v271
    %v380 = vpack.c.b16 %v280, %v276
    %v381 = vpack.c.b16 %v281, %v277
    %v382 = vpack.c.b16 %v282, %v278
    %v383 = vpack.c.b16 %v283, %v279
    %v384 = vpack.c.b16 %v288, %v284
    %v385 = vpack.c.b16 %v289, %v285
    %v386 = vpack.c.b16 %v290, %v286
    %v387 = vpack.c.b16 %v291, %v287
    %v388 = vpack.c.b16 %v296, %v292
    %v389 = vpack.c.b16 %v297, %v293
    %v390 = vpack.c.b16 %v298, %v294
    %v391 = vpack.c.b16 %v299, %v295
    %v392 = vpack.c.b16 %v304, %v300
    %v393 = vpack.c.b16 %v305, %v301
    %v394 = vpack.c.b16 %v306, %v302
    %v395 = vpack.c.b16 %v307, %v303
    %v396 = vpack.c.b16 %v312, %v308
    %v397 = vpack.c.b16 %v313, %v309
    %v398 = vpack.c.b16 %v314, %v310
    %v399 = vpack.c.b16 %v315, %v311
    %v400 = vpack.c.b16 %v320, %v316
    %v401 = vpack.c.b16 %v321, %v317
    %v402 = vpack.c.b16 %v322, %v318
    %v403 = vpack.c.b16 %v323, %v319
    %v404 = vpack.c.b16 %v328, %v324
    %v405 = vpack.c.b16 %v329, %v325
    %v406 = vpack.c.b16 %v330, %v326
    %v407 = vpack.c.b16 %v331, %v327
    %v408 = vpack.c.b16 %v336, %v332
    %v409 = vpack.c.b16 %v337, %v333
    %v410 = vpack.c.b16 %v338, %v334
    %v411 = vpack.c.b16 %v339, %v335
    %v412 = vpack.c.b16 %v344, %v340
    %v413 = vpack.c.b16 %v345, %v341
    %v414 = vpack.c.b16 %v346, %v342
    %v415 = vpack.c.b16 %v347, %v343
    %v416 = vpack.c.b16 %v352, %v348
    %v417 = vpack.c.b16 %v353, %v349
    %v418 = vpack.c.b16 %v354, %v350
    %v419 = vpack.c.b16 %v355, %v351
    %484 = vmatprep.subr.bf16.mxu0 %v357
    %485 = vmatpush1.bf16.msra.mxu0 %v356
    %486 = vmatprep.subr.bf16.mxu0 %v361
    %487 = vmatpush1.bf16.msra.mxu0 %v360
    %488 = vmatprep.subr.bf16.mxu0 %v365
    %489 = vmatpush1.bf16.msra.mxu0 %v364
    %490 = vmatprep.subr.bf16.mxu0 %v369
    %491 = vmatpush1.bf16.msra.mxu0 %v368
    %492 = vmatprep.subr.bf16.mxu0 %v373
    %493 = vmatpush1.bf16.msra.mxu0 %v372
    %494 = vmatprep.subr.bf16.mxu0 %v377
    %495 = vmatpush1.bf16.msra.mxu0 %v376
    %496 = vmatprep.subr.bf16.mxu0 %v381
    %497 = vmatpush1.bf16.msra.mxu0 %v380
    %498 = vmatprep.subr.bf16.mxu0 %v385
    %499 = vmatpush1.bf16.msra.mxu0 %v384
    %500 = vmatprep.subr.bf16.mxu0 %v389
    %501 = vmatpush1.bf16.msra.mxu0 %v388
    %502 = vmatprep.subr.bf16.mxu0 %v393
    %503 = vmatpush1.bf16.msra.mxu0 %v392
    %504 = vmatprep.subr.bf16.mxu0 %v397
    %505 = vmatpush1.bf16.msra.mxu0 %v396
    %506 = vmatprep.subr.bf16.mxu0 %v401
    %507 = vmatpush1.bf16.msra.mxu0 %v400
    %508 = vmatprep.subr.bf16.mxu0 %v405
    %509 = vmatpush1.bf16.msra.mxu0 %v404
    %510 = vmatprep.subr.bf16.mxu0 %v409
    %511 = vmatpush1.bf16.msra.mxu0 %v408
    %512 = vmatprep.subr.bf16.mxu0 %v413
    %513 = vmatpush1.bf16.msra.mxu0 %v412
    %514 = vmatprep.subr.bf16.mxu0 %v417
    %515 = vmatpush1.bf16.msra.mxu0 %v416
    %516 = vmatprep.mubr.bf16.mxu0 %v142
    %517 = vmatmul.mubr.bf16.gmra.mrb[0].mxu0 %v141
    %v518 = vpop.f32.mrb[0].mxu0
    %v519 = vadd.f32 %v147, %v518
    %v520 = vpop.f32.mrb[0].mxu0
    %v521 = vadd.f32 %v151, %v520
    %v522 = vpop.f32.mrb[0].mxu0
    %v523 = vpop.f32.mrb[0].mxu0
    %524 = vdwg.mxu0
    %525 = vmatprep.subr.bf16.mxu0 %v359
    %526 = vmatpush1.bf16.msra.mxu0 %v358
    %527 = vmatprep.subr.bf16.mxu0 %v363
    %528 = vmatpush1.bf16.msra.mxu0 %v362
    %529 = vmatprep.subr.bf16.mxu0 %v367
    %530 = vmatpush1.bf16.msra.mxu0 %v366
    %531 = vmatprep.subr.bf16.mxu0 %v371
    %532 = vmatpush1.bf16.msra.mxu0 %v370
    %533 = vmatprep.subr.bf16.mxu0 %v375
    %534 = vmatpush1.bf16.msra.mxu0 %v374
    %535 = vmatprep.subr.bf16.mxu0 %v379
    %536 = vmatpush1.bf16.msra.mxu0 %v378
    %537 = vmatprep.subr.bf16.mxu0 %v383
    %538 = vmatpush1.bf16.msra.mxu0 %v382
    %539 = vmatprep.subr.bf16.mxu0 %v387
    %540 = vmatpush1.bf16.msra.mxu0 %v386
    %541 = vmatprep.subr.bf16.mxu0 %v391
    %542 = vmatpush1.bf16.msra.mxu0 %v390
    %543 = vmatprep.subr.bf16.mxu0 %v395
    %544 = vmatpush1.bf16.msra.mxu0 %v394
    %545 = vmatprep.subr.bf16.mxu0 %v399
    %546 = vmatpush1.bf16.msra.mxu0 %v398
    %547 = vmatprep.subr.bf16.mxu0 %v403
    %548 = vmatpush1.bf16.msra.mxu0 %v402
    %549 = vmatprep.subr.bf16.mxu0 %v407
    %550 = vmatpush1.bf16.msra.mxu0 %v406
    %551 = vmatprep.subr.bf16.mxu0 %v411
    %552 = vmatpush1.bf16.msra.mxu0 %v410
    %553 = vmatprep.subr.bf16.mxu0 %v415
    %554 = vmatpush1.bf16.msra.mxu0 %v414
    %555 = vmatprep.subr.bf16.mxu0 %v419
    %556 = vmatpush1.bf16.msra.mxu0 %v418
    %557 = vmatprep.mubr.bf16.mxu0 %v142
    %558 = vmatmul.mubr.bf16.gmra.mrb[0].mxu0 %v141
    %v559 = vpop.f32.mrb[0].mxu0
    %v560 = vadd.f32 %v155, %v559
    %v561 = vpop.f32.mrb[0].mxu0
    %v562 = vadd.f32 %v159, %v561
    %v563 = vpop.f32.mrb[0].mxu0
    %v564 = vpop.f32.mrb[0].mxu0
    %565 = vdwg.mxu0
    %v566 = vxor.u32 %v519, 2147483648
    %v567 = vxor.u32 %v521, 2147483648
    %v568 = vxor.u32 %v560, 2147483648
    %v569 = vmul.f32 %v566, 1.442695
    %v570 = vpow.pop %v569
    %v571 = vmul.f32 %v567, 1.442695
    %v572 = vpow.pop %v571
    %v573 = vmul.f32 %v568, 1.442695
    %v574 = vpow.pop %v573
    %v575 = vadd.f32 %v570, 1.0
    %v576 = vadd.f32 %v572, 1.0
    %v577 = vadd.f32 %v574, 1.0
    %v578 = vrcp.pop %v575
    %v579 = vmul.f32 1.0, %v578
    %v580 = vrcp.pop %v576
    %v581 = vmul.f32 1.0, %v580
    %v582 = vrcp.pop %v577
    %v583 = vmul.f32 1.0, %v582
    %v584 = vtanh.pop %v562
    %v585 = vmul.f32 %v581, %v140
    %v586 = vmul.f32 %v579, %v584
    %v587 = vadd.f32 %v585, %v586
    %v588 = vtanh.pop %v587
    %v589 = vmul.f32 %v583, %v588
    %v590 = vpack.c.bf16 %v71, %v71
    %v591 = vpack.c.bf16 %v589, %v589
    %592 = vmatprep.subr.bf16.mxu0 %v357
    %593 = vmatpush1.bf16.msra.mxu0 %v356
    %594 = vmatprep.subr.bf16.mxu0 %v361
    %595 = vmatpush1.bf16.msra.mxu0 %v360
    %596 = vmatprep.subr.bf16.mxu0 %v365
    %597 = vmatpush1.bf16.msra.mxu0 %v364
    %598 = vmatprep.subr.bf16.mxu0 %v369
    %599 = vmatpush1.bf16.msra.mxu0 %v368
    %600 = vmatprep.subr.bf16.mxu0 %v373
    %601 = vmatpush1.bf16.msra.mxu0 %v372
    %602 = vmatprep.subr.bf16.mxu0 %v377
    %603 = vmatpush1.bf16.msra.mxu0 %v376
    %604 = vmatprep.subr.bf16.mxu0 %v381
    %605 = vmatpush1.bf16.msra.mxu0 %v380
    %606 = vmatprep.subr.bf16.mxu0 %v385
    %607 = vmatpush1.bf16.msra.mxu0 %v384
    %608 = vmatprep.subr.bf16.mxu0 %v389
    %609 = vmatpush1.bf16.msra.mxu0 %v388
    %610 = vmatprep.subr.bf16.mxu0 %v393
    %611 = vmatpush1.bf16.msra.mxu0 %v392
    %612 = vmatprep.subr.bf16.mxu0 %v397
    %613 = vmatpush1.bf16.msra.mxu0 %v396
    %614 = vmatprep.subr.bf16.mxu0 %v401
    %615 = vmatpush1.bf16.msra.mxu0 %v400
    %616 = vmatprep.subr.bf16.mxu0 %v405
    %617 = vmatpush1.bf16.msra.mxu0 %v404
    %618 = vmatprep.subr.bf16.mxu0 %v409
    %619 = vmatpush1.bf16.msra.mxu0 %v408
    %620 = vmatprep.subr.bf16.mxu0 %v413
    %621 = vmatpush1.bf16.msra.mxu0 %v412
    %622 = vmatprep.subr.bf16.mxu0 %v417
    %623 = vmatpush1.bf16.msra.mxu0 %v416
    %624 = vmatprep.mubr.bf16.mxu0 %v591
    %625 = vmatmul.mubr.bf16.gmra.mrb[0].mxu0 %v590
    %v626 = vpop.f32.mrb[0].mxu0
    %v627 = vadd.f32 %v147, %v626
    %v628 = vpop.f32.mrb[0].mxu0
    %v629 = vadd.f32 %v151, %v628
    %v630 = vpop.f32.mrb[0].mxu0
    %v631 = vpop.f32.mrb[0].mxu0
    %632 = vdwg.mxu0
    %633 = vmatprep.subr.bf16.mxu0 %v359
    %634 = vmatpush1.bf16.msra.mxu0 %v358
    %635 = vmatprep.subr.bf16.mxu0 %v363
    %636 = vmatpush1.bf16.msra.mxu0 %v362
    %637 = vmatprep.subr.bf16.mxu0 %v367
    %638 = vmatpush1.bf16.msra.mxu0 %v366
    %639 = vmatprep.subr.bf16.mxu0 %v371
    %640 = vmatpush1.bf16.msra.mxu0 %v370
    %641 = vmatprep.subr.bf16.mxu0 %v375
    %642 = vmatpush1.bf16.msra.mxu0 %v374
    %643 = vmatprep.subr.bf16.mxu0 %v379
    %644 = vmatpush1.bf16.msra.mxu0 %v378
    %645 = vmatprep.subr.bf16.mxu0 %v383
    %646 = vmatpush1.bf16.msra.mxu0 %v382
    %647 = vmatprep.subr.bf16.mxu0 %v387
    %648 = vmatpush1.bf16.msra.mxu0 %v386
    %649 = vmatprep.subr.bf16.mxu0 %v391
    %650 = vmatpush1.bf16.msra.mxu0 %v390
    %651 = vmatprep.subr.bf16.mxu0 %v395
    %652 = vmatpush1.bf16.msra.mxu0 %v394
    %653 = vmatprep.subr.bf16.mxu0 %v399
    %654 = vmatpush1.bf16.msra.mxu0 %v398
    %655 = vmatprep.subr.bf16.mxu0 %v403
    %656 = vmatpush1.bf16.msra.mxu0 %v402
    %657 = vmatprep.subr.bf16.mxu0 %v407
    %658 = vmatpush1.bf16.msra.mxu0 %v406
    %659 = vmatprep.subr.bf16.mxu0 %v411
    %660 = vmatpush1.bf16.msra.mxu0 %v410
    %661 = vmatprep.subr.bf16.mxu0 %v415
    %662 = vmatpush1.bf16.msra.mxu0 %v414
    %663 = vmatprep.subr.bf16.mxu0 %v419
    %664 = vmatpush1.bf16.msra.mxu0 %v418
    %665 = vmatprep.mubr.bf16.mxu0 %v591
    %666 = vmatmul.mubr.bf16.gmra.mrb[0].mxu0 %v590
    %v667 = vpop.f32.mrb[0].mxu0
    %v668 = vadd.f32 %v155, %v667
    %v669 = vpop.f32.mrb[0].mxu0
    %v670 = vadd.f32 %v159, %v669
    %v671 = vpop.f32.mrb[0].mxu0
    %v672 = vpop.f32.mrb[0].mxu0
    %673 = vdwg.mxu0
    %v674 = vxor.u32 %v627, 2147483648
    %v675 = vxor.u32 %v629, 2147483648
    %v676 = vxor.u32 %v668, 2147483648
    %v677 = vmul.f32 %v674, 1.442695
    %v678 = vpow.pop %v677
    %v679 = vmul.f32 %v675, 1.442695
    %v680 = vpow.pop %v679
    %v681 = vmul.f32 %v676, 1.442695
    %v682 = vpow.pop %v681
    %v683 = vadd.f32 %v678, 1.0
    %v684 = vadd.f32 %v680, 1.0
    %v685 = vadd.f32 %v682, 1.0
    %v686 = vrcp.pop %v683
    %v687 = vmul.f32 1.0, %v686
    %v688 = vrcp.pop %v684
    %v689 = vmul.f32 1.0, %v688
    %v690 = vrcp.pop %v685
    %v691 = vmul.f32 1.0, %v690
    %v692 = vtanh.pop %v670
    %v693 = vmul.f32 %v689, %v587
    %v694 = vmul.f32 %v687, %v692
    %v695 = vadd.f32 %v693, %v694
    %v696 = vtanh.pop %v695
    %v697 = vmul.f32 %v691, %v696
    %v698 = vpack.c.bf16 %v73, %v73
    %v699 = vpack.c.bf16 %v697, %v697
    %700 = vmatprep.subr.bf16.mxu0 %v357
    %701 = vmatpush1.bf16.msra.mxu0 %v356
    %702 = vmatprep.subr.bf16.mxu0 %v361
    %703 = vmatpush1.bf16.msra.mxu0 %v360
    %704 = vmatprep.subr.bf16.mxu0 %v365
    %705 = vmatpush1.bf16.msra.mxu0 %v364
    %706 = vmatprep.subr.bf16.mxu0 %v369
    %707 = vmatpush1.bf16.msra.mxu0 %v368
    %708 = vmatprep.subr.bf16.mxu0 %v373
    %709 = vmatpush1.bf16.msra.mxu0 %v372
    %710 = vmatprep.subr.bf16.mxu0 %v377
    %711 = vmatpush1.bf16.msra.mxu0 %v376
    %712 = vmatprep.subr.bf16.mxu0 %v381
    %713 = vmatpush1.bf16.msra.mxu0 %v380
    %714 = vmatprep.subr.bf16.mxu0 %v385
    %715 = vmatpush1.bf16.msra.mxu0 %v384
    %716 = vmatprep.subr.bf16.mxu0 %v389
    %717 = vmatpush1.bf16.msra.mxu0 %v388
    %718 = vmatprep.subr.bf16.mxu0 %v393
    %719 = vmatpush1.bf16.msra.mxu0 %v392
    %720 = vmatprep.subr.bf16.mxu0 %v397
    %721 = vmatpush1.bf16.msra.mxu0 %v396
    %722 = vmatprep.subr.bf16.mxu0 %v401
    %723 = vmatpush1.bf16.msra.mxu0 %v400
    %724 = vmatprep.subr.bf16.mxu0 %v405
    %725 = vmatpush1.bf16.msra.mxu0 %v404
    %726 = vmatprep.subr.bf16.mxu0 %v409
    %727 = vmatpush1.bf16.msra.mxu0 %v408
    %728 = vmatprep.subr.bf16.mxu0 %v413
    %729 = vmatpush1.bf16.msra.mxu0 %v412
    %730 = vmatprep.subr.bf16.mxu0 %v417
    %731 = vmatpush1.bf16.msra.mxu0 %v416
    %732 = vmatprep.mubr.bf16.mxu0 %v699
    %733 = vmatmul.mubr.bf16.gmra.mrb[0].mxu0 %v698
    %v734 = vpop.f32.mrb[0].mxu0
    %v735 = vadd.f32 %v147, %v734
    %v736 = vpop.f32.mrb[0].mxu0
    %v737 = vadd.f32 %v151, %v736
    %v738 = vpop.f32.mrb[0].mxu0
    %v739 = vpop.f32.mrb[0].mxu0
    %740 = vdwg.mxu0
    %741 = vmatprep.subr.bf16.mxu0 %v359
    %742 = vmatpush1.bf16.msra.mxu0 %v358
    %743 = vmatprep.subr.bf16.mxu0 %v363
    %744 = vmatpush1.bf16.msra.mxu0 %v362
    %745 = vmatprep.subr.bf16.mxu0 %v367
    %746 = vmatpush1.bf16.msra.mxu0 %v366
    %747 = vmatprep.subr.bf16.mxu0 %v371
    %748 = vmatpush1.bf16.msra.mxu0 %v370
    %749 = vmatprep.subr.bf16.mxu0 %v375
    %750 = vmatpush1.bf16.msra.mxu0 %v374
    %751 = vmatprep.subr.bf16.mxu0 %v379
    %752 = vmatpush1.bf16.msra.mxu0 %v378
    %753 = vmatprep.subr.bf16.mxu0 %v383
    %754 = vmatpush1.bf16.msra.mxu0 %v382
    %755 = vmatprep.subr.bf16.mxu0 %v387
    %756 = vmatpush1.bf16.msra.mxu0 %v386
    %757 = vmatprep.subr.bf16.mxu0 %v391
    %758 = vmatpush1.bf16.msra.mxu0 %v390
    %759 = vmatprep.subr.bf16.mxu0 %v395
    %760 = vmatpush1.bf16.msra.mxu0 %v394
    %761 = vmatprep.subr.bf16.mxu0 %v399
    %762 = vmatpush1.bf16.msra.mxu0 %v398
    %763 = vmatprep.subr.bf16.mxu0 %v403
    %764 = vmatpush1.bf16.msra.mxu0 %v402
    %765 = vmatprep.subr.bf16.mxu0 %v407
    %766 = vmatpush1.bf16.msra.mxu0 %v406
    %767 = vmatprep.subr.bf16.mxu0 %v411
    %768 = vmatpush1.bf16.msra.mxu0 %v410
    %769 = vmatprep.subr.bf16.mxu0 %v415
    %770 = vmatpush1.bf16.msra.mxu0 %v414
    %771 = vmatprep.subr.bf16.mxu0 %v419
    %772 = vmatpush1.bf16.msra.mxu0 %v418
    %773 = vmatprep.mubr.bf16.mxu0 %v699
    %774 = vmatmul.mubr.bf16.gmra.mrb[0].mxu0 %v698
    %v775 = vpop.f32.mrb[0].mxu0
    %v776 = vadd.f32 %v155, %v775
    %v777 = vpop.f32.mrb[0].mxu0
    %v778 = vadd.f32 %v159, %v777
    %v779 = vpop.f32.mrb[0].mxu0
    %v780 = vpop.f32.mrb[0].mxu0
    %781 = vdwg.mxu0
    %v782 = vxor.u32 %v735, 2147483648
    %v783 = vxor.u32 %v737, 2147483648
    %v784 = vxor.u32 %v776, 2147483648
    %v785 = vmul.f32 %v782, 1.442695
    %v786 = vpow.pop %v785
    %v787 = vmul.f32 %v783, 1.442695
    %v788 = vpow.pop %v787
    %v789 = vmul.f32 %v784, 1.442695
    %v790 = vpow.pop %v789
    %v791 = vadd.f32 %v786, 1.0
    %v792 = vadd.f32 %v788, 1.0
    %v793 = vadd.f32 %v790, 1.0
    %v794 = vrcp.pop %v791
    %v795 = vmul.f32 1.0, %v794
    %v796 = vrcp.pop %v792
    %v797 = vmul.f32 1.0, %v796
    %v798 = vrcp.pop %v793
    %v799 = vmul.f32 1.0, %v798
    %v800 = vtanh.pop %v778
    %v801 = vmul.f32 %v797, %v695
    %v802 = vmul.f32 %v795, %v800
    %v803 = vadd.f32 %v801, %v802
    %v804 = vtanh.pop %v803
    %v805 = vmul.f32 %v799, %v804
    %s806 = scalar_lea.vmem [#allocation3], 512
    %v807 = vld [vmem:[%s806] sm:$0xff]
    %v808 = vld [vmem:[%s806 + $0x8] sm:$0xff]
    %v809 = vld [vmem:[%s806 + $0x10] sm:$0xff]
    %v810 = vld [vmem:[%s806 + $0x18] sm:$0xff]
    %v811 = vld [vmem:[%s806 + $0x20] sm:$0xff]
    %v812 = vld [vmem:[%s806 + $0x28] sm:$0xff]
    %v813 = vld [vmem:[%s806 + $0x30] sm:$0xff]
    %v814 = vld [vmem:[%s806 + $0x38] sm:$0xff]
    %v815 = vld [vmem:[%s806 + $0x40] sm:$0xff]
    %v816 = vld [vmem:[%s806 + $0x48] sm:$0xff]
    %v817 = vld [vmem:[%s806 + $0x50] sm:$0xff]
    %v818 = vld [vmem:[%s806 + $0x58] sm:$0xff]
    %v819 = vld [vmem:[%s806 + $0x60] sm:$0xff]
    %v820 = vld [vmem:[%s806 + $0x68] sm:$0xff]
    %v821 = vld [vmem:[%s806 + $0x70] sm:$0xff]
    %v822 = vld [vmem:[%s806 + $0x78] sm:$0xff]
    %v823 = vld [vmem:[%s806 + $0x80] sm:$0xff]
    %v824 = vld [vmem:[%s806 + $0x88] sm:$0xff]
    %v825 = vld [vmem:[%s806 + $0x90] sm:$0xff]
    %v826 = vld [vmem:[%s806 + $0x98] sm:$0xff]
    %v827 = vld [vmem:[%s806 + $0xa0] sm:$0xff]
    %v828 = vld [vmem:[%s806 + $0xa8] sm:$0xff]
    %v829 = vld [vmem:[%s806 + $0xb0] sm:$0xff]
    %v830 = vld [vmem:[%s806 + $0xb8] sm:$0xff]
    %v831 = vld [vmem:[%s806 + $0xc0] sm:$0xff]
    %v832 = vld [vmem:[%s806 + $0xc8] sm:$0xff]
    %v833 = vld [vmem:[%s806 + $0xd0] sm:$0xff]
    %v834 = vld [vmem:[%s806 + $0xd8] sm:$0xff]
    %v835 = vld [vmem:[%s806 + $0xe0] sm:$0xff]
    %v836 = vld [vmem:[%s806 + $0xe8] sm:$0xff]
    %v837 = vld [vmem:[%s806 + $0xf0] sm:$0xff]
    %v838 = vld [vmem:[%s806 + $0xf8] sm:$0xff]
    %v839 = vld [vmem:[%s806 + $0x100] sm:$0xff]
    %v840 = vld [vmem:[%s806 + $0x108] sm:$0xff]
    %v841 = vld [vmem:[%s806 + $0x110] sm:$0xff]
    %v842 = vld [vmem:[%s806 + $0x118] sm:$0xff]
    %v843 = vld [vmem:[%s806 + $0x120] sm:$0xff]
    %v844 = vld [vmem:[%s806 + $0x128] sm:$0xff]
    %v845 = vld [vmem:[%s806 + $0x130] sm:$0xff]
    %v846 = vld [vmem:[%s806 + $0x138] sm:$0xff]
    %v847 = vld [vmem:[%s806 + $0x140] sm:$0xff]
    %v848 = vld [vmem:[%s806 + $0x148] sm:$0xff]
    %v849 = vld [vmem:[%s806 + $0x150] sm:$0xff]
    %v850 = vld [vmem:[%s806 + $0x158] sm:$0xff]
    %v851 = vld [vmem:[%s806 + $0x160] sm:$0xff]
    %v852 = vld [vmem:[%s806 + $0x168] sm:$0xff]
    %v853 = vld [vmem:[%s806 + $0x170] sm:$0xff]
    %v854 = vld [vmem:[%s806 + $0x178] sm:$0xff]
    %v855 = vld [vmem:[%s806 + $0x180] sm:$0xff]
    %v856 = vld [vmem:[%s806 + $0x188] sm:$0xff]
    %v857 = vld [vmem:[%s806 + $0x190] sm:$0xff]
    %v858 = vld [vmem:[%s806 + $0x198] sm:$0xff]
    %v859 = vld [vmem:[%s806 + $0x1a0] sm:$0xff]
    %v860 = vld [vmem:[%s806 + $0x1a8] sm:$0xff]
    %v861 = vld [vmem:[%s806 + $0x1b0] sm:$0xff]
    %v862 = vld [vmem:[%s806 + $0x1b8] sm:$0xff]
    %v863 = vld [vmem:[%s806 + $0x1c0] sm:$0xff]
    %v864 = vld [vmem:[%s806 + $0x1c8] sm:$0xff]
    %v865 = vld [vmem:[%s806 + $0x1d0] sm:$0xff]
    %v866 = vld [vmem:[%s806 + $0x1d8] sm:$0xff]
    %v867 = vld [vmem:[%s806 + $0x1e0] sm:$0xff]
    %v868 = vld [vmem:[%s806 + $0x1e8] sm:$0xff]
    %v869 = vld [vmem:[%s806 + $0x1f0] sm:$0xff]
    %v870 = vld [vmem:[%s806 + $0x1f8] sm:$0xff]
    %s871 = scalar_lea.vmem [#allocation5], 4
    %v872 = vld [vmem:[%s871] sm:$0xf]
    %s873 = scalar_lea.vmem %s3, 8
    %v874 = vld [vmem:[%s873] sm:$0xff]
    %s875 = scalar_lea.vmem %s4, 8
    %v876 = vld [vmem:[%s875] sm:$0xff]
    %v877 = vpack.c.bf16 %v874, %v874
    %v879 = vlaneseq
    %v880 = vshrl.u32 %v879, 7
    %v881 = vsub.s32 0, %v880
    %v882 = vrot.slane %v872, %v881
    %v883 = vlaneseq
    %v884 = vshrl.u32 %v883, 7
    %v885 = vsub.s32 1, %v884
    %v886 = vrot.slane %v872, %v885
    %v887 = vlaneseq
    %v888 = vshrl.u32 %v887, 7
    %v889 = vsub.s32 2, %v888
    %v890 = vrot.slane %v872, %v889
    %v891 = vlaneseq
    %v892 = vshrl.u32 %v891, 7
    %v893 = vsub.s32 3, %v892
    %v894 = vrot.slane %v872, %v893
    %v963 = vunpack.c.l.b16 %v807
    %v964 = vunpack.c.h.b16 %v807
    %v965 = vunpack.c.l.b16 %v808
    %v966 = vunpack.c.h.b16 %v808
    %v967 = vunpack.c.l.b16 %v809
    %v968 = vunpack.c.h.b16 %v809
    %v969 = vunpack.c.l.b16 %v810
    %v970 = vunpack.c.h.b16 %v810
    %v971 = vunpack.c.l.b16 %v811
    %v972 = vunpack.c.h.b16 %v811
    %v973 = vunpack.c.l.b16 %v812
    %v974 = vunpack.c.h.b16 %v812
    %v975 = vunpack.c.l.b16 %v813
    %v976 = vunpack.c.h.b16 %v813
    %v977 = vunpack.c.l.b16 %v814
    %v978 = vunpack.c.h.b16 %v814
    %v979 = vunpack.c.l.b16 %v815
    %v980 = vunpack.c.h.b16 %v815
    %v981 = vunpack.c.l.b16 %v816
    %v982 = vunpack.c.h.b16 %v816
    %v983 = vunpack.c.l.b16 %v817
    %v984 = vunpack.c.h.b16 %v817
    %v985 = vunpack.c.l.b16 %v818
    %v986 = vunpack.c.h.b16 %v818
    %v987 = vunpack.c.l.b16 %v819
    %v988 = vunpack.c.h.b16 %v819
    %v989 = vunpack.c.l.b16 %v820
    %v990 = vunpack.c.h.b16 %v820
    %v991 = vunpack.c.l.b16 %v821
    %v992 = vunpack.c.h.b16 %v821
    %v993 = vunpack.c.l.b16 %v822
    %v994 = vunpack.c.h.b16 %v822
    %v995 = vunpack.c.l.b16 %v823
    %v996 = vunpack.c.h.b16 %v823
    %v997 = vunpack.c.l.b16 %v824
    %v998 = vunpack.c.h.b16 %v824
    %v999 = vunpack.c.l.b16 %v825
    %v1000 = vunpack.c.h.b16 %v825
    %v1001 = vunpack.c.l.b16 %v826
    %v1002 = vunpack.c.h.b16 %v826
    %v1003 = vunpack.c.l.b16 %v827
    %v1004 = vunpack.c.h.b16 %v827
    %v1005 = vunpack.c.l.b16 %v828
    %v1006 = vunpack.c.h.b16 %v828
    %v1007 = vunpack.c.l.b16 %v829
    %v1008 = vunpack.c.h.b16 %v829
    %v1009 = vunpack.c.l.b16 %v830
    %v1010 = vunpack.c.h.b16 %v830
    %v1011 = vunpack.c.l.b16 %v831
    %v1012 = vunpack.c.h.b16 %v831
    %v1013 = vunpack.c.l.b16 %v832
    %v1014 = vunpack.c.h.b16 %v832
    %v1015 = vunpack.c.l.b16 %v833
    %v1016 = vunpack.c.h.b16 %v833
    %v1017 = vunpack.c.l.b16 %v834
    %v1018 = vunpack.c.h.b16 %v834
    %v1019 = vunpack.c.l.b16 %v835
    %v1020 = vunpack.c.h.b16 %v835
    %v1021 = vunpack.c.l.b16 %v836
    %v1022 = vunpack.c.h.b16 %v836
    %v1023 = vunpack.c.l.b16 %v837
    %v1024 = vunpack.c.h.b16 %v837
    %v1025 = vunpack.c.l.b16 %v838
    %v1026 = vunpack.c.h.b16 %v838
    %v1027 = vunpack.c.l.b16 %v839
    %v1028 = vunpack.c.h.b16 %v839
    %v1029 = vunpack.c.l.b16 %v840
    %v1030 = vunpack.c.h.b16 %v840
    %v1031 = vunpack.c.l.b16 %v841
    %v1032 = vunpack.c.h.b16 %v841
    %v1033 = vunpack.c.l.b16 %v842
    %v1034 = vunpack.c.h.b16 %v842
    %v1035 = vunpack.c.l.b16 %v843
    %v1036 = vunpack.c.h.b16 %v843
    %v1037 = vunpack.c.l.b16 %v844
    %v1038 = vunpack.c.h.b16 %v844
    %v1039 = vunpack.c.l.b16 %v845
    %v1040 = vunpack.c.h.b16 %v845
    %v1041 = vunpack.c.l.b16 %v846
    %v1042 = vunpack.c.h.b16 %v846
    %v1043 = vunpack.c.l.b16 %v847
    %v1044 = vunpack.c.h.b16 %v847
    %v1045 = vunpack.c.l.b16 %v848
    %v1046 = vunpack.c.h.b16 %v848
    %v1047 = vunpack.c.l.b16 %v849
    %v1048 = vunpack.c.h.b16 %v849
    %v1049 = vunpack.c.l.b16 %v850
    %v1050 = vunpack.c.h.b16 %v850
    %v1051 = vunpack.c.l.b16 %v851
    %v1052 = vunpack.c.h.b16 %v851
    %v1053 = vunpack.c.l.b16 %v852
    %v1054 = vunpack.c.h.b16 %v852
    %v1055 = vunpack.c.l.b16 %v853
    %v1056 = vunpack.c.h.b16 %v853
    %v1057 = vunpack.c.l.b16 %v854
    %v1058 = vunpack.c.h.b16 %v854
    %v1059 = vunpack.c.l.b16 %v855
    %v1060 = vunpack.c.h.b16 %v855
    %v1061 = vunpack.c.l.b16 %v856
    %v1062 = vunpack.c.h.b16 %v856
    %v1063 = vunpack.c.l.b16 %v857
    %v1064 = vunpack.c.h.b16 %v857
    %v1065 = vunpack.c.l.b16 %v858
    %v1066 = vunpack.c.h.b16 %v858
    %v1067 = vunpack.c.l.b16 %v859
    %v1068 = vunpack.c.h.b16 %v859
    %v1069 = vunpack.c.l.b16 %v860
    %v1070 = vunpack.c.h.b16 %v860
    %v1071 = vunpack.c.l.b16 %v861
    %v1072 = vunpack.c.h.b16 %v861
    %v1073 = vunpack.c.l.b16 %v862
    %v1074 = vunpack.c.h.b16 %v862
    %v1075 = vunpack.c.l.b16 %v863
    %v1076 = vunpack.c.h.b16 %v863
    %v1077 = vunpack.c.l.b16 %v864
    %v1078 = vunpack.c.h.b16 %v864
    %v1079 = vunpack.c.l.b16 %v865
    %v1080 = vunpack.c.h.b16 %v865
    %v1081 = vunpack.c.l.b16 %v866
    %v1082 = vunpack.c.h.b16 %v866
    %v1083 = vunpack.c.l.b16 %v867
    %v1084 = vunpack.c.h.b16 %v867
    %v1085 = vunpack.c.l.b16 %v868
    %v1086 = vunpack.c.h.b16 %v868
    %v1087 = vunpack.c.l.b16 %v869
    %v1088 = vunpack.c.h.b16 %v869
    %v1089 = vunpack.c.l.b16 %v870
    %v1090 = vunpack.c.h.b16 %v870
    %v1091 = vpack.c.b16 %v967, %v963
    %v1092 = vpack.c.b16 %v968, %v964
    %v1093 = vpack.c.b16 %v969, %v965
    %v1094 = vpack.c.b16 %v970, %v966
    %v1095 = vpack.c.b16 %v975, %v971
    %v1096 = vpack.c.b16 %v976, %v972
    %v1097 = vpack.c.b16 %v977, %v973
    %v1098 = vpack.c.b16 %v978, %v974
    %v1099 = vpack.c.b16 %v983, %v979
    %v1100 = vpack.c.b16 %v984, %v980
    %v1101 = vpack.c.b16 %v985, %v981
    %v1102 = vpack.c.b16 %v986, %v982
    %v1103 = vpack.c.b16 %v991, %v987
    %v1104 = vpack.c.b16 %v992, %v988
    %v1105 = vpack.c.b16 %v993, %v989
    %v1106 = vpack.c.b16 %v994, %v990
    %v1107 = vpack.c.b16 %v999, %v995
    %v1108 = vpack.c.b16 %v1000, %v996
    %v1109 = vpack.c.b16 %v1001, %v997
    %v1110 = vpack.c.b16 %v1002, %v998
    %v1111 = vpack.c.b16 %v1007, %v1003
    %v1112 = vpack.c.b16 %v1008, %v1004
    %v1113 = vpack.c.b16 %v1009, %v1005
    %v1114 = vpack.c.b16 %v1010, %v1006
    %v1115 = vpack.c.b16 %v1015, %v1011
    %v1116 = vpack.c.b16 %v1016, %v1012
    %v1117 = vpack.c.b16 %v1017, %v1013
    %v1118 = vpack.c.b16 %v1018, %v1014
    %v1119 = vpack.c.b16 %v1023, %v1019
    %v1120 = vpack.c.b16 %v1024, %v1020
    %v1121 = vpack.c.b16 %v1025, %v1021
    %v1122 = vpack.c.b16 %v1026, %v1022
    %v1123 = vpack.c.b16 %v1031, %v1027
    %v1124 = vpack.c.b16 %v1032, %v1028
    %v1125 = vpack.c.b16 %v1033, %v1029
    %v1126 = vpack.c.b16 %v1034, %v1030
    %v1127 = vpack.c.b16 %v1039, %v1035
    %v1128 = vpack.c.b16 %v1040, %v1036
    %v1129 = vpack.c.b16 %v1041, %v1037
    %v1130 = vpack.c.b16 %v1042, %v1038
    %v1131 = vpack.c.b16 %v1047, %v1043
    %v1132 = vpack.c.b16 %v1048, %v1044
    %v1133 = vpack.c.b16 %v1049, %v1045
    %v1134 = vpack.c.b16 %v1050, %v1046
    %v1135 = vpack.c.b16 %v1055, %v1051
    %v1136 = vpack.c.b16 %v1056, %v1052
    %v1137 = vpack.c.b16 %v1057, %v1053
    %v1138 = vpack.c.b16 %v1058, %v1054
    %v1139 = vpack.c.b16 %v1063, %v1059
    %v1140 = vpack.c.b16 %v1064, %v1060
    %v1141 = vpack.c.b16 %v1065, %v1061
    %v1142 = vpack.c.b16 %v1066, %v1062
    %v1143 = vpack.c.b16 %v1071, %v1067
    %v1144 = vpack.c.b16 %v1072, %v1068
    %v1145 = vpack.c.b16 %v1073, %v1069
    %v1146 = vpack.c.b16 %v1074, %v1070
    %v1147 = vpack.c.b16 %v1079, %v1075
    %v1148 = vpack.c.b16 %v1080, %v1076
    %v1149 = vpack.c.b16 %v1081, %v1077
    %v1150 = vpack.c.b16 %v1082, %v1078
    %v1151 = vpack.c.b16 %v1087, %v1083
    %v1152 = vpack.c.b16 %v1088, %v1084
    %v1153 = vpack.c.b16 %v1089, %v1085
    %v1154 = vpack.c.b16 %v1090, %v1086
    %1219 = vmatprep.subr.bf16.mxu0 %v1092
    %1220 = vmatpush1.bf16.msra.mxu0 %v1091
    %1221 = vmatprep.subr.bf16.mxu0 %v1096
    %1222 = vmatpush1.bf16.msra.mxu0 %v1095
    %1223 = vmatprep.subr.bf16.mxu0 %v1100
    %1224 = vmatpush1.bf16.msra.mxu0 %v1099
    %1225 = vmatprep.subr.bf16.mxu0 %v1104
    %1226 = vmatpush1.bf16.msra.mxu0 %v1103
    %1227 = vmatprep.subr.bf16.mxu0 %v1108
    %1228 = vmatpush1.bf16.msra.mxu0 %v1107
    %1229 = vmatprep.subr.bf16.mxu0 %v1112
    %1230 = vmatpush1.bf16.msra.mxu0 %v1111
    %1231 = vmatprep.subr.bf16.mxu0 %v1116
    %1232 = vmatpush1.bf16.msra.mxu0 %v1115
    %1233 = vmatprep.subr.bf16.mxu0 %v1120
    %1234 = vmatpush1.bf16.msra.mxu0 %v1119
    %1235 = vmatprep.subr.bf16.mxu0 %v1124
    %1236 = vmatpush1.bf16.msra.mxu0 %v1123
    %1237 = vmatprep.subr.bf16.mxu0 %v1128
    %1238 = vmatpush1.bf16.msra.mxu0 %v1127
    %1239 = vmatprep.subr.bf16.mxu0 %v1132
    %1240 = vmatpush1.bf16.msra.mxu0 %v1131
    %1241 = vmatprep.subr.bf16.mxu0 %v1136
    %1242 = vmatpush1.bf16.msra.mxu0 %v1135
    %1243 = vmatprep.subr.bf16.mxu0 %v1140
    %1244 = vmatpush1.bf16.msra.mxu0 %v1139
    %1245 = vmatprep.subr.bf16.mxu0 %v1144
    %1246 = vmatpush1.bf16.msra.mxu0 %v1143
    %1247 = vmatprep.subr.bf16.mxu0 %v1148
    %1248 = vmatpush1.bf16.msra.mxu0 %v1147
    %1249 = vmatprep.subr.bf16.mxu0 %v1152
    %1250 = vmatpush1.bf16.msra.mxu0 %v1151
    %1251 = vmatprep.mubr.bf16.mxu0 %v877
    %1252 = vmatmul.mubr.bf16.gmra.mrb[0].mxu0 %v591
    %v1253 = vpop.f32.mrb[0].mxu0
    %v1254 = vadd.f32 %v882, %v1253
    %v1255 = vpop.f32.mrb[0].mxu0
    %v1256 = vadd.f32 %v886, %v1255
    %v1257 = vpop.f32.mrb[0].mxu0
    %v1258 = vpop.f32.mrb[0].mxu0
    %1259 = vdwg.mxu0
    %1260 = vmatprep.subr.bf16.mxu0 %v1094
    %1261 = vmatpush1.bf16.msra.mxu0 %v1093
    %1262 = vmatprep.subr.bf16.mxu0 %v1098
    %1263 = vmatpush1.bf16.msra.mxu0 %v1097
    %1264 = vmatprep.subr.bf16.mxu0 %v1102
    %1265 = vmatpush1.bf16.msra.mxu0 %v1101
    %1266 = vmatprep.subr.bf16.mxu0 %v1106
    %1267 = vmatpush1.bf16.msra.mxu0 %v1105
    %1268 = vmatprep.subr.bf16.mxu0 %v1110
    %1269 = vmatpush1.bf16.msra.mxu0 %v1109
    %1270 = vmatprep.subr.bf16.mxu0 %v1114
    %1271 = vmatpush1.bf16.msra.mxu0 %v1113
    %1272 = vmatprep.subr.bf16.mxu0 %v1118
    %1273 = vmatpush1.bf16.msra.mxu0 %v1117
    %1274 = vmatprep.subr.bf16.mxu0 %v1122
    %1275 = vmatpush1.bf16.msra.mxu0 %v1121
    %1276 = vmatprep.subr.bf16.mxu0 %v1126
    %1277 = vmatpush1.bf16.msra.mxu0 %v1125
    %1278 = vmatprep.subr.bf16.mxu0 %v1130
    %1279 = vmatpush1.bf16.msra.mxu0 %v1129
    %1280 = vmatprep.subr.bf16.mxu0 %v1134
    %1281 = vmatpush1.bf16.msra.mxu0 %v1133
    %1282 = vmatprep.subr.bf16.mxu0 %v1138
    %1283 = vmatpush1.bf16.msra.mxu0 %v1137
    %1284 = vmatprep.subr.bf16.mxu0 %v1142
    %1285 = vmatpush1.bf16.msra.mxu0 %v1141
    %1286 = vmatprep.subr.bf16.mxu0 %v1146
    %1287 = vmatpush1.bf16.msra.mxu0 %v1145
    %1288 = vmatprep.subr.bf16.mxu0 %v1150
    %1289 = vmatpush1.bf16.msra.mxu0 %v1149
    %1290 = vmatprep.subr.bf16.mxu0 %v1154
    %1291 = vmatpush1.bf16.msra.mxu0 %v1153
    %1292 = vmatprep.mubr.bf16.mxu0 %v877
    %1293 = vmatmul.mubr.bf16.gmra.mrb[0].mxu0 %v591
    %v1294 = vpop.f32.mrb[0].mxu0
    %v1295 = vadd.f32 %v890, %v1294
    %v1296 = vpop.f32.mrb[0].mxu0
    %v1297 = vadd.f32 %v894, %v1296
    %v1298 = vpop.f32.mrb[0].mxu0
    %v1299 = vpop.f32.mrb[0].mxu0
    %1300 = vdwg.mxu0
    %v1301 = vxor.u32 %v1254, 2147483648
    %v1302 = vxor.u32 %v1256, 2147483648
    %v1303 = vxor.u32 %v1295, 2147483648
    %v1304 = vmul.f32 %v1301, 1.442695
    %v1305 = vpow.pop %v1304
    %v1306 = vmul.f32 %v1302, 1.442695
    %v1307 = vpow.pop %v1306
    %v1308 = vmul.f32 %v1303, 1.442695
    %v1309 = vpow.pop %v1308
    %v1310 = vadd.f32 %v1305, 1.0
    %v1311 = vadd.f32 %v1307, 1.0
    %v1312 = vadd.f32 %v1309, 1.0
    %v1313 = vrcp.pop %v1310
    %v1314 = vmul.f32 1.0, %v1313
    %v1315 = vrcp.pop %v1311
    %v1316 = vmul.f32 1.0, %v1315
    %v1317 = vrcp.pop %v1312
    %v1318 = vmul.f32 1.0, %v1317
    %v1319 = vtanh.pop %v1297
    %v1320 = vmul.f32 %v1316, %v876
    %v1321 = vmul.f32 %v1314, %v1319
    %v1322 = vadd.f32 %v1320, %v1321
    %v1323 = vtanh.pop %v1322
    %v1324 = vmul.f32 %v1318, %v1323
    %v1325 = vpack.c.bf16 %v1324, %v1324
    %1326 = vmatprep.subr.bf16.mxu0 %v1092
    %1327 = vmatpush1.bf16.msra.mxu0 %v1091
    %1328 = vmatprep.subr.bf16.mxu0 %v1096
    %1329 = vmatpush1.bf16.msra.mxu0 %v1095
    %1330 = vmatprep.subr.bf16.mxu0 %v1100
    %1331 = vmatpush1.bf16.msra.mxu0 %v1099
    %1332 = vmatprep.subr.bf16.mxu0 %v1104
    %1333 = vmatpush1.bf16.msra.mxu0 %v1103
    %1334 = vmatprep.subr.bf16.mxu0 %v1108
    %1335 = vmatpush1.bf16.msra.mxu0 %v1107
    %1336 = vmatprep.subr.bf16.mxu0 %v1112
    %1337 = vmatpush1.bf16.msra.mxu0 %v1111
    %1338 = vmatprep.subr.bf16.mxu0 %v1116
    %1339 = vmatpush1.bf16.msra.mxu0 %v1115
    %1340 = vmatprep.subr.bf16.mxu0 %v1120
    %1341 = vmatpush1.bf16.msra.mxu0 %v1119
    %1342 = vmatprep.subr.bf16.mxu0 %v1124
    %1343 = vmatpush1.bf16.msra.mxu0 %v1123
    %1344 = vmatprep.subr.bf16.mxu0 %v1128
    %1345 = vmatpush1.bf16.msra.mxu0 %v1127
    %1346 = vmatprep.subr.bf16.mxu0 %v1132
    %1347 = vmatpush1.bf16.msra.mxu0 %v1131
    %1348 = vmatprep.subr.bf16.mxu0 %v1136
    %1349 = vmatpush1.bf16.msra.mxu0 %v1135
    %1350 = vmatprep.subr.bf16.mxu0 %v1140
    %1351 = vmatpush1.bf16.msra.mxu0 %v1139
    %1352 = vmatprep.subr.bf16.mxu0 %v1144
    %1353 = vmatpush1.bf16.msra.mxu0 %v1143
    %1354 = vmatprep.subr.bf16.mxu0 %v1148
    %1355 = vmatpush1.bf16.msra.mxu0 %v1147
    %1356 = vmatprep.subr.bf16.mxu0 %v1152
    %1357 = vmatpush1.bf16.msra.mxu0 %v1151
    %1358 = vmatprep.mubr.bf16.mxu0 %v1325
    %1359 = vmatmul.mubr.bf16.gmra.mrb[0].mxu0 %v699
    %v1360 = vpop.f32.mrb[0].mxu0
    %v1361 = vadd.f32 %v882, %v1360
    %v1362 = vpop.f32.mrb[0].mxu0
    %v1363 = vadd.f32 %v886, %v1362
    %v1364 = vpop.f32.mrb[0].mxu0
    %v1365 = vpop.f32.mrb[0].mxu0
    %1366 = vdwg.mxu0
    %1367 = vmatprep.subr.bf16.mxu0 %v1094
    %1368 = vmatpush1.bf16.msra.mxu0 %v1093
    %1369 = vmatprep.subr.bf16.mxu0 %v1098
    %1370 = vmatpush1.bf16.msra.mxu0 %v1097
    %1371 = vmatprep.subr.bf16.mxu0 %v1102
    %1372 = vmatpush1.bf16.msra.mxu0 %v1101
    %1373 = vmatprep.subr.bf16.mxu0 %v1106
    %1374 = vmatpush1.bf16.msra.mxu0 %v1105
    %1375 = vmatprep.subr.bf16.mxu0 %v1110
    %1376 = vmatpush1.bf16.msra.mxu0 %v1109
    %1377 = vmatprep.subr.bf16.mxu0 %v1114
    %1378 = vmatpush1.bf16.msra.mxu0 %v1113
    %1379 = vmatprep.subr.bf16.mxu0 %v1118
    %1380 = vmatpush1.bf16.msra.mxu0 %v1117
    %1381 = vmatprep.subr.bf16.mxu0 %v1122
    %1382 = vmatpush1.bf16.msra.mxu0 %v1121
    %1383 = vmatprep.subr.bf16.mxu0 %v1126
    %1384 = vmatpush1.bf16.msra.mxu0 %v1125
    %1385 = vmatprep.subr.bf16.mxu0 %v1130
    %1386 = vmatpush1.bf16.msra.mxu0 %v1129
    %1387 = vmatprep.subr.bf16.mxu0 %v1134
    %1388 = vmatpush1.bf16.msra.mxu0 %v1133
    %1389 = vmatprep.subr.bf16.mxu0 %v1138
    %1390 = vmatpush1.bf16.msra.mxu0 %v1137
    %1391 = vmatprep.subr.bf16.mxu0 %v1142
    %1392 = vmatpush1.bf16.msra.mxu0 %v1141
    %1393 = vmatprep.subr.bf16.mxu0 %v1146
    %1394 = vmatpush1.bf16.msra.mxu0 %v1145
    %1395 = vmatprep.subr.bf16.mxu0 %v1150
    %1396 = vmatpush1.bf16.msra.mxu0 %v1149
    %1397 = vmatprep.subr.bf16.mxu0 %v1154
    %1398 = vmatpush1.bf16.msra.mxu0 %v1153
    %1399 = vmatprep.mubr.bf16.mxu0 %v1325
    %1400 = vmatmul.mubr.bf16.gmra.mrb[0].mxu0 %v699
    %v1401 = vpop.f32.mrb[0].mxu0
    %v1402 = vadd.f32 %v890, %v1401
    %v1403 = vpop.f32.mrb[0].mxu0
    %v1404 = vadd.f32 %v894, %v1403
    %v1405 = vpop.f32.mrb[0].mxu0
    %v1406 = vpop.f32.mrb[0].mxu0
    %1407 = vdwg.mxu0
    %v1408 = vxor.u32 %v1361, 2147483648
    %v1409 = vxor.u32 %v1363, 2147483648
    %v1410 = vxor.u32 %v1402, 2147483648
    %v1411 = vmul.f32 %v1408, 1.442695
    %v1412 = vpow.pop %v1411
    %v1413 = vmul.f32 %v1409, 1.442695
    %v1414 = vpow.pop %v1413
    %v1415 = vmul.f32 %v1410, 1.442695
    %v1416 = vpow.pop %v1415
    %v1417 = vadd.f32 %v1412, 1.0
    %v1418 = vadd.f32 %v1414, 1.0
    %v1419 = vadd.f32 %v1416, 1.0
    %v1420 = vrcp.pop %v1417
    %v1421 = vmul.f32 1.0, %v1420
    %v1422 = vrcp.pop %v1418
    %v1423 = vmul.f32 1.0, %v1422
    %v1424 = vrcp.pop %v1419
    %v1425 = vmul.f32 1.0, %v1424
    %v1426 = vtanh.pop %v1404
    %v1427 = vmul.f32 %v1423, %v1322
    %v1428 = vmul.f32 %v1421, %v1426
    %v1429 = vadd.f32 %v1427, %v1428
    %v1430 = vtanh.pop %v1429
    %v1431 = vmul.f32 %v1425, %v1430
    %v1432 = vpack.c.bf16 %v805, %v805
    %v1433 = vpack.c.bf16 %v1431, %v1431
    %1434 = vmatprep.subr.bf16.mxu0 %v1092
    %1435 = vmatpush1.bf16.msra.mxu0 %v1091
    %1436 = vmatprep.subr.bf16.mxu0 %v1096
    %1437 = vmatpush1.bf16.msra.mxu0 %v1095
    %1438 = vmatprep.subr.bf16.mxu0 %v1100
    %1439 = vmatpush1.bf16.msra.mxu0 %v1099
    %1440 = vmatprep.subr.bf16.mxu0 %v1104
    %1441 = vmatpush1.bf16.msra.mxu0 %v1103
    %1442 = vmatprep.subr.bf16.mxu0 %v1108
    %1443 = vmatpush1.bf16.msra.mxu0 %v1107
    %1444 = vmatprep.subr.bf16.mxu0 %v1112
    %1445 = vmatpush1.bf16.msra.mxu0 %v1111
    %1446 = vmatprep.subr.bf16.mxu0 %v1116
    %1447 = vmatpush1.bf16.msra.mxu0 %v1115
    %1448 = vmatprep.subr.bf16.mxu0 %v1120
    %1449 = vmatpush1.bf16.msra.mxu0 %v1119
    %1450 = vmatprep.subr.bf16.mxu0 %v1124
    %1451 = vmatpush1.bf16.msra.mxu0 %v1123
    %1452 = vmatprep.subr.bf16.mxu0 %v1128
    %1453 = vmatpush1.bf16.msra.mxu0 %v1127
    %1454 = vmatprep.subr.bf16.mxu0 %v1132
    %1455 = vmatpush1.bf16.msra.mxu0 %v1131
    %1456 = vmatprep.subr.bf16.mxu0 %v1136
    %1457 = vmatpush1.bf16.msra.mxu0 %v1135
    %1458 = vmatprep.subr.bf16.mxu0 %v1140
    %1459 = vmatpush1.bf16.msra.mxu0 %v1139
    %1460 = vmatprep.subr.bf16.mxu0 %v1144
    %1461 = vmatpush1.bf16.msra.mxu0 %v1143
    %1462 = vmatprep.subr.bf16.mxu0 %v1148
    %1463 = vmatpush1.bf16.msra.mxu0 %v1147
    %1464 = vmatprep.subr.bf16.mxu0 %v1152
    %1465 = vmatpush1.bf16.msra.mxu0 %v1151
    %1466 = vmatprep.mubr.bf16.mxu0 %v1433
    %1467 = vmatmul.mubr.bf16.gmra.mrb[0].mxu0 %v1432
    %v1468 = vpop.f32.mrb[0].mxu0
    %v1469 = vadd.f32 %v882, %v1468
    %v1470 = vpop.f32.mrb[0].mxu0
    %v1471 = vadd.f32 %v886, %v1470
    %v1472 = vpop.f32.mrb[0].mxu0
    %v1473 = vpop.f32.mrb[0].mxu0
    %1474 = vdwg.mxu0
    %1475 = vmatprep.subr.bf16.mxu0 %v1094
    %1476 = vmatpush1.bf16.msra.mxu0 %v1093
    %1477 = vmatprep.subr.bf16.mxu0 %v1098
    %1478 = vmatpush1.bf16.msra.mxu0 %v1097
    %1479 = vmatprep.subr.bf16.mxu0 %v1102
    %1480 = vmatpush1.bf16.msra.mxu0 %v1101
    %1481 = vmatprep.subr.bf16.mxu0 %v1106
    %1482 = vmatpush1.bf16.msra.mxu0 %v1105
    %1483 = vmatprep.subr.bf16.mxu0 %v1110
    %1484 = vmatpush1.bf16.msra.mxu0 %v1109
    %1485 = vmatprep.subr.bf16.mxu0 %v1114
    %1486 = vmatpush1.bf16.msra.mxu0 %v1113
    %1487 = vmatprep.subr.bf16.mxu0 %v1118
    %1488 = vmatpush1.bf16.msra.mxu0 %v1117
    %1489 = vmatprep.subr.bf16.mxu0 %v1122
    %1490 = vmatpush1.bf16.msra.mxu0 %v1121
    %1491 = vmatprep.subr.bf16.mxu0 %v1126
    %1492 = vmatpush1.bf16.msra.mxu0 %v1125
    %1493 = vmatprep.subr.bf16.mxu0 %v1130
    %1494 = vmatpush1.bf16.msra.mxu0 %v1129
    %1495 = vmatprep.subr.bf16.mxu0 %v1134
    %1496 = vmatpush1.bf16.msra.mxu0 %v1133
    %1497 = vmatprep.subr.bf16.mxu0 %v1138
    %1498 = vmatpush1.bf16.msra.mxu0 %v1137
    %1499 = vmatprep.subr.bf16.mxu0 %v1142
    %1500 = vmatpush1.bf16.msra.mxu0 %v1141
    %1501 = vmatprep.subr.bf16.mxu0 %v1146
    %1502 = vmatpush1.bf16.msra.mxu0 %v1145
    %1503 = vmatprep.subr.bf16.mxu0 %v1150
    %1504 = vmatpush1.bf16.msra.mxu0 %v1149
    %1505 = vmatprep.subr.bf16.mxu0 %v1154
    %1506 = vmatpush1.bf16.msra.mxu0 %v1153
    %1507 = vmatprep.mubr.bf16.mxu0 %v1433
    %1508 = vmatmul.mubr.bf16.gmra.mrb[0].mxu0 %v1432
    %v1509 = vpop.f32.mrb[0].mxu0
    %v1510 = vadd.f32 %v890, %v1509
    %v1511 = vpop.f32.mrb[0].mxu0
    %v1512 = vadd.f32 %v894, %v1511
    %v1513 = vpop.f32.mrb[0].mxu0
    %v1514 = vpop.f32.mrb[0].mxu0
    %1515 = vdwg.mxu0
    %v1516 = vxor.u32 %v1469, 2147483648
    %v1517 = vxor.u32 %v1471, 2147483648
    %v1518 = vxor.u32 %v1510, 2147483648
    %v1519 = vmul.f32 %v1516, 1.442695
    %v1520 = vpow.pop %v1519
    %v1521 = vmul.f32 %v1517, 1.442695
    %v1522 = vpow.pop %v1521
    %v1523 = vmul.f32 %v1518, 1.442695
    %v1524 = vpow.pop %v1523
    %v1525 = vadd.f32 %v1520, 1.0
    %v1526 = vadd.f32 %v1522, 1.0
    %v1527 = vadd.f32 %v1524, 1.0
    %v1528 = vrcp.pop %v1525
    %v1529 = vmul.f32 1.0, %v1528
    %v1530 = vrcp.pop %v1526
    %v1531 = vmul.f32 1.0, %v1530
    %v1532 = vrcp.pop %v1527
    %v1533 = vmul.f32 1.0, %v1532
    %v1534 = vtanh.pop %v1512
    %v1535 = vmul.f32 %v1531, %v1429
    %v1536 = vmul.f32 %v1529, %v1534
    %v1537 = vadd.f32 %v1535, %v1536
    %v1538 = vtanh.pop %v1537
    %v1539 = vmul.f32 %v1533, %v1538
    %s1540 = scalar_lea.vmem [#allocation3], 1024
    %v1541 = vld [vmem:[%s1540] sm:$0xff]
    %v1542 = vld [vmem:[%s1540 + $0x8] sm:$0xff]
    %v1543 = vld [vmem:[%s1540 + $0x10] sm:$0xff]
    %v1544 = vld [vmem:[%s1540 + $0x18] sm:$0xff]
    %v1545 = vld [vmem:[%s1540 + $0x20] sm:$0xff]
    %v1546 = vld [vmem:[%s1540 + $0x28] sm:$0xff]
    %v1547 = vld [vmem:[%s1540 + $0x30] sm:$0xff]
    %v1548 = vld [vmem:[%s1540 + $0x38] sm:$0xff]
    %v1549 = vld [vmem:[%s1540 + $0x40] sm:$0xff]
    %v1550 = vld [vmem:[%s1540 + $0x48] sm:$0xff]
    %v1551 = vld [vmem:[%s1540 + $0x50] sm:$0xff]
    %v1552 = vld [vmem:[%s1540 + $0x58] sm:$0xff]
    %v1553 = vld [vmem:[%s1540 + $0x60] sm:$0xff]
    %v1554 = vld [vmem:[%s1540 + $0x68] sm:$0xff]
    %v1555 = vld [vmem:[%s1540 + $0x70] sm:$0xff]
    %v1556 = vld [vmem:[%s1540 + $0x78] sm:$0xff]
    %v1557 = vld [vmem:[%s1540 + $0x80] sm:$0xff]
    %v1558 = vld [vmem:[%s1540 + $0x88] sm:$0xff]
    %v1559 = vld [vmem:[%s1540 + $0x90] sm:$0xff]
    %v1560 = vld [vmem:[%s1540 + $0x98] sm:$0xff]
    %v1561 = vld [vmem:[%s1540 + $0xa0] sm:$0xff]
    %v1562 = vld [vmem:[%s1540 + $0xa8] sm:$0xff]
    %v1563 = vld [vmem:[%s1540 + $0xb0] sm:$0xff]
    %v1564 = vld [vmem:[%s1540 + $0xb8] sm:$0xff]
    %v1565 = vld [vmem:[%s1540 + $0xc0] sm:$0xff]
    %v1566 = vld [vmem:[%s1540 + $0xc8] sm:$0xff]
    %v1567 = vld [vmem:[%s1540 + $0xd0] sm:$0xff]
    %v1568 = vld [vmem:[%s1540 + $0xd8] sm:$0xff]
    %v1569 = vld [vmem:[%s1540 + $0xe0] sm:$0xff]
    %v1570 = vld [vmem:[%s1540 + $0xe8] sm:$0xff]
    %v1571 = vld [vmem:[%s1540 + $0xf0] sm:$0xff]
    %v1572 = vld [vmem:[%s1540 + $0xf8] sm:$0xff]
    %v1573 = vld [vmem:[%s1540 + $0x100] sm:$0xff]
    %v1574 = vld [vmem:[%s1540 + $0x108] sm:$0xff]
    %v1575 = vld [vmem:[%s1540 + $0x110] sm:$0xff]
    %v1576 = vld [vmem:[%s1540 + $0x118] sm:$0xff]
    %v1577 = vld [vmem:[%s1540 + $0x120] sm:$0xff]
    %v1578 = vld [vmem:[%s1540 + $0x128] sm:$0xff]
    %v1579 = vld [vmem:[%s1540 + $0x130] sm:$0xff]
    %v1580 = vld [vmem:[%s1540 + $0x138] sm:$0xff]
    %v1581 = vld [vmem:[%s1540 + $0x140] sm:$0xff]
    %v1582 = vld [vmem:[%s1540 + $0x148] sm:$0xff]
    %v1583 = vld [vmem:[%s1540 + $0x150] sm:$0xff]
    %v1584 = vld [vmem:[%s1540 + $0x158] sm:$0xff]
    %v1585 = vld [vmem:[%s1540 + $0x160] sm:$0xff]
    %v1586 = vld [vmem:[%s1540 + $0x168] sm:$0xff]
    %v1587 = vld [vmem:[%s1540 + $0x170] sm:$0xff]
    %v1588 = vld [vmem:[%s1540 + $0x178] sm:$0xff]
    %v1589 = vld [vmem:[%s1540 + $0x180] sm:$0xff]
    %v1590 = vld [vmem:[%s1540 + $0x188] sm:$0xff]
    %v1591 = vld [vmem:[%s1540 + $0x190] sm:$0xff]
    %v1592 = vld [vmem:[%s1540 + $0x198] sm:$0xff]
    %v1593 = vld [vmem:[%s1540 + $0x1a0] sm:$0xff]
    %v1594 = vld [vmem:[%s1540 + $0x1a8] sm:$0xff]
    %v1595 = vld [vmem:[%s1540 + $0x1b0] sm:$0xff]
    %v1596 = vld [vmem:[%s1540 + $0x1b8] sm:$0xff]
    %v1597 = vld [vmem:[%s1540 + $0x1c0] sm:$0xff]
    %v1598 = vld [vmem:[%s1540 + $0x1c8] sm:$0xff]
    %v1599 = vld [vmem:[%s1540 + $0x1d0] sm:$0xff]
    %v1600 = vld [vmem:[%s1540 + $0x1d8] sm:$0xff]
    %v1601 = vld [vmem:[%s1540 + $0x1e0] sm:$0xff]
    %v1602 = vld [vmem:[%s1540 + $0x1e8] sm:$0xff]
    %v1603 = vld [vmem:[%s1540 + $0x1f0] sm:$0xff]
    %v1604 = vld [vmem:[%s1540 + $0x1f8] sm:$0xff]
    %s1605 = scalar_lea.vmem [#allocation5], 8
    %v1606 = vld [vmem:[%s1605] sm:$0xf]
    %s1607 = scalar_lea.vmem %s3, 16
    %v1608 = vld [vmem:[%s1607] sm:$0xff]
    %s1609 = scalar_lea.vmem %s4, 16
    %v1610 = vld [vmem:[%s1609] sm:$0xff]
    %v1611 = vpack.c.bf16 %v1608, %v1608
    %v1613 = vlaneseq
    %v1614 = vshrl.u32 %v1613, 7
    %v1615 = vsub.s32 0, %v1614
    %v1616 = vrot.slane %v1606, %v1615
    %v1617 = vlaneseq
    %v1618 = vshrl.u32 %v1617, 7
    %v1619 = vsub.s32 1, %v1618
    %v1620 = vrot.slane %v1606, %v1619
    %v1621 = vlaneseq
    %v1622 = vshrl.u32 %v1621, 7
    %v1623 = vsub.s32 2, %v1622
    %v1624 = vrot.slane %v1606, %v1623
    %v1625 = vlaneseq
    %v1626 = vshrl.u32 %v1625, 7
    %v1627 = vsub.s32 3, %v1626
    %v1628 = vrot.slane %v1606, %v1627
    %v1697 = vunpack.c.l.b16 %v1541
    %v1698 = vunpack.c.h.b16 %v1541
    %v1699 = vunpack.c.l.b16 %v1542
    %v1700 = vunpack.c.h.b16 %v1542
    %v1701 = vunpack.c.l.b16 %v1543
    %v1702 = vunpack.c.h.b16 %v1543
    %v1703 = vunpack.c.l.b16 %v1544
    %v1704 = vunpack.c.h.b16 %v1544
    %v1705 = vunpack.c.l.b16 %v1545
    %v1706 = vunpack.c.h.b16 %v1545
    %v1707 = vunpack.c.l.b16 %v1546
    %v1708 = vunpack.c.h.b16 %v1546
    %v1709 = vunpack.c.l.b16 %v1547
    %v1710 = vunpack.c.h.b16 %v1547
    %v1711 = vunpack.c.l.b16 %v1548
    %v1712 = vunpack.c.h.b16 %v1548
    %v1713 = vunpack.c.l.b16 %v1549
    %v1714 = vunpack.c.h.b16 %v1549
    %v1715 = vunpack.c.l.b16 %v1550
    %v1716 = vunpack.c.h.b16 %v1550
    %v1717 = vunpack.c.l.b16 %v1551
    %v1718 = vunpack.c.h.b16 %v1551
    %v1719 = vunpack.c.l.b16 %v1552
    %v1720 = vunpack.c.h.b16 %v1552
    %v1721 = vunpack.c.l.b16 %v1553
    %v1722 = vunpack.c.h.b16 %v1553
    %v1723 = vunpack.c.l.b16 %v1554
    %v1724 = vunpack.c.h.b16 %v1554
    %v1725 = vunpack.c.l.b16 %v1555
    %v1726 = vunpack.c.h.b16 %v1555
    %v1727 = vunpack.c.l.b16 %v1556
    %v1728 = vunpack.c.h.b16 %v1556
    %v1729 = vunpack.c.l.b16 %v1557
    %v1730 = vunpack.c.h.b16 %v1557
    %v1731 = vunpack.c.l.b16 %v1558
    %v1732 = vunpack.c.h.b16 %v1558
    %v1733 = vunpack.c.l.b16 %v1559
    %v1734 = vunpack.c.h.b16 %v1559
    %v1735 = vunpack.c.l.b16 %v1560
    %v1736 = vunpack.c.h.b16 %v1560
    %v1737 = vunpack.c.l.b16 %v1561
    %v1738 = vunpack.c.h.b16 %v1561
    %v1739 = vunpack.c.l.b16 %v1562
    %v1740 = vunpack.c.h.b16 %v1562
    %v1741 = vunpack.c.l.b16 %v1563
    %v1742 = vunpack.c.h.b16 %v1563
    %v1743 = vunpack.c.l.b16 %v1564
    %v1744 = vunpack.c.h.b16 %v1564
    %v1745 = vunpack.c.l.b16 %v1565
    %v1746 = vunpack.c.h.b16 %v1565
    %v1747 = vunpack.c.l.b16 %v1566
    %v1748 = vunpack.c.h.b16 %v1566
    %v1749 = vunpack.c.l.b16 %v1567
    %v1750 = vunpack.c.h.b16 %v1567
    %v1751 = vunpack.c.l.b16 %v1568
    %v1752 = vunpack.c.h.b16 %v1568
    %v1753 = vunpack.c.l.b16 %v1569
    %v1754 = vunpack.c.h.b16 %v1569
    %v1755 = vunpack.c.l.b16 %v1570
    %v1756 = vunpack.c.h.b16 %v1570
    %v1757 = vunpack.c.l.b16 %v1571
    %v1758 = vunpack.c.h.b16 %v1571
    %v1759 = vunpack.c.l.b16 %v1572
    %v1760 = vunpack.c.h.b16 %v1572
    %v1761 = vunpack.c.l.b16 %v1573
    %v1762 = vunpack.c.h.b16 %v1573
    %v1763 = vunpack.c.l.b16 %v1574
    %v1764 = vunpack.c.h.b16 %v1574
    %v1765 = vunpack.c.l.b16 %v1575
    %v1766 = vunpack.c.h.b16 %v1575
    %v1767 = vunpack.c.l.b16 %v1576
    %v1768 = vunpack.c.h.b16 %v1576
    %v1769 = vunpack.c.l.b16 %v1577
    %v1770 = vunpack.c.h.b16 %v1577
    %v1771 = vunpack.c.l.b16 %v1578
    %v1772 = vunpack.c.h.b16 %v1578
    %v1773 = vunpack.c.l.b16 %v1579
    %v1774 = vunpack.c.h.b16 %v1579
    %v1775 = vunpack.c.l.b16 %v1580
    %v1776 = vunpack.c.h.b16 %v1580
    %v1777 = vunpack.c.l.b16 %v1581
    %v1778 = vunpack.c.h.b16 %v1581
    %v1779 = vunpack.c.l.b16 %v1582
    %v1780 = vunpack.c.h.b16 %v1582
    %v1781 = vunpack.c.l.b16 %v1583
    %v1782 = vunpack.c.h.b16 %v1583
    %v1783 = vunpack.c.l.b16 %v1584
    %v1784 = vunpack.c.h.b16 %v1584
    %v1785 = vunpack.c.l.b16 %v1585
    %v1786 = vunpack.c.h.b16 %v1585
    %v1787 = vunpack.c.l.b16 %v1586
    %v1788 = vunpack.c.h.b16 %v1586
    %v1789 = vunpack.c.l.b16 %v1587
    %v1790 = vunpack.c.h.b16 %v1587
    %v1791 = vunpack.c.l.b16 %v1588
    %v1792 = vunpack.c.h.b16 %v1588
    %v1793 = vunpack.c.l.b16 %v1589
    %v1794 = vunpack.c.h.b16 %v1589
    %v1795 = vunpack.c.l.b16 %v1590
    %v1796 = vunpack.c.h.b16 %v1590
    %v1797 = vunpack.c.l.b16 %v1591
    %v1798 = vunpack.c.h.b16 %v1591
    %v1799 = vunpack.c.l.b16 %v1592
    %v1800 = vunpack.c.h.b16 %v1592
    %v1801 = vunpack.c.l.b16 %v1593
    %v1802 = vunpack.c.h.b16 %v1593
    %v1803 = vunpack.c.l.b16 %v1594
    %v1804 = vunpack.c.h.b16 %v1594
    %v1805 = vunpack.c.l.b16 %v1595
    %v1806 = vunpack.c.h.b16 %v1595
    %v1807 = vunpack.c.l.b16 %v1596
    %v1808 = vunpack.c.h.b16 %v1596
    %v1809 = vunpack.c.l.b16 %v1597
    %v1810 = vunpack.c.h.b16 %v1597
    %v1811 = vunpack.c.l.b16 %v1598
    %v1812 = vunpack.c.h.b16 %v1598
    %v1813 = vunpack.c.l.b16 %v1599
    %v1814 = vunpack.c.h.b16 %v1599
    %v1815 = vunpack.c.l.b16 %v1600
    %v1816 = vunpack.c.h.b16 %v1600
    %v1817 = vunpack.c.l.b16 %v1601
    %v1818 = vunpack.c.h.b16 %v1601
    %v1819 = vunpack.c.l.b16 %v1602
    %v1820 = vunpack.c.h.b16 %v1602
    %v1821 = vunpack.c.l.b16 %v1603
    %v1822 = vunpack.c.h.b16 %v1603
    %v1823 = vunpack.c.l.b16 %v1604
    %v1824 = vunpack.c.h.b16 %v1604
    %v1825 = vpack.c.b16 %v1701, %v1697
    %v1826 = vpack.c.b16 %v1702, %v1698
    %v1827 = vpack.c.b16 %v1703, %v1699
    %v1828 = vpack.c.b16 %v1704, %v1700
    %v1829 = vpack.c.b16 %v1709, %v1705
    %v1830 = vpack.c.b16 %v1710, %v1706
    %v1831 = vpack.c.b16 %v1711, %v1707
    %v1832 = vpack.c.b16 %v1712, %v1708
    %v1833 = vpack.c.b16 %v1717, %v1713
    %v1834 = vpack.c.b16 %v1718, %v1714
    %v1835 = vpack.c.b16 %v1719, %v1715
    %v1836 = vpack.c.b16 %v1720, %v1716
    %v1837 = vpack.c.b16 %v1725, %v1721
    %v1838 = vpack.c.b16 %v1726, %v1722
    %v1839 = vpack.c.b16 %v1727, %v1723
    %v1840 = vpack.c.b16 %v1728, %v1724
    %v1841 = vpack.c.b16 %v1733, %v1729
    %v1842 = vpack.c.b16 %v1734, %v1730
    %v1843 = vpack.c.b16 %v1735, %v1731
    %v1844 = vpack.c.b16 %v1736, %v1732
    %v1845 = vpack.c.b16 %v1741, %v1737
    %v1846 = vpack.c.b16 %v1742, %v1738
    %v1847 = vpack.c.b16 %v1743, %v1739
    %v1848 = vpack.c.b16 %v1744, %v1740
    %v1849 = vpack.c.b16 %v1749, %v1745
    %v1850 = vpack.c.b16 %v1750, %v1746
    %v1851 = vpack.c.b16 %v1751, %v1747
    %v1852 = vpack.c.b16 %v1752, %v1748
    %v1853 = vpack.c.b16 %v1757, %v1753
    %v1854 = vpack.c.b16 %v1758, %v1754
    %v1855 = vpack.c.b16 %v1759, %v1755
    %v1856 = vpack.c.b16 %v1760, %v1756
    %v1857 = vpack.c.b16 %v1765, %v1761
    %v1858 = vpack.c.b16 %v1766, %v1762
    %v1859 = vpack.c.b16 %v1767, %v1763
    %v1860 = vpack.c.b16 %v1768, %v1764
    %v1861 = vpack.c.b16 %v1773, %v1769
    %v1862 = vpack.c.b16 %v1774, %v1770
    %v1863 = vpack.c.b16 %v1775, %v1771
    %v1864 = vpack.c.b16 %v1776, %v1772
    %v1865 = vpack.c.b16 %v1781, %v1777
    %v1866 = vpack.c.b16 %v1782, %v1778
    %v1867 = vpack.c.b16 %v1783, %v1779
    %v1868 = vpack.c.b16 %v1784, %v1780
    %v1869 = vpack.c.b16 %v1789, %v1785
    %v1870 = vpack.c.b16 %v1790, %v1786
    %v1871 = vpack.c.b16 %v1791, %v1787
    %v1872 = vpack.c.b16 %v1792, %v1788
    %v1873 = vpack.c.b16 %v1797, %v1793
    %v1874 = vpack.c.b16 %v1798, %v1794
    %v1875 = vpack.c.b16 %v1799, %v1795
    %v1876 = vpack.c.b16 %v1800, %v1796
    %v1877 = vpack.c.b16 %v1805, %v1801
    %v1878 = vpack.c.b16 %v1806, %v1802
    %v1879 = vpack.c.b16 %v1807, %v1803
    %v1880 = vpack.c.b16 %v1808, %v1804
    %v1881 = vpack.c.b16 %v1813, %v1809
    %v1882 = vpack.c.b16 %v1814, %v1810
    %v1883 = vpack.c.b16 %v1815, %v1811
    %v1884 = vpack.c.b16 %v1816, %v1812
    %v1885 = vpack.c.b16 %v1821, %v1817
    %v1886 = vpack.c.b16 %v1822, %v1818
    %v1887 = vpack.c.b16 %v1823, %v1819
    %v1888 = vpack.c.b16 %v1824, %v1820
    %1953 = vmatprep.subr.bf16.mxu0 %v1826
    %1954 = vmatpush1.bf16.msra.mxu0 %v1825
    %1955 = vmatprep.subr.bf16.mxu0 %v1830
    %1956 = vmatpush1.bf16.msra.mxu0 %v1829
    %1957 = vmatprep.subr.bf16.mxu0 %v1834
    %1958 = vmatpush1.bf16.msra.mxu0 %v1833
    %1959 = vmatprep.subr.bf16.mxu0 %v1838
    %1960 = vmatpush1.bf16.msra.mxu0 %v1837
    %1961 = vmatprep.subr.bf16.mxu0 %v1842
    %1962 = vmatpush1.bf16.msra.mxu0 %v1841
    %1963 = vmatprep.subr.bf16.mxu0 %v1846
    %1964 = vmatpush1.bf16.msra.mxu0 %v1845
    %1965 = vmatprep.subr.bf16.mxu0 %v1850
    %1966 = vmatpush1.bf16.msra.mxu0 %v1849
    %1967 = vmatprep.subr.bf16.mxu0 %v1854
    %1968 = vmatpush1.bf16.msra.mxu0 %v1853
    %1969 = vmatprep.subr.bf16.mxu0 %v1858
    %1970 = vmatpush1.bf16.msra.mxu0 %v1857
    %1971 = vmatprep.subr.bf16.mxu0 %v1862
    %1972 = vmatpush1.bf16.msra.mxu0 %v1861
    %1973 = vmatprep.subr.bf16.mxu0 %v1866
    %1974 = vmatpush1.bf16.msra.mxu0 %v1865
    %1975 = vmatprep.subr.bf16.mxu0 %v1870
    %1976 = vmatpush1.bf16.msra.mxu0 %v1869
    %1977 = vmatprep.subr.bf16.mxu0 %v1874
    %1978 = vmatpush1.bf16.msra.mxu0 %v1873
    %1979 = vmatprep.subr.bf16.mxu0 %v1878
    %1980 = vmatpush1.bf16.msra.mxu0 %v1877
    %1981 = vmatprep.subr.bf16.mxu0 %v1882
    %1982 = vmatpush1.bf16.msra.mxu0 %v1881
    %1983 = vmatprep.subr.bf16.mxu0 %v1886
    %1984 = vmatpush1.bf16.msra.mxu0 %v1885
    %1985 = vmatprep.mubr.bf16.mxu0 %v1611
    %1986 = vmatmul.mubr.bf16.gmra.mrb[0].mxu0 %v1325
    %v1987 = vpop.f32.mrb[0].mxu0
    %v1988 = vadd.f32 %v1616, %v1987
    %v1989 = vpop.f32.mrb[0].mxu0
    %v1990 = vadd.f32 %v1620, %v1989
    %v1991 = vpop.f32.mrb[0].mxu0
    %v1992 = vpop.f32.mrb[0].mxu0
    %1993 = vdwg.mxu0
    %1994 = vmatprep.subr.bf16.mxu0 %v1828
    %1995 = vmatpush1.bf16.msra.mxu0 %v1827
    %1996 = vmatprep.subr.bf16.mxu0 %v1832
    %1997 = vmatpush1.bf16.msra.mxu0 %v1831
    %1998 = vmatprep.subr.bf16.mxu0 %v1836
    %1999 = vmatpush1.bf16.msra.mxu0 %v1835
    %2000 = vmatprep.subr.bf16.mxu0 %v1840
    %2001 = vmatpush1.bf16.msra.mxu0 %v1839
    %2002 = vmatprep.subr.bf16.mxu0 %v1844
    %2003 = vmatpush1.bf16.msra.mxu0 %v1843
    %2004 = vmatprep.subr.bf16.mxu0 %v1848
    %2005 = vmatpush1.bf16.msra.mxu0 %v1847
    %2006 = vmatprep.subr.bf16.mxu0 %v1852
    %2007 = vmatpush1.bf16.msra.mxu0 %v1851
    %2008 = vmatprep.subr.bf16.mxu0 %v1856
    %2009 = vmatpush1.bf16.msra.mxu0 %v1855
    %2010 = vmatprep.subr.bf16.mxu0 %v1860
    %2011 = vmatpush1.bf16.msra.mxu0 %v1859
    %2012 = vmatprep.subr.bf16.mxu0 %v1864
    %2013 = vmatpush1.bf16.msra.mxu0 %v1863
    %2014 = vmatprep.subr.bf16.mxu0 %v1868
    %2015 = vmatpush1.bf16.msra.mxu0 %v1867
    %2016 = vmatprep.subr.bf16.mxu0 %v1872
    %2017 = vmatpush1.bf16.msra.mxu0 %v1871
    %2018 = vmatprep.subr.bf16.mxu0 %v1876
    %2019 = vmatpush1.bf16.msra.mxu0 %v1875
    %2020 = vmatprep.subr.bf16.mxu0 %v1880
    %2021 = vmatpush1.bf16.msra.mxu0 %v1879
    %2022 = vmatprep.subr.bf16.mxu0 %v1884
    %2023 = vmatpush1.bf16.msra.mxu0 %v1883
    %2024 = vmatprep.subr.bf16.mxu0 %v1888
    %2025 = vmatpush1.bf16.msra.mxu0 %v1887
    %2026 = vmatprep.mubr.bf16.mxu0 %v1611
    %2027 = vmatmul.mubr.bf16.gmra.mrb[0].mxu0 %v1325
    %v2028 = vpop.f32.mrb[0].mxu0
    %v2029 = vadd.f32 %v1624, %v2028
    %v2030 = vpop.f32.mrb[0].mxu0
    %v2031 = vadd.f32 %v1628, %v2030
    %v2032 = vpop.f32.mrb[0].mxu0
    %v2033 = vpop.f32.mrb[0].mxu0
    %2034 = vdwg.mxu0
    %v2035 = vxor.u32 %v1988, 2147483648
    %v2036 = vxor.u32 %v1990, 2147483648
    %v2037 = vxor.u32 %v2029, 2147483648
    %v2038 = vmul.f32 %v2035, 1.442695
    %v2039 = vpow.pop %v2038
    %v2040 = vmul.f32 %v2036, 1.442695
    %v2041 = vpow.pop %v2040
    %v2042 = vmul.f32 %v2037, 1.442695
    %v2043 = vpow.pop %v2042
    %v2044 = vadd.f32 %v2039, 1.0
    %v2045 = vadd.f32 %v2041, 1.0
    %v2046 = vadd.f32 %v2043, 1.0
    %v2047 = vrcp.pop %v2044
    %v2048 = vmul.f32 1.0, %v2047
    %v2049 = vrcp.pop %v2045
    %v2050 = vmul.f32 1.0, %v2049
    %v2051 = vrcp.pop %v2046
    %v2052 = vmul.f32 1.0, %v2051
    %v2053 = vtanh.pop %v2031
    %v2054 = vmul.f32 %v2050, %v1610
    %v2055 = vmul.f32 %v2048, %v2053
    %v2056 = vadd.f32 %v2054, %v2055
    %v2057 = vtanh.pop %v2056
    %v2058 = vmul.f32 %v2052, %v2057
    %v2059 = vpack.c.bf16 %v2058, %v2058
    %2060 = vmatprep.subr.bf16.mxu0 %v1826
    %2061 = vmatpush1.bf16.msra.mxu0 %v1825
    %2062 = vmatprep.subr.bf16.mxu0 %v1830
    %2063 = vmatpush1.bf16.msra.mxu0 %v1829
    %2064 = vmatprep.subr.bf16.mxu0 %v1834
    %2065 = vmatpush1.bf16.msra.mxu0 %v1833
    %2066 = vmatprep.subr.bf16.mxu0 %v1838
    %2067 = vmatpush1.bf16.msra.mxu0 %v1837
    %2068 = vmatprep.subr.bf16.mxu0 %v1842
    %2069 = vmatpush1.bf16.msra.mxu0 %v1841
    %2070 = vmatprep.subr.bf16.mxu0 %v1846
    %2071 = vmatpush1.bf16.msra.mxu0 %v1845
    %2072 = vmatprep.subr.bf16.mxu0 %v1850
    %2073 = vmatpush1.bf16.msra.mxu0 %v1849
    %2074 = vmatprep.subr.bf16.mxu0 %v1854
    %2075 = vmatpush1.bf16.msra.mxu0 %v1853
    %2076 = vmatprep.subr.bf16.mxu0 %v1858
    %2077 = vmatpush1.bf16.msra.mxu0 %v1857
    %2078 = vmatprep.subr.bf16.mxu0 %v1862
    %2079 = vmatpush1.bf16.msra.mxu0 %v1861
    %2080 = vmatprep.subr.bf16.mxu0 %v1866
    %2081 = vmatpush1.bf16.msra.mxu0 %v1865
    %2082 = vmatprep.subr.bf16.mxu0 %v1870
    %2083 = vmatpush1.bf16.msra.mxu0 %v1869
    %2084 = vmatprep.subr.bf16.mxu0 %v1874
    %2085 = vmatpush1.bf16.msra.mxu0 %v1873
    %2086 = vmatprep.subr.bf16.mxu0 %v1878
    %2087 = vmatpush1.bf16.msra.mxu0 %v1877
    %2088 = vmatprep.subr.bf16.mxu0 %v1882
    %2089 = vmatpush1.bf16.msra.mxu0 %v1881
    %2090 = vmatprep.subr.bf16.mxu0 %v1886
    %2091 = vmatpush1.bf16.msra.mxu0 %v1885
    %2092 = vmatprep.mubr.bf16.mxu0 %v2059
    %2093 = vmatmul.mubr.bf16.gmra.mrb[0].mxu0 %v1433
    %v2094 = vpop.f32.mrb[0].mxu0
    %v2095 = vadd.f32 %v1616, %v2094
    %v2096 = vpop.f32.mrb[0].mxu0
    %v2097 = vadd.f32 %v1620, %v2096
    %v2098 = vpop.f32.mrb[0].mxu0
    %v2099 = vpop.f32.mrb[0].mxu0
    %2100 = vdwg.mxu0
    %2101 = vmatprep.subr.bf16.mxu0 %v1828
    %2102 = vmatpush1.bf16.msra.mxu0 %v1827
    %2103 = vmatprep.subr.bf16.mxu0 %v1832
    %2104 = vmatpush1.bf16.msra.mxu0 %v1831
    %2105 = vmatprep.subr.bf16.mxu0 %v1836
    %2106 = vmatpush1.bf16.msra.mxu0 %v1835
    %2107 = vmatprep.subr.bf16.mxu0 %v1840
    %2108 = vmatpush1.bf16.msra.mxu0 %v1839
    %2109 = vmatprep.subr.bf16.mxu0 %v1844
    %2110 = vmatpush1.bf16.msra.mxu0 %v1843
    %2111 = vmatprep.subr.bf16.mxu0 %v1848
    %2112 = vmatpush1.bf16.msra.mxu0 %v1847
    %2113 = vmatprep.subr.bf16.mxu0 %v1852
    %2114 = vmatpush1.bf16.msra.mxu0 %v1851
    %2115 = vmatprep.subr.bf16.mxu0 %v1856
    %2116 = vmatpush1.bf16.msra.mxu0 %v1855
    %2117 = vmatprep.subr.bf16.mxu0 %v1860
    %2118 = vmatpush1.bf16.msra.mxu0 %v1859
    %2119 = vmatprep.subr.bf16.mxu0 %v1864
    %2120 = vmatpush1.bf16.msra.mxu0 %v1863
    %2121 = vmatprep.subr.bf16.mxu0 %v1868
    %2122 = vmatpush1.bf16.msra.mxu0 %v1867
    %2123 = vmatprep.subr.bf16.mxu0 %v1872
    %2124 = vmatpush1.bf16.msra.mxu0 %v1871
    %2125 = vmatprep.subr.bf16.mxu0 %v1876
    %2126 = vmatpush1.bf16.msra.mxu0 %v1875
    %2127 = vmatprep.subr.bf16.mxu0 %v1880
    %2128 = vmatpush1.bf16.msra.mxu0 %v1879
    %2129 = vmatprep.subr.bf16.mxu0 %v1884
    %2130 = vmatpush1.bf16.msra.mxu0 %v1883
    %2131 = vmatprep.subr.bf16.mxu0 %v1888
    %2132 = vmatpush1.bf16.msra.mxu0 %v1887
    %2133 = vmatprep.mubr.bf16.mxu0 %v2059
    %2134 = vmatmul.mubr.bf16.gmra.mrb[0].mxu0 %v1433
    %v2135 = vpop.f32.mrb[0].mxu0
    %v2136 = vadd.f32 %v1624, %v2135
    %v2137 = vpop.f32.mrb[0].mxu0
    %v2138 = vadd.f32 %v1628, %v2137
    %v2139 = vpop.f32.mrb[0].mxu0
    %v2140 = vpop.f32.mrb[0].mxu0
    %2141 = vdwg.mxu0
    %v2142 = vxor.u32 %v2095, 2147483648
    %v2143 = vxor.u32 %v2097, 2147483648
    %v2144 = vxor.u32 %v2136, 2147483648
    %v2145 = vmul.f32 %v2142, 1.442695
    %v2146 = vpow.pop %v2145
    %v2147 = vmul.f32 %v2143, 1.442695
    %v2148 = vpow.pop %v2147
    %v2149 = vmul.f32 %v2144, 1.442695
    %v2150 = vpow.pop %v2149
    %v2151 = vadd.f32 %v2146, 1.0
    %v2152 = vadd.f32 %v2148, 1.0
    %v2153 = vadd.f32 %v2150, 1.0
    %v2154 = vrcp.pop %v2151
    %v2155 = vmul.f32 1.0, %v2154
    %v2156 = vrcp.pop %v2152
    %v2157 = vmul.f32 1.0, %v2156
    %v2158 = vrcp.pop %v2153
    %v2159 = vmul.f32 1.0, %v2158
    %v2160 = vtanh.pop %v2138
    %v2161 = vmul.f32 %v2157, %v2056
    %v2162 = vmul.f32 %v2155, %v2160
    %v2163 = vadd.f32 %v2161, %v2162
    %v2164 = vtanh.pop %v2163
    %v2165 = vmul.f32 %v2159, %v2164
    %v2166 = vpack.c.bf16 %v1539, %v1539
    %v2167 = vpack.c.bf16 %v2165, %v2165
    %2168 = vmatprep.subr.bf16.mxu0 %v1826
    %2169 = vmatpush1.bf16.msra.mxu0 %v1825
    %2170 = vmatprep.subr.bf16.mxu0 %v1830
    %2171 = vmatpush1.bf16.msra.mxu0 %v1829
    %2172 = vmatprep.subr.bf16.mxu0 %v1834
    %2173 = vmatpush1.bf16.msra.mxu0 %v1833
    %2174 = vmatprep.subr.bf16.mxu0 %v1838
    %2175 = vmatpush1.bf16.msra.mxu0 %v1837
    %2176 = vmatprep.subr.bf16.mxu0 %v1842
    %2177 = vmatpush1.bf16.msra.mxu0 %v1841
    %2178 = vmatprep.subr.bf16.mxu0 %v1846
    %2179 = vmatpush1.bf16.msra.mxu0 %v1845
    %2180 = vmatprep.subr.bf16.mxu0 %v1850
    %2181 = vmatpush1.bf16.msra.mxu0 %v1849
    %2182 = vmatprep.subr.bf16.mxu0 %v1854
    %2183 = vmatpush1.bf16.msra.mxu0 %v1853
    %2184 = vmatprep.subr.bf16.mxu0 %v1858
    %2185 = vmatpush1.bf16.msra.mxu0 %v1857
    %2186 = vmatprep.subr.bf16.mxu0 %v1862
    %2187 = vmatpush1.bf16.msra.mxu0 %v1861
    %2188 = vmatprep.subr.bf16.mxu0 %v1866
    %2189 = vmatpush1.bf16.msra.mxu0 %v1865
    %2190 = vmatprep.subr.bf16.mxu0 %v1870
    %2191 = vmatpush1.bf16.msra.mxu0 %v1869
    %2192 = vmatprep.subr.bf16.mxu0 %v1874
    %2193 = vmatpush1.bf16.msra.mxu0 %v1873
    %2194 = vmatprep.subr.bf16.mxu0 %v1878
    %2195 = vmatpush1.bf16.msra.mxu0 %v1877
    %2196 = vmatprep.subr.bf16.mxu0 %v1882
    %2197 = vmatpush1.bf16.msra.mxu0 %v1881
    %2198 = vmatprep.subr.bf16.mxu0 %v1886
    %2199 = vmatpush1.bf16.msra.mxu0 %v1885
    %2200 = vmatprep.mubr.bf16.mxu0 %v2167
    %2201 = vmatmul.mubr.bf16.gmra.mrb[0].mxu0 %v2166
    %v2202 = vpop.f32.mrb[0].mxu0
    %v2203 = vadd.f32 %v1616, %v2202
    %v2204 = vpop.f32.mrb[0].mxu0
    %v2205 = vadd.f32 %v1620, %v2204
    %v2206 = vpop.f32.mrb[0].mxu0
    %v2207 = vpop.f32.mrb[0].mxu0
    %2208 = vdwg.mxu0
    %2209 = vmatprep.subr.bf16.mxu0 %v1828
    %2210 = vmatpush1.bf16.msra.mxu0 %v1827
    %2211 = vmatprep.subr.bf16.mxu0 %v1832
    %2212 = vmatpush1.bf16.msra.mxu0 %v1831
    %2213 = vmatprep.subr.bf16.mxu0 %v1836
    %2214 = vmatpush1.bf16.msra.mxu0 %v1835
    %2215 = vmatprep.subr.bf16.mxu0 %v1840
    %2216 = vmatpush1.bf16.msra.mxu0 %v1839
    %2217 = vmatprep.subr.bf16.mxu0 %v1844
    %2218 = vmatpush1.bf16.msra.mxu0 %v1843
    %2219 = vmatprep.subr.bf16.mxu0 %v1848
    %2220 = vmatpush1.bf16.msra.mxu0 %v1847
    %2221 = vmatprep.subr.bf16.mxu0 %v1852
    %2222 = vmatpush1.bf16.msra.mxu0 %v1851
    %2223 = vmatprep.subr.bf16.mxu0 %v1856
    %2224 = vmatpush1.bf16.msra.mxu0 %v1855
    %2225 = vmatprep.subr.bf16.mxu0 %v1860
    %2226 = vmatpush1.bf16.msra.mxu0 %v1859
    %2227 = vmatprep.subr.bf16.mxu0 %v1864
    %2228 = vmatpush1.bf16.msra.mxu0 %v1863
    %2229 = vmatprep.subr.bf16.mxu0 %v1868
    %2230 = vmatpush1.bf16.msra.mxu0 %v1867
    %2231 = vmatprep.subr.bf16.mxu0 %v1872
    %2232 = vmatpush1.bf16.msra.mxu0 %v1871
    %2233 = vmatprep.subr.bf16.mxu0 %v1876
    %2234 = vmatpush1.bf16.msra.mxu0 %v1875
    %2235 = vmatprep.subr.bf16.mxu0 %v1880
    %2236 = vmatpush1.bf16.msra.mxu0 %v1879
    %2237 = vmatprep.subr.bf16.mxu0 %v1884
    %2238 = vmatpush1.bf16.msra.mxu0 %v1883
    %2239 = vmatprep.subr.bf16.mxu0 %v1888
    %2240 = vmatpush1.bf16.msra.mxu0 %v1887
    %2241 = vmatprep.mubr.bf16.mxu0 %v2167
    %2242 = vmatmul.mubr.bf16.gmra.mrb[0].mxu0 %v2166
    %v2243 = vpop.f32.mrb[0].mxu0
    %v2244 = vadd.f32 %v1624, %v2243
    %v2245 = vpop.f32.mrb[0].mxu0
    %v2246 = vadd.f32 %v1628, %v2245
    %v2247 = vpop.f32.mrb[0].mxu0
    %v2248 = vpop.f32.mrb[0].mxu0
    %2249 = vdwg.mxu0
    %v2250 = vxor.u32 %v2203, 2147483648
    %v2251 = vxor.u32 %v2205, 2147483648
    %v2252 = vxor.u32 %v2244, 2147483648
    %v2253 = vmul.f32 %v2250, 1.442695
    %v2254 = vpow.pop %v2253
    %v2255 = vmul.f32 %v2251, 1.442695
    %v2256 = vpow.pop %v2255
    %v2257 = vmul.f32 %v2252, 1.442695
    %v2258 = vpow.pop %v2257
    %v2259 = vadd.f32 %v2254, 1.0
    %v2260 = vadd.f32 %v2256, 1.0
    %v2261 = vadd.f32 %v2258, 1.0
    %v2262 = vrcp.pop %v2259
    %v2263 = vmul.f32 1.0, %v2262
    %v2264 = vrcp.pop %v2260
    %v2265 = vmul.f32 1.0, %v2264
    %v2266 = vrcp.pop %v2261
    %v2267 = vmul.f32 1.0, %v2266
    %v2268 = vtanh.pop %v2246
    %v2269 = vmul.f32 %v2265, %v2163
    %v2270 = vmul.f32 %v2263, %v2268
    %v2271 = vadd.f32 %v2269, %v2270
    %v2272 = vtanh.pop %v2271
    %v2273 = vmul.f32 %v2267, %v2272
    %s2274 = scalar_lea.vmem [#allocation3], 1536
    %v2275 = vld [vmem:[%s2274] sm:$0xff]
    %v2276 = vld [vmem:[%s2274 + $0x8] sm:$0xff]
    %v2277 = vld [vmem:[%s2274 + $0x10] sm:$0xff]
    %v2278 = vld [vmem:[%s2274 + $0x18] sm:$0xff]
    %v2279 = vld [vmem:[%s2274 + $0x20] sm:$0xff]
    %v2280 = vld [vmem:[%s2274 + $0x28] sm:$0xff]
    %v2281 = vld [vmem:[%s2274 + $0x30] sm:$0xff]
    %v2282 = vld [vmem:[%s2274 + $0x38] sm:$0xff]
    %v2283 = vld [vmem:[%s2274 + $0x40] sm:$0xff]
    %v2284 = vld [vmem:[%s2274 + $0x48] sm:$0xff]
    %v2285 = vld [vmem:[%s2274 + $0x50] sm:$0xff]
    %v2286 = vld [vmem:[%s2274 + $0x58] sm:$0xff]
    %v2287 = vld [vmem:[%s2274 + $0x60] sm:$0xff]
    %v2288 = vld [vmem:[%s2274 + $0x68] sm:$0xff]
    %v2289 = vld [vmem:[%s2274 + $0x70] sm:$0xff]
    %v2290 = vld [vmem:[%s2274 + $0x78] sm:$0xff]
    %v2291 = vld [vmem:[%s2274 + $0x80] sm:$0xff]
    %v2292 = vld [vmem:[%s2274 + $0x88] sm:$0xff]
    %v2293 = vld [vmem:[%s2274 + $0x90] sm:$0xff]
    %v2294 = vld [vmem:[%s2274 + $0x98] sm:$0xff]
    %v2295 = vld [vmem:[%s2274 + $0xa0] sm:$0xff]
    %v2296 = vld [vmem:[%s2274 + $0xa8] sm:$0xff]
    %v2297 = vld [vmem:[%s2274 + $0xb0] sm:$0xff]
    %v2298 = vld [vmem:[%s2274 + $0xb8] sm:$0xff]
    %v2299 = vld [vmem:[%s2274 + $0xc0] sm:$0xff]
    %v2300 = vld [vmem:[%s2274 + $0xc8] sm:$0xff]
    %v2301 = vld [vmem:[%s2274 + $0xd0] sm:$0xff]
    %v2302 = vld [vmem:[%s2274 + $0xd8] sm:$0xff]
    %v2303 = vld [vmem:[%s2274 + $0xe0] sm:$0xff]
    %v2304 = vld [vmem:[%s2274 + $0xe8] sm:$0xff]
    %v2305 = vld [vmem:[%s2274 + $0xf0] sm:$0xff]
    %v2306 = vld [vmem:[%s2274 + $0xf8] sm:$0xff]
    %v2307 = vld [vmem:[%s2274 + $0x100] sm:$0xff]
    %v2308 = vld [vmem:[%s2274 + $0x108] sm:$0xff]
    %v2309 = vld [vmem:[%s2274 + $0x110] sm:$0xff]
    %v2310 = vld [vmem:[%s2274 + $0x118] sm:$0xff]
    %v2311 = vld [vmem:[%s2274 + $0x120] sm:$0xff]
    %v2312 = vld [vmem:[%s2274 + $0x128] sm:$0xff]
    %v2313 = vld [vmem:[%s2274 + $0x130] sm:$0xff]
    %v2314 = vld [vmem:[%s2274 + $0x138] sm:$0xff]
    %v2315 = vld [vmem:[%s2274 + $0x140] sm:$0xff]
    %v2316 = vld [vmem:[%s2274 + $0x148] sm:$0xff]
    %v2317 = vld [vmem:[%s2274 + $0x150] sm:$0xff]
    %v2318 = vld [vmem:[%s2274 + $0x158] sm:$0xff]
    %v2319 = vld [vmem:[%s2274 + $0x160] sm:$0xff]
    %v2320 = vld [vmem:[%s2274 + $0x168] sm:$0xff]
    %v2321 = vld [vmem:[%s2274 + $0x170] sm:$0xff]
    %v2322 = vld [vmem:[%s2274 + $0x178] sm:$0xff]
    %v2323 = vld [vmem:[%s2274 + $0x180] sm:$0xff]
    %v2324 = vld [vmem:[%s2274 + $0x188] sm:$0xff]
    %v2325 = vld [vmem:[%s2274 + $0x190] sm:$0xff]
    %v2326 = vld [vmem:[%s2274 + $0x198] sm:$0xff]
    %v2327 = vld [vmem:[%s2274 + $0x1a0] sm:$0xff]
    %v2328 = vld [vmem:[%s2274 + $0x1a8] sm:$0xff]
    %v2329 = vld [vmem:[%s2274 + $0x1b0] sm:$0xff]
    %v2330 = vld [vmem:[%s2274 + $0x1b8] sm:$0xff]
    %v2331 = vld [vmem:[%s2274 + $0x1c0] sm:$0xff]
    %v2332 = vld [vmem:[%s2274 + $0x1c8] sm:$0xff]
    %v2333 = vld [vmem:[%s2274 + $0x1d0] sm:$0xff]
    %v2334 = vld [vmem:[%s2274 + $0x1d8] sm:$0xff]
    %v2335 = vld [vmem:[%s2274 + $0x1e0] sm:$0xff]
    %v2336 = vld [vmem:[%s2274 + $0x1e8] sm:$0xff]
    %v2337 = vld [vmem:[%s2274 + $0x1f0] sm:$0xff]
    %v2338 = vld [vmem:[%s2274 + $0x1f8] sm:$0xff]
    %s2339 = scalar_lea.vmem [#allocation5], 12
    %v2340 = vld [vmem:[%s2339] sm:$0xf]
    %s2341 = scalar_lea.vmem %s3, 24
    %v2342 = vld [vmem:[%s2341] sm:$0xff]
    %s2343 = scalar_lea.vmem %s4, 24
    %v2344 = vld [vmem:[%s2343] sm:$0xff]
    %v2345 = vpack.c.bf16 %v2342, %v2342
    %v2347 = vlaneseq
    %v2348 = vshrl.u32 %v2347, 7
    %v2349 = vsub.s32 0, %v2348
    %v2350 = vrot.slane %v2340, %v2349
    %v2351 = vlaneseq
    %v2352 = vshrl.u32 %v2351, 7
    %v2353 = vsub.s32 1, %v2352
    %v2354 = vrot.slane %v2340, %v2353
    %v2355 = vlaneseq
    %v2356 = vshrl.u32 %v2355, 7
    %v2357 = vsub.s32 2, %v2356
    %v2358 = vrot.slane %v2340, %v2357
    %v2359 = vlaneseq
    %v2360 = vshrl.u32 %v2359, 7
    %v2361 = vsub.s32 3, %v2360
    %v2362 = vrot.slane %v2340, %v2361
    %v2431 = vunpack.c.l.b16 %v2275
    %v2432 = vunpack.c.h.b16 %v2275
    %v2433 = vunpack.c.l.b16 %v2276
    %v2434 = vunpack.c.h.b16 %v2276
    %v2435 = vunpack.c.l.b16 %v2277
    %v2436 = vunpack.c.h.b16 %v2277
    %v2437 = vunpack.c.l.b16 %v2278
    %v2438 = vunpack.c.h.b16 %v2278
    %v2439 = vunpack.c.l.b16 %v2279
    %v2440 = vunpack.c.h.b16 %v2279
    %v2441 = vunpack.c.l.b16 %v2280
    %v2442 = vunpack.c.h.b16 %v2280
    %v2443 = vunpack.c.l.b16 %v2281
    %v2444 = vunpack.c.h.b16 %v2281
    %v2445 = vunpack.c.l.b16 %v2282
    %v2446 = vunpack.c.h.b16 %v2282
    %v2447 = vunpack.c.l.b16 %v2283
    %v2448 = vunpack.c.h.b16 %v2283
    %v2449 = vunpack.c.l.b16 %v2284
    %v2450 = vunpack.c.h.b16 %v2284
    %v2451 = vunpack.c.l.b16 %v2285
    %v2452 = vunpack.c.h.b16 %v2285
    %v2453 = vunpack.c.l.b16 %v2286
    %v2454 = vunpack.c.h.b16 %v2286
    %v2455 = vunpack.c.l.b16 %v2287
    %v2456 = vunpack.c.h.b16 %v2287
    %v2457 = vunpack.c.l.b16 %v2288
    %v2458 = vunpack.c.h.b16 %v2288
    %v2459 = vunpack.c.l.b16 %v2289
    %v2460 = vunpack.c.h.b16 %v2289
    %v2461 = vunpack.c.l.b16 %v2290
    %v2462 = vunpack.c.h.b16 %v2290
    %v2463 = vunpack.c.l.b16 %v2291
    %v2464 = vunpack.c.h.b16 %v2291
    %v2465 = vunpack.c.l.b16 %v2292
    %v2466 = vunpack.c.h.b16 %v2292
    %v2467 = vunpack.c.l.b16 %v2293
    %v2468 = vunpack.c.h.b16 %v2293
    %v2469 = vunpack.c.l.b16 %v2294
    %v2470 = vunpack.c.h.b16 %v2294
    %v2471 = vunpack.c.l.b16 %v2295
    %v2472 = vunpack.c.h.b16 %v2295
    %v2473 = vunpack.c.l.b16 %v2296
    %v2474 = vunpack.c.h.b16 %v2296
    %v2475 = vunpack.c.l.b16 %v2297
    %v2476 = vunpack.c.h.b16 %v2297
    %v2477 = vunpack.c.l.b16 %v2298
    %v2478 = vunpack.c.h.b16 %v2298
    %v2479 = vunpack.c.l.b16 %v2299
    %v2480 = vunpack.c.h.b16 %v2299
    %v2481 = vunpack.c.l.b16 %v2300
    %v2482 = vunpack.c.h.b16 %v2300
    %v2483 = vunpack.c.l.b16 %v2301
    %v2484 = vunpack.c.h.b16 %v2301
    %v2485 = vunpack.c.l.b16 %v2302
    %v2486 = vunpack.c.h.b16 %v2302
    %v2487 = vunpack.c.l.b16 %v2303
    %v2488 = vunpack.c.h.b16 %v2303
    %v2489 = vunpack.c.l.b16 %v2304
    %v2490 = vunpack.c.h.b16 %v2304
    %v2491 = vunpack.c.l.b16 %v2305
    %v2492 = vunpack.c.h.b16 %v2305
    %v2493 = vunpack.c.l.b16 %v2306
    %v2494 = vunpack.c.h.b16 %v2306
    %v2495 = vunpack.c.l.b16 %v2307
    %v2496 = vunpack.c.h.b16 %v2307
    %v2497 = vunpack.c.l.b16 %v2308
    %v2498 = vunpack.c.h.b16 %v2308
    %v2499 = vunpack.c.l.b16 %v2309
    %v2500 = vunpack.c.h.b16 %v2309
    %v2501 = vunpack.c.l.b16 %v2310
    %v2502 = vunpack.c.h.b16 %v2310
    %v2503 = vunpack.c.l.b16 %v2311
    %v2504 = vunpack.c.h.b16 %v2311
    %v2505 = vunpack.c.l.b16 %v2312
    %v2506 = vunpack.c.h.b16 %v2312
    %v2507 = vunpack.c.l.b16 %v2313
    %v2508 = vunpack.c.h.b16 %v2313
    %v2509 = vunpack.c.l.b16 %v2314
    %v2510 = vunpack.c.h.b16 %v2314
    %v2511 = vunpack.c.l.b16 %v2315
    %v2512 = vunpack.c.h.b16 %v2315
    %v2513 = vunpack.c.l.b16 %v2316
    %v2514 = vunpack.c.h.b16 %v2316
    %v2515 = vunpack.c.l.b16 %v2317
    %v2516 = vunpack.c.h.b16 %v2317
    %v2517 = vunpack.c.l.b16 %v2318
    %v2518 = vunpack.c.h.b16 %v2318
    %v2519 = vunpack.c.l.b16 %v2319
    %v2520 = vunpack.c.h.b16 %v2319
    %v2521 = vunpack.c.l.b16 %v2320
    %v2522 = vunpack.c.h.b16 %v2320
    %v2523 = vunpack.c.l.b16 %v2321
    %v2524 = vunpack.c.h.b16 %v2321
    %v2525 = vunpack.c.l.b16 %v2322
    %v2526 = vunpack.c.h.b16 %v2322
    %v2527 = vunpack.c.l.b16 %v2323
    %v2528 = vunpack.c.h.b16 %v2323
    %v2529 = vunpack.c.l.b16 %v2324
    %v2530 = vunpack.c.h.b16 %v2324
    %v2531 = vunpack.c.l.b16 %v2325
    %v2532 = vunpack.c.h.b16 %v2325
    %v2533 = vunpack.c.l.b16 %v2326
    %v2534 = vunpack.c.h.b16 %v2326
    %v2535 = vunpack.c.l.b16 %v2327
    %v2536 = vunpack.c.h.b16 %v2327
    %v2537 = vunpack.c.l.b16 %v2328
    %v2538 = vunpack.c.h.b16 %v2328
    %v2539 = vunpack.c.l.b16 %v2329
    %v2540 = vunpack.c.h.b16 %v2329
    %v2541 = vunpack.c.l.b16 %v2330
    %v2542 = vunpack.c.h.b16 %v2330
    %v2543 = vunpack.c.l.b16 %v2331
    %v2544 = vunpack.c.h.b16 %v2331
    %v2545 = vunpack.c.l.b16 %v2332
    %v2546 = vunpack.c.h.b16 %v2332
    %v2547 = vunpack.c.l.b16 %v2333
    %v2548 = vunpack.c.h.b16 %v2333
    %v2549 = vunpack.c.l.b16 %v2334
    %v2550 = vunpack.c.h.b16 %v2334
    %v2551 = vunpack.c.l.b16 %v2335
    %v2552 = vunpack.c.h.b16 %v2335
    %v2553 = vunpack.c.l.b16 %v2336
    %v2554 = vunpack.c.h.b16 %v2336
    %v2555 = vunpack.c.l.b16 %v2337
    %v2556 = vunpack.c.h.b16 %v2337
    %v2557 = vunpack.c.l.b16 %v2338
    %v2558 = vunpack.c.h.b16 %v2338
    %v2559 = vpack.c.b16 %v2435, %v2431
    %v2560 = vpack.c.b16 %v2436, %v2432
    %v2561 = vpack.c.b16 %v2437, %v2433
    %v2562 = vpack.c.b16 %v2438, %v2434
    %v2563 = vpack.c.b16 %v2443, %v2439
    %v2564 = vpack.c.b16 %v2444, %v2440
    %v2565 = vpack.c.b16 %v2445, %v2441
    %v2566 = vpack.c.b16 %v2446, %v2442
    %v2567 = vpack.c.b16 %v2451, %v2447
    %v2568 = vpack.c.b16 %v2452, %v2448
    %v2569 = vpack.c.b16 %v2453, %v2449
    %v2570 = vpack.c.b16 %v2454, %v2450
    %v2571 = vpack.c.b16 %v2459, %v2455
    %v2572 = vpack.c.b16 %v2460, %v2456
    %v2573 = vpack.c.b16 %v2461, %v2457
    %v2574 = vpack.c.b16 %v2462, %v2458
    %v2575 = vpack.c.b16 %v2467, %v2463
    %v2576 = vpack.c.b16 %v2468, %v2464
    %v2577 = vpack.c.b16 %v2469, %v2465
    %v2578 = vpack.c.b16 %v2470, %v2466
    %v2579 = vpack.c.b16 %v2475, %v2471
    %v2580 = vpack.c.b16 %v2476, %v2472
    %v2581 = vpack.c.b16 %v2477, %v2473
    %v2582 = vpack.c.b16 %v2478, %v2474
    %v2583 = vpack.c.b16 %v2483, %v2479
    %v2584 = vpack.c.b16 %v2484, %v2480
    %v2585 = vpack.c.b16 %v2485, %v2481
    %v2586 = vpack.c.b16 %v2486, %v2482
    %v2587 = vpack.c.b16 %v2491, %v2487
    %v2588 = vpack.c.b16 %v2492, %v2488
    %v2589 = vpack.c.b16 %v2493, %v2489
    %v2590 = vpack.c.b16 %v2494, %v2490
    %v2591 = vpack.c.b16 %v2499, %v2495
    %v2592 = vpack.c.b16 %v2500, %v2496
    %v2593 = vpack.c.b16 %v2501, %v2497
    %v2594 = vpack.c.b16 %v2502, %v2498
    %v2595 = vpack.c.b16 %v2507, %v2503
    %v2596 = vpack.c.b16 %v2508, %v2504
    %v2597 = vpack.c.b16 %v2509, %v2505
    %v2598 = vpack.c.b16 %v2510, %v2506
    %v2599 = vpack.c.b16 %v2515, %v2511
    %v2600 = vpack.c.b16 %v2516, %v2512
    %v2601 = vpack.c.b16 %v2517, %v2513
    %v2602 = vpack.c.b16 %v2518, %v2514
    %v2603 = vpack.c.b16 %v2523, %v2519
    %v2604 = vpack.c.b16 %v2524, %v2520
    %v2605 = vpack.c.b16 %v2525, %v2521
    %v2606 = vpack.c.b16 %v2526, %v2522
    %v2607 = vpack.c.b16 %v2531, %v2527
    %v2608 = vpack.c.b16 %v2532, %v2528
    %v2609 = vpack.c.b16 %v2533, %v2529
    %v2610 = vpack.c.b16 %v2534, %v2530
    %v2611 = vpack.c.b16 %v2539, %v2535
    %v2612 = vpack.c.b16 %v2540, %v2536
    %v2613 = vpack.c.b16 %v2541, %v2537
    %v2614 = vpack.c.b16 %v2542, %v2538
    %v2615 = vpack.c.b16 %v2547, %v2543
    %v2616 = vpack.c.b16 %v2548, %v2544
    %v2617 = vpack.c.b16 %v2549, %v2545
    %v2618 = vpack.c.b16 %v2550, %v2546
    %v2619 = vpack.c.b16 %v2555, %v2551
    %v2620 = vpack.c.b16 %v2556, %v2552
    %v2621 = vpack.c.b16 %v2557, %v2553
    %v2622 = vpack.c.b16 %v2558, %v2554
    %2687 = vmatprep.subr.bf16.mxu0 %v2560
    %2688 = vmatpush1.bf16.msra.mxu0 %v2559
    %2689 = vmatprep.subr.bf16.mxu0 %v2564
    %2690 = vmatpush1.bf16.msra.mxu0 %v2563
    %2691 = vmatprep.subr.bf16.mxu0 %v2568
    %2692 = vmatpush1.bf16.msra.mxu0 %v2567
    %2693 = vmatprep.subr.bf16.mxu0 %v2572
    %2694 = vmatpush1.bf16.msra.mxu0 %v2571
    %2695 = vmatprep.subr.bf16.mxu0 %v2576
    %2696 = vmatpush1.bf16.msra.mxu0 %v2575
    %2697 = vmatprep.subr.bf16.mxu0 %v2580
    %2698 = vmatpush1.bf16.msra.mxu0 %v2579
    %2699 = vmatprep.subr.bf16.mxu0 %v2584
    %2700 = vmatpush1.bf16.msra.mxu0 %v2583
    %2701 = vmatprep.subr.bf16.mxu0 %v2588
    %2702 = vmatpush1.bf16.msra.mxu0 %v2587
    %2703 = vmatprep.subr.bf16.mxu0 %v2592
    %2704 = vmatpush1.bf16.msra.mxu0 %v2591
    %2705 = vmatprep.subr.bf16.mxu0 %v2596
    %2706 = vmatpush1.bf16.msra.mxu0 %v2595
    %2707 = vmatprep.subr.bf16.mxu0 %v2600
    %2708 = vmatpush1.bf16.msra.mxu0 %v2599
    %2709 = vmatprep.subr.bf16.mxu0 %v2604
    %2710 = vmatpush1.bf16.msra.mxu0 %v2603
    %2711 = vmatprep.subr.bf16.mxu0 %v2608
    %2712 = vmatpush1.bf16.msra.mxu0 %v2607
    %2713 = vmatprep.subr.bf16.mxu0 %v2612
    %2714 = vmatpush1.bf16.msra.mxu0 %v2611
    %2715 = vmatprep.subr.bf16.mxu0 %v2616
    %2716 = vmatpush1.bf16.msra.mxu0 %v2615
    %2717 = vmatprep.subr.bf16.mxu0 %v2620
    %2718 = vmatpush1.bf16.msra.mxu0 %v2619
    %2719 = vmatprep.mubr.bf16.mxu0 %v2345
    %2720 = vmatmul.mubr.bf16.gmra.mrb[0].mxu0 %v2059
    %v2721 = vpop.f32.mrb[0].mxu0
    %v2722 = vadd.f32 %v2350, %v2721
    %v2723 = vpop.f32.mrb[0].mxu0
    %v2724 = vadd.f32 %v2354, %v2723
    %v2725 = vpop.f32.mrb[0].mxu0
    %v2726 = vpop.f32.mrb[0].mxu0
    %2727 = vdwg.mxu0
    %2728 = vmatprep.subr.bf16.mxu0 %v2562
    %2729 = vmatpush1.bf16.msra.mxu0 %v2561
    %2730 = vmatprep.subr.bf16.mxu0 %v2566
    %2731 = vmatpush1.bf16.msra.mxu0 %v2565
    %2732 = vmatprep.subr.bf16.mxu0 %v2570
    %2733 = vmatpush1.bf16.msra.mxu0 %v2569
    %2734 = vmatprep.subr.bf16.mxu0 %v2574
    %2735 = vmatpush1.bf16.msra.mxu0 %v2573
    %2736 = vmatprep.subr.bf16.mxu0 %v2578
    %2737 = vmatpush1.bf16.msra.mxu0 %v2577
    %2738 = vmatprep.subr.bf16.mxu0 %v2582
    %2739 = vmatpush1.bf16.msra.mxu0 %v2581
    %2740 = vmatprep.subr.bf16.mxu0 %v2586
    %2741 = vmatpush1.bf16.msra.mxu0 %v2585
    %2742 = vmatprep.subr.bf16.mxu0 %v2590
    %2743 = vmatpush1.bf16.msra.mxu0 %v2589
    %2744 = vmatprep.subr.bf16.mxu0 %v2594
    %2745 = vmatpush1.bf16.msra.mxu0 %v2593
    %2746 = vmatprep.subr.bf16.mxu0 %v2598
    %2747 = vmatpush1.bf16.msra.mxu0 %v2597
    %2748 = vmatprep.subr.bf16.mxu0 %v2602
    %2749 = vmatpush1.bf16.msra.mxu0 %v2601
    %2750 = vmatprep.subr.bf16.mxu0 %v2606
    %2751 = vmatpush1.bf16.msra.mxu0 %v2605
    %2752 = vmatprep.subr.bf16.mxu0 %v2610
    %2753 = vmatpush1.bf16.msra.mxu0 %v2609
    %2754 = vmatprep.subr.bf16.mxu0 %v2614
    %2755 = vmatpush1.bf16.msra.mxu0 %v2613
    %2756 = vmatprep.subr.bf16.mxu0 %v2618
    %2757 = vmatpush1.bf16.msra.mxu0 %v2617
    %2758 = vmatprep.subr.bf16.mxu0 %v2622
    %2759 = vmatpush1.bf16.msra.mxu0 %v2621
    %2760 = vmatprep.mubr.bf16.mxu0 %v2345
    %2761 = vmatmul.mubr.bf16.gmra.mrb[0].mxu0 %v2059
    %v2762 = vpop.f32.mrb[0].mxu0
    %v2763 = vadd.f32 %v2358, %v2762
    %v2764 = vpop.f32.mrb[0].mxu0
    %v2765 = vadd.f32 %v2362, %v2764
    %v2766 = vpop.f32.mrb[0].mxu0
    %v2767 = vpop.f32.mrb[0].mxu0
    %2768 = vdwg.mxu0
    %v2769 = vxor.u32 %v2722, 2147483648
    %v2770 = vxor.u32 %v2724, 2147483648
    %v2771 = vxor.u32 %v2763, 2147483648
    %v2772 = vmul.f32 %v2769, 1.442695
    %v2773 = vpow.pop %v2772
    %v2774 = vmul.f32 %v2770, 1.442695
    %v2775 = vpow.pop %v2774
    %v2776 = vmul.f32 %v2771, 1.442695
    %v2777 = vpow.pop %v2776
    %v2778 = vadd.f32 %v2773, 1.0
    %v2779 = vadd.f32 %v2775, 1.0
    %v2780 = vadd.f32 %v2777, 1.0
    %v2781 = vrcp.pop %v2778
    %v2782 = vmul.f32 1.0, %v2781
    %v2783 = vrcp.pop %v2779
    %v2784 = vmul.f32 1.0, %v2783
    %v2785 = vrcp.pop %v2780
    %v2786 = vmul.f32 1.0, %v2785
    %v2787 = vtanh.pop %v2765
    %v2788 = vmul.f32 %v2784, %v2344
    %v2789 = vmul.f32 %v2782, %v2787
    %v2790 = vadd.f32 %v2788, %v2789
    %v2791 = vtanh.pop %v2790
    %v2792 = vmul.f32 %v2786, %v2791
    %v2793 = vpack.c.bf16 %v2792, %v2792
    %2794 = vmatprep.subr.bf16.mxu0 %v2560
    %2795 = vmatpush1.bf16.msra.mxu0 %v2559
    %2796 = vmatprep.subr.bf16.mxu0 %v2564
    %2797 = vmatpush1.bf16.msra.mxu0 %v2563
    %2798 = vmatprep.subr.bf16.mxu0 %v2568
    %2799 = vmatpush1.bf16.msra.mxu0 %v2567
    %2800 = vmatprep.subr.bf16.mxu0 %v2572
    %2801 = vmatpush1.bf16.msra.mxu0 %v2571
    %2802 = vmatprep.subr.bf16.mxu0 %v2576
    %2803 = vmatpush1.bf16.msra.mxu0 %v2575
    %2804 = vmatprep.subr.bf16.mxu0 %v2580
    %2805 = vmatpush1.bf16.msra.mxu0 %v2579
    %2806 = vmatprep.subr.bf16.mxu0 %v2584
    %2807 = vmatpush1.bf16.msra.mxu0 %v2583
    %2808 = vmatprep.subr.bf16.mxu0 %v2588
    %2809 = vmatpush1.bf16.msra.mxu0 %v2587
    %2810 = vmatprep.subr.bf16.mxu0 %v2592
    %2811 = vmatpush1.bf16.msra.mxu0 %v2591
    %2812 = vmatprep.subr.bf16.mxu0 %v2596
    %2813 = vmatpush1.bf16.msra.mxu0 %v2595
    %2814 = vmatprep.subr.bf16.mxu0 %v2600
    %2815 = vmatpush1.bf16.msra.mxu0 %v2599
    %2816 = vmatprep.subr.bf16.mxu0 %v2604
    %2817 = vmatpush1.bf16.msra.mxu0 %v2603
    %2818 = vmatprep.subr.bf16.mxu0 %v2608
    %2819 = vmatpush1.bf16.msra.mxu0 %v2607
    %2820 = vmatprep.subr.bf16.mxu0 %v2612
    %2821 = vmatpush1.bf16.msra.mxu0 %v2611
    %2822 = vmatprep.subr.bf16.mxu0 %v2616
    %2823 = vmatpush1.bf16.msra.mxu0 %v2615
    %2824 = vmatprep.subr.bf16.mxu0 %v2620
    %2825 = vmatpush1.bf16.msra.mxu0 %v2619
    %2826 = vmatprep.mubr.bf16.mxu0 %v2793
    %2827 = vmatmul.mubr.bf16.gmra.mrb[0].mxu0 %v2167
    %v2828 = vpop.f32.mrb[0].mxu0
    %v2829 = vadd.f32 %v2350, %v2828
    %v2830 = vpop.f32.mrb[0].mxu0
    %v2831 = vadd.f32 %v2354, %v2830
    %v2832 = vpop.f32.mrb[0].mxu0
    %v2833 = vpop.f32.mrb[0].mxu0
    %2834 = vdwg.mxu0
    %2835 = vmatprep.subr.bf16.mxu0 %v2562
    %2836 = vmatpush1.bf16.msra.mxu0 %v2561
    %2837 = vmatprep.subr.bf16.mxu0 %v2566
    %2838 = vmatpush1.bf16.msra.mxu0 %v2565
    %2839 = vmatprep.subr.bf16.mxu0 %v2570
    %2840 = vmatpush1.bf16.msra.mxu0 %v2569
    %2841 = vmatprep.subr.bf16.mxu0 %v2574
    %2842 = vmatpush1.bf16.msra.mxu0 %v2573
    %2843 = vmatprep.subr.bf16.mxu0 %v2578
    %2844 = vmatpush1.bf16.msra.mxu0 %v2577
    %2845 = vmatprep.subr.bf16.mxu0 %v2582
    %2846 = vmatpush1.bf16.msra.mxu0 %v2581
    %2847 = vmatprep.subr.bf16.mxu0 %v2586
    %2848 = vmatpush1.bf16.msra.mxu0 %v2585
    %2849 = vmatprep.subr.bf16.mxu0 %v2590
    %2850 = vmatpush1.bf16.msra.mxu0 %v2589
    %2851 = vmatprep.subr.bf16.mxu0 %v2594
    %2852 = vmatpush1.bf16.msra.mxu0 %v2593
    %2853 = vmatprep.subr.bf16.mxu0 %v2598
    %2854 = vmatpush1.bf16.msra.mxu0 %v2597
    %2855 = vmatprep.subr.bf16.mxu0 %v2602
    %2856 = vmatpush1.bf16.msra.mxu0 %v2601
    %2857 = vmatprep.subr.bf16.mxu0 %v2606
    %2858 = vmatpush1.bf16.msra.mxu0 %v2605
    %2859 = vmatprep.subr.bf16.mxu0 %v2610
    %2860 = vmatpush1.bf16.msra.mxu0 %v2609
    %2861 = vmatprep.subr.bf16.mxu0 %v2614
    %2862 = vmatpush1.bf16.msra.mxu0 %v2613
    %2863 = vmatprep.subr.bf16.mxu0 %v2618
    %2864 = vmatpush1.bf16.msra.mxu0 %v2617
    %2865 = vmatprep.subr.bf16.mxu0 %v2622
    %2866 = vmatpush1.bf16.msra.mxu0 %v2621
    %2867 = vmatprep.mubr.bf16.mxu0 %v2793
    %2868 = vmatmul.mubr.bf16.gmra.mrb[0].mxu0 %v2167
    %v2869 = vpop.f32.mrb[0].mxu0
    %v2870 = vadd.f32 %v2358, %v2869
    %v2871 = vpop.f32.mrb[0].mxu0
    %v2872 = vadd.f32 %v2362, %v2871
    %v2873 = vpop.f32.mrb[0].mxu0
    %v2874 = vpop.f32.mrb[0].mxu0
    %2875 = vdwg.mxu0
    %v2876 = vxor.u32 %v2829, 2147483648
    %v2877 = vxor.u32 %v2831, 2147483648
    %v2878 = vxor.u32 %v2870, 2147483648
    %v2879 = vmul.f32 %v2876, 1.442695
    %v2880 = vpow.pop %v2879
    %v2881 = vmul.f32 %v2877, 1.442695
    %v2882 = vpow.pop %v2881
    %v2883 = vmul.f32 %v2878, 1.442695
    %v2884 = vpow.pop %v2883
    %v2885 = vadd.f32 %v2880, 1.0
    %v2886 = vadd.f32 %v2882, 1.0
    %v2887 = vadd.f32 %v2884, 1.0
    %v2888 = vrcp.pop %v2885
    %v2889 = vmul.f32 1.0, %v2888
    %v2890 = vrcp.pop %v2886
    %v2891 = vmul.f32 1.0, %v2890
    %v2892 = vrcp.pop %v2887
    %v2893 = vmul.f32 1.0, %v2892
    %v2894 = vtanh.pop %v2872
    %v2895 = vmul.f32 %v2891, %v2790
    %v2896 = vmul.f32 %v2889, %v2894
    %v2897 = vadd.f32 %v2895, %v2896
    %v2898 = vtanh.pop %v2897
    %v2899 = vmul.f32 %v2893, %v2898
    %v2900 = vpack.c.bf16 %v2273, %v2273
    %v2901 = vpack.c.bf16 %v2899, %v2899
    %2902 = vmatprep.subr.bf16.mxu0 %v2560
    %2903 = vmatpush1.bf16.msra.mxu0 %v2559
    %2904 = vmatprep.subr.bf16.mxu0 %v2564
    %2905 = vmatpush1.bf16.msra.mxu0 %v2563
    %2906 = vmatprep.subr.bf16.mxu0 %v2568
    %2907 = vmatpush1.bf16.msra.mxu0 %v2567
    %2908 = vmatprep.subr.bf16.mxu0 %v2572
    %2909 = vmatpush1.bf16.msra.mxu0 %v2571
    %2910 = vmatprep.subr.bf16.mxu0 %v2576
    %2911 = vmatpush1.bf16.msra.mxu0 %v2575
    %2912 = vmatprep.subr.bf16.mxu0 %v2580
    %2913 = vmatpush1.bf16.msra.mxu0 %v2579
    %2914 = vmatprep.subr.bf16.mxu0 %v2584
    %2915 = vmatpush1.bf16.msra.mxu0 %v2583
    %2916 = vmatprep.subr.bf16.mxu0 %v2588
    %2917 = vmatpush1.bf16.msra.mxu0 %v2587
    %2918 = vmatprep.subr.bf16.mxu0 %v2592
    %2919 = vmatpush1.bf16.msra.mxu0 %v2591
    %2920 = vmatprep.subr.bf16.mxu0 %v2596
    %2921 = vmatpush1.bf16.msra.mxu0 %v2595
    %2922 = vmatprep.subr.bf16.mxu0 %v2600
    %2923 = vmatpush1.bf16.msra.mxu0 %v2599
    %2924 = vmatprep.subr.bf16.mxu0 %v2604
    %2925 = vmatpush1.bf16.msra.mxu0 %v2603
    %2926 = vmatprep.subr.bf16.mxu0 %v2608
    %2927 = vmatpush1.bf16.msra.mxu0 %v2607
    %2928 = vmatprep.subr.bf16.mxu0 %v2612
    %2929 = vmatpush1.bf16.msra.mxu0 %v2611
    %2930 = vmatprep.subr.bf16.mxu0 %v2616
    %2931 = vmatpush1.bf16.msra.mxu0 %v2615
    %2932 = vmatprep.subr.bf16.mxu0 %v2620
    %2933 = vmatpush1.bf16.msra.mxu0 %v2619
    %2934 = vmatprep.mubr.bf16.mxu0 %v2901
    %2935 = vmatmul.mubr.bf16.gmra.mrb[0].mxu0 %v2900
    %v2936 = vpop.f32.mrb[0].mxu0
    %v2937 = vadd.f32 %v2350, %v2936
    %v2938 = vpop.f32.mrb[0].mxu0
    %v2939 = vadd.f32 %v2354, %v2938
    %v2940 = vpop.f32.mrb[0].mxu0
    %v2941 = vpop.f32.mrb[0].mxu0
    %2942 = vdwg.mxu0
    %2943 = vmatprep.subr.bf16.mxu0 %v2562
    %2944 = vmatpush1.bf16.msra.mxu0 %v2561
    %2945 = vmatprep.subr.bf16.mxu0 %v2566
    %2946 = vmatpush1.bf16.msra.mxu0 %v2565
    %2947 = vmatprep.subr.bf16.mxu0 %v2570
    %2948 = vmatpush1.bf16.msra.mxu0 %v2569
    %2949 = vmatprep.subr.bf16.mxu0 %v2574
    %2950 = vmatpush1.bf16.msra.mxu0 %v2573
    %2951 = vmatprep.subr.bf16.mxu0 %v2578
    %2952 = vmatpush1.bf16.msra.mxu0 %v2577
    %2953 = vmatprep.subr.bf16.mxu0 %v2582
    %2954 = vmatpush1.bf16.msra.mxu0 %v2581
    %2955 = vmatprep.subr.bf16.mxu0 %v2586
    %2956 = vmatpush1.bf16.msra.mxu0 %v2585
    %2957 = vmatprep.subr.bf16.mxu0 %v2590
    %2958 = vmatpush1.bf16.msra.mxu0 %v2589
    %2959 = vmatprep.subr.bf16.mxu0 %v2594
    %2960 = vmatpush1.bf16.msra.mxu0 %v2593
    %2961 = vmatprep.subr.bf16.mxu0 %v2598
    %2962 = vmatpush1.bf16.msra.mxu0 %v2597
    %2963 = vmatprep.subr.bf16.mxu0 %v2602
    %2964 = vmatpush1.bf16.msra.mxu0 %v2601
    %2965 = vmatprep.subr.bf16.mxu0 %v2606
    %2966 = vmatpush1.bf16.msra.mxu0 %v2605
    %2967 = vmatprep.subr.bf16.mxu0 %v2610
    %2968 = vmatpush1.bf16.msra.mxu0 %v2609
    %2969 = vmatprep.subr.bf16.mxu0 %v2614
    %2970 = vmatpush1.bf16.msra.mxu0 %v2613
    %2971 = vmatprep.subr.bf16.mxu0 %v2618
    %2972 = vmatpush1.bf16.msra.mxu0 %v2617
    %2973 = vmatprep.subr.bf16.mxu0 %v2622
    %2974 = vmatpush1.bf16.msra.mxu0 %v2621
    %2975 = vmatprep.mubr.bf16.mxu0 %v2901
    %2976 = vmatmul.mubr.bf16.gmra.mrb[0].mxu0 %v2900
    %v2977 = vpop.f32.mrb[0].mxu0
    %v2978 = vadd.f32 %v2358, %v2977
    %v2979 = vpop.f32.mrb[0].mxu0
    %v2980 = vadd.f32 %v2362, %v2979
    %v2981 = vpop.f32.mrb[0].mxu0
    %v2982 = vpop.f32.mrb[0].mxu0
    %2983 = vdwg.mxu0
    %v2984 = vxor.u32 %v2937, 2147483648
    %v2985 = vxor.u32 %v2939, 2147483648
    %v2986 = vxor.u32 %v2978, 2147483648
    %v2987 = vmul.f32 %v2984, 1.442695
    %v2988 = vpow.pop %v2987
    %v2989 = vmul.f32 %v2985, 1.442695
    %v2990 = vpow.pop %v2989
    %v2991 = vmul.f32 %v2986, 1.442695
    %v2992 = vpow.pop %v2991
    %v2993 = vadd.f32 %v2988, 1.0
    %v2994 = vadd.f32 %v2990, 1.0
    %v2995 = vadd.f32 %v2992, 1.0
    %v2996 = vrcp.pop %v2993
    %v2997 = vmul.f32 1.0, %v2996
    %v2998 = vrcp.pop %v2994
    %v2999 = vmul.f32 1.0, %v2998
    %v3000 = vrcp.pop %v2995
    %v3001 = vmul.f32 1.0, %v3000
    %v3002 = vtanh.pop %v2980
    %v3003 = vmul.f32 %v2999, %v2897
    %v3004 = vmul.f32 %v2997, %v3002
    %v3005 = vadd.f32 %v3003, %v3004
    %v3006 = vtanh.pop %v3005
    %v3007 = vmul.f32 %v3001, %v3006
    %s3008 = scalar_lea.vmem [#allocation3], 2048
    %v3009 = vld [vmem:[%s3008] sm:$0xff]
    %v3010 = vld [vmem:[%s3008 + $0x8] sm:$0xff]
    %v3011 = vld [vmem:[%s3008 + $0x10] sm:$0xff]
    %v3012 = vld [vmem:[%s3008 + $0x18] sm:$0xff]
    %v3013 = vld [vmem:[%s3008 + $0x20] sm:$0xff]
    %v3014 = vld [vmem:[%s3008 + $0x28] sm:$0xff]
    %v3015 = vld [vmem:[%s3008 + $0x30] sm:$0xff]
    %v3016 = vld [vmem:[%s3008 + $0x38] sm:$0xff]
    %v3017 = vld [vmem:[%s3008 + $0x40] sm:$0xff]
    %v3018 = vld [vmem:[%s3008 + $0x48] sm:$0xff]
    %v3019 = vld [vmem:[%s3008 + $0x50] sm:$0xff]
    %v3020 = vld [vmem:[%s3008 + $0x58] sm:$0xff]
    %v3021 = vld [vmem:[%s3008 + $0x60] sm:$0xff]
    %v3022 = vld [vmem:[%s3008 + $0x68] sm:$0xff]
    %v3023 = vld [vmem:[%s3008 + $0x70] sm:$0xff]
    %v3024 = vld [vmem:[%s3008 + $0x78] sm:$0xff]
    %v3025 = vld [vmem:[%s3008 + $0x80] sm:$0xff]
    %v3026 = vld [vmem:[%s3008 + $0x88] sm:$0xff]
    %v3027 = vld [vmem:[%s3008 + $0x90] sm:$0xff]
    %v3028 = vld [vmem:[%s3008 + $0x98] sm:$0xff]
    %v3029 = vld [vmem:[%s3008 + $0xa0] sm:$0xff]
    %v3030 = vld [vmem:[%s3008 + $0xa8] sm:$0xff]
    %v3031 = vld [vmem:[%s3008 + $0xb0] sm:$0xff]
    %v3032 = vld [vmem:[%s3008 + $0xb8] sm:$0xff]
    %v3033 = vld [vmem:[%s3008 + $0xc0] sm:$0xff]
    %v3034 = vld [vmem:[%s3008 + $0xc8] sm:$0xff]
    %v3035 = vld [vmem:[%s3008 + $0xd0] sm:$0xff]
    %v3036 = vld [vmem:[%s3008 + $0xd8] sm:$0xff]
    %v3037 = vld [vmem:[%s3008 + $0xe0] sm:$0xff]
    %v3038 = vld [vmem:[%s3008 + $0xe8] sm:$0xff]
    %v3039 = vld [vmem:[%s3008 + $0xf0] sm:$0xff]
    %v3040 = vld [vmem:[%s3008 + $0xf8] sm:$0xff]
    %v3041 = vld [vmem:[%s3008 + $0x100] sm:$0xff]
    %v3042 = vld [vmem:[%s3008 + $0x108] sm:$0xff]
    %v3043 = vld [vmem:[%s3008 + $0x110] sm:$0xff]
    %v3044 = vld [vmem:[%s3008 + $0x118] sm:$0xff]
    %v3045 = vld [vmem:[%s3008 + $0x120] sm:$0xff]
    %v3046 = vld [vmem:[%s3008 + $0x128] sm:$0xff]
    %v3047 = vld [vmem:[%s3008 + $0x130] sm:$0xff]
    %v3048 = vld [vmem:[%s3008 + $0x138] sm:$0xff]
    %v3049 = vld [vmem:[%s3008 + $0x140] sm:$0xff]
    %v3050 = vld [vmem:[%s3008 + $0x148] sm:$0xff]
    %v3051 = vld [vmem:[%s3008 + $0x150] sm:$0xff]
    %v3052 = vld [vmem:[%s3008 + $0x158] sm:$0xff]
    %v3053 = vld [vmem:[%s3008 + $0x160] sm:$0xff]
    %v3054 = vld [vmem:[%s3008 + $0x168] sm:$0xff]
    %v3055 = vld [vmem:[%s3008 + $0x170] sm:$0xff]
    %v3056 = vld [vmem:[%s3008 + $0x178] sm:$0xff]
    %v3057 = vld [vmem:[%s3008 + $0x180] sm:$0xff]
    %v3058 = vld [vmem:[%s3008 + $0x188] sm:$0xff]
    %v3059 = vld [vmem:[%s3008 + $0x190] sm:$0xff]
    %v3060 = vld [vmem:[%s3008 + $0x198] sm:$0xff]
    %v3061 = vld [vmem:[%s3008 + $0x1a0] sm:$0xff]
    %v3062 = vld [vmem:[%s3008 + $0x1a8] sm:$0xff]
    %v3063 = vld [vmem:[%s3008 + $0x1b0] sm:$0xff]
    %v3064 = vld [vmem:[%s3008 + $0x1b8] sm:$0xff]
    %v3065 = vld [vmem:[%s3008 + $0x1c0] sm:$0xff]
    %v3066 = vld [vmem:[%s3008 + $0x1c8] sm:$0xff]
    %v3067 = vld [vmem:[%s3008 + $0x1d0] sm:$0xff]
    %v3068 = vld [vmem:[%s3008 + $0x1d8] sm:$0xff]
    %v3069 = vld [vmem:[%s3008 + $0x1e0] sm:$0xff]
    %v3070 = vld [vmem:[%s3008 + $0x1e8] sm:$0xff]
    %v3071 = vld [vmem:[%s3008 + $0x1f0] sm:$0xff]
    %v3072 = vld [vmem:[%s3008 + $0x1f8] sm:$0xff]
    %s3073 = scalar_lea.vmem [#allocation5], 16
    %v3074 = vld [vmem:[%s3073] sm:$0xf]
    %s3075 = scalar_lea.vmem %s3, 32
    %v3076 = vld [vmem:[%s3075] sm:$0xff]
    %s3077 = scalar_lea.vmem %s4, 32
    %v3078 = vld [vmem:[%s3077] sm:$0xff]
    %v3079 = vpack.c.bf16 %v3076, %v3076
    %v3081 = vlaneseq
    %v3082 = vshrl.u32 %v3081, 7
    %v3083 = vsub.s32 0, %v3082
    %v3084 = vrot.slane %v3074, %v3083
    %v3085 = vlaneseq
    %v3086 = vshrl.u32 %v3085, 7
    %v3087 = vsub.s32 1, %v3086
    %v3088 = vrot.slane %v3074, %v3087
    %v3089 = vlaneseq
    %v3090 = vshrl.u32 %v3089, 7
    %v3091 = vsub.s32 2, %v3090
    %v3092 = vrot.slane %v3074, %v3091
    %v3093 = vlaneseq
    %v3094 = vshrl.u32 %v3093, 7
    %v3095 = vsub.s32 3, %v3094
    %v3096 = vrot.slane %v3074, %v3095
    %v3165 = vunpack.c.l.b16 %v3009
    %v3166 = vunpack.c.h.b16 %v3009
    %v3167 = vunpack.c.l.b16 %v3010
    %v3168 = vunpack.c.h.b16 %v3010
    %v3169 = vunpack.c.l.b16 %v3011
    %v3170 = vunpack.c.h.b16 %v3011
    %v3171 = vunpack.c.l.b16 %v3012
    %v3172 = vunpack.c.h.b16 %v3012
    %v3173 = vunpack.c.l.b16 %v3013
    %v3174 = vunpack.c.h.b16 %v3013
    %v3175 = vunpack.c.l.b16 %v3014
    %v3176 = vunpack.c.h.b16 %v3014
    %v3177 = vunpack.c.l.b16 %v3015
    %v3178 = vunpack.c.h.b16 %v3015
    %v3179 = vunpack.c.l.b16 %v3016
    %v3180 = vunpack.c.h.b16 %v3016
    %v3181 = vunpack.c.l.b16 %v3017
    %v3182 = vunpack.c.h.b16 %v3017
    %v3183 = vunpack.c.l.b16 %v3018
    %v3184 = vunpack.c.h.b16 %v3018
    %v3185 = vunpack.c.l.b16 %v3019
    %v3186 = vunpack.c.h.b16 %v3019
    %v3187 = vunpack.c.l.b16 %v3020
    %v3188 = vunpack.c.h.b16 %v3020
    %v3189 = vunpack.c.l.b16 %v3021
    %v3190 = vunpack.c.h.b16 %v3021
    %v3191 = vunpack.c.l.b16 %v3022
    %v3192 = vunpack.c.h.b16 %v3022
    %v3193 = vunpack.c.l.b16 %v3023
    %v3194 = vunpack.c.h.b16 %v3023
    %v3195 = vunpack.c.l.b16 %v3024
    %v3196 = vunpack.c.h.b16 %v3024
    %v3197 = vunpack.c.l.b16 %v3025
    %v3198 = vunpack.c.h.b16 %v3025
    %v3199 = vunpack.c.l.b16 %v3026
    %v3200 = vunpack.c.h.b16 %v3026
    %v3201 = vunpack.c.l.b16 %v3027
    %v3202 = vunpack.c.h.b16 %v3027
    %v3203 = vunpack.c.l.b16 %v3028
    %v3204 = vunpack.c.h.b16 %v3028
    %v3205 = vunpack.c.l.b16 %v3029
    %v3206 = vunpack.c.h.b16 %v3029
    %v3207 = vunpack.c.l.b16 %v3030
    %v3208 = vunpack.c.h.b16 %v3030
    %v3209 = vunpack.c.l.b16 %v3031
    %v3210 = vunpack.c.h.b16 %v3031
    %v3211 = vunpack.c.l.b16 %v3032
    %v3212 = vunpack.c.h.b16 %v3032
    %v3213 = vunpack.c.l.b16 %v3033
    %v3214 = vunpack.c.h.b16 %v3033
    %v3215 = vunpack.c.l.b16 %v3034
    %v3216 = vunpack.c.h.b16 %v3034
    %v3217 = vunpack.c.l.b16 %v3035
    %v3218 = vunpack.c.h.b16 %v3035
    %v3219 = vunpack.c.l.b16 %v3036
    %v3220 = vunpack.c.h.b16 %v3036
    %v3221 = vunpack.c.l.b16 %v3037
    %v3222 = vunpack.c.h.b16 %v3037
    %v3223 = vunpack.c.l.b16 %v3038
    %v3224 = vunpack.c.h.b16 %v3038
    %v3225 = vunpack.c.l.b16 %v3039
    %v3226 = vunpack.c.h.b16 %v3039
    %v3227 = vunpack.c.l.b16 %v3040
    %v3228 = vunpack.c.h.b16 %v3040
    %v3229 = vunpack.c.l.b16 %v3041
    %v3230 = vunpack.c.h.b16 %v3041
    %v3231 = vunpack.c.l.b16 %v3042
    %v3232 = vunpack.c.h.b16 %v3042
    %v3233 = vunpack.c.l.b16 %v3043
    %v3234 = vunpack.c.h.b16 %v3043
    %v3235 = vunpack.c.l.b16 %v3044
    %v3236 = vunpack.c.h.b16 %v3044
    %v3237 = vunpack.c.l.b16 %v3045
    %v3238 = vunpack.c.h.b16 %v3045
    %v3239 = vunpack.c.l.b16 %v3046
    %v3240 = vunpack.c.h.b16 %v3046
    %v3241 = vunpack.c.l.b16 %v3047
    %v3242 = vunpack.c.h.b16 %v3047
    %v3243 = vunpack.c.l.b16 %v3048
    %v3244 = vunpack.c.h.b16 %v3048
    %v3245 = vunpack.c.l.b16 %v3049
    %v3246 = vunpack.c.h.b16 %v3049
    %v3247 = vunpack.c.l.b16 %v3050
    %v3248 = vunpack.c.h.b16 %v3050
    %v3249 = vunpack.c.l.b16 %v3051
    %v3250 = vunpack.c.h.b16 %v3051
    %v3251 = vunpack.c.l.b16 %v3052
    %v3252 = vunpack.c.h.b16 %v3052
    %v3253 = vunpack.c.l.b16 %v3053
    %v3254 = vunpack.c.h.b16 %v3053
    %v3255 = vunpack.c.l.b16 %v3054
    %v3256 = vunpack.c.h.b16 %v3054
    %v3257 = vunpack.c.l.b16 %v3055
    %v3258 = vunpack.c.h.b16 %v3055
    %v3259 = vunpack.c.l.b16 %v3056
    %v3260 = vunpack.c.h.b16 %v3056
    %v3261 = vunpack.c.l.b16 %v3057
    %v3262 = vunpack.c.h.b16 %v3057
    %v3263 = vunpack.c.l.b16 %v3058
    %v3264 = vunpack.c.h.b16 %v3058
    %v3265 = vunpack.c.l.b16 %v3059
    %v3266 = vunpack.c.h.b16 %v3059
    %v3267 = vunpack.c.l.b16 %v3060
    %v3268 = vunpack.c.h.b16 %v3060
    %v3269 = vunpack.c.l.b16 %v3061
    %v3270 = vunpack.c.h.b16 %v3061
    %v3271 = vunpack.c.l.b16 %v3062
    %v3272 = vunpack.c.h.b16 %v3062
    %v3273 = vunpack.c.l.b16 %v3063
    %v3274 = vunpack.c.h.b16 %v3063
    %v3275 = vunpack.c.l.b16 %v3064
    %v3276 = vunpack.c.h.b16 %v3064
    %v3277 = vunpack.c.l.b16 %v3065
    %v3278 = vunpack.c.h.b16 %v3065
    %v3279 = vunpack.c.l.b16 %v3066
    %v3280 = vunpack.c.h.b16 %v3066
    %v3281 = vunpack.c.l.b16 %v3067
    %v3282 = vunpack.c.h.b16 %v3067
    %v3283 = vunpack.c.l.b16 %v3068
    %v3284 = vunpack.c.h.b16 %v3068
    %v3285 = vunpack.c.l.b16 %v3069
    %v3286 = vunpack.c.h.b16 %v3069
    %v3287 = vunpack.c.l.b16 %v3070
    %v3288 = vunpack.c.h.b16 %v3070
    %v3289 = vunpack.c.l.b16 %v3071
    %v3290 = vunpack.c.h.b16 %v3071
    %v3291 = vunpack.c.l.b16 %v3072
    %v3292 = vunpack.c.h.b16 %v3072
    %v3293 = vpack.c.b16 %v3169, %v3165
    %v3294 = vpack.c.b16 %v3170, %v3166
    %v3295 = vpack.c.b16 %v3171, %v3167
    %v3296 = vpack.c.b16 %v3172, %v3168
    %v3297 = vpack.c.b16 %v3177, %v3173
    %v3298 = vpack.c.b16 %v3178, %v3174
    %v3299 = vpack.c.b16 %v3179, %v3175
    %v3300 = vpack.c.b16 %v3180, %v3176
    %v3301 = vpack.c.b16 %v3185, %v3181
    %v3302 = vpack.c.b16 %v3186, %v3182
    %v3303 = vpack.c.b16 %v3187, %v3183
    %v3304 = vpack.c.b16 %v3188, %v3184
    %v3305 = vpack.c.b16 %v3193, %v3189
    %v3306 = vpack.c.b16 %v3194, %v3190
    %v3307 = vpack.c.b16 %v3195, %v3191
    %v3308 = vpack.c.b16 %v3196, %v3192
    %v3309 = vpack.c.b16 %v3201, %v3197
    %v3310 = vpack.c.b16 %v3202, %v3198
    %v3311 = vpack.c.b16 %v3203, %v3199
    %v3312 = vpack.c.b16 %v3204, %v3200
    %v3313 = vpack.c.b16 %v3209, %v3205
    %v3314 = vpack.c.b16 %v3210, %v3206
    %v3315 = vpack.c.b16 %v3211, %v3207
    %v3316 = vpack.c.b16 %v3212, %v3208
    %v3317 = vpack.c.b16 %v3217, %v3213
    %v3318 = vpack.c.b16 %v3218, %v3214
    %v3319 = vpack.c.b16 %v3219, %v3215
    %v3320 = vpack.c.b16 %v3220, %v3216
    %v3321 = vpack.c.b16 %v3225, %v3221
    %v3322 = vpack.c.b16 %v3226, %v3222
    %v3323 = vpack.c.b16 %v3227, %v3223
    %v3324 = vpack.c.b16 %v3228, %v3224
    %v3325 = vpack.c.b16 %v3233, %v3229
    %v3326 = vpack.c.b16 %v3234, %v3230
    %v3327 = vpack.c.b16 %v3235, %v3231
    %v3328 = vpack.c.b16 %v3236, %v3232
    %v3329 = vpack.c.b16 %v3241, %v3237
    %v3330 = vpack.c.b16 %v3242, %v3238
    %v3331 = vpack.c.b16 %v3243, %v3239
    %v3332 = vpack.c.b16 %v3244, %v3240
    %v3333 = vpack.c.b16 %v3249, %v3245
    %v3334 = vpack.c.b16 %v3250, %v3246
    %v3335 = vpack.c.b16 %v3251, %v3247
    %v3336 = vpack.c.b16 %v3252, %v3248
    %v3337 = vpack.c.b16 %v3257, %v3253
    %v3338 = vpack.c.b16 %v3258, %v3254
    %v3339 = vpack.c.b16 %v3259, %v3255
    %v3340 = vpack.c.b16 %v3260, %v3256
    %v3341 = vpack.c.b16 %v3265, %v3261
    %v3342 = vpack.c.b16 %v3266, %v3262
    %v3343 = vpack.c.b16 %v3267, %v3263
    %v3344 = vpack.c.b16 %v3268, %v3264
    %v3345 = vpack.c.b16 %v3273, %v3269
    %v3346 = vpack.c.b16 %v3274, %v3270
    %v3347 = vpack.c.b16 %v3275, %v3271
    %v3348 = vpack.c.b16 %v3276, %v3272
    %v3349 = vpack.c.b16 %v3281, %v3277
    %v3350 = vpack.c.b16 %v3282, %v3278
    %v3351 = vpack.c.b16 %v3283, %v3279
    %v3352 = vpack.c.b16 %v3284, %v3280
    %v3353 = vpack.c.b16 %v3289, %v3285
    %v3354 = vpack.c.b16 %v3290, %v3286
    %v3355 = vpack.c.b16 %v3291, %v3287
    %v3356 = vpack.c.b16 %v3292, %v3288
    %3421 = vmatprep.subr.bf16.mxu0 %v3294
    %3422 = vmatpush1.bf16.msra.mxu0 %v3293
    %3423 = vmatprep.subr.bf16.mxu0 %v3298
    %3424 = vmatpush1.bf16.msra.mxu0 %v3297
    %3425 = vmatprep.subr.bf16.mxu0 %v3302
    %3426 = vmatpush1.bf16.msra.mxu0 %v3301
    %3427 = vmatprep.subr.bf16.mxu0 %v3306
    %3428 = vmatpush1.bf16.msra.mxu0 %v3305
    %3429 = vmatprep.subr.bf16.mxu0 %v3310
    %3430 = vmatpush1.bf16.msra.mxu0 %v3309
    %3431 = vmatprep.subr.bf16.mxu0 %v3314
    %3432 = vmatpush1.bf16.msra.mxu0 %v3313
    %3433 = vmatprep.subr.bf16.mxu0 %v3318
    %3434 = vmatpush1.bf16.msra.mxu0 %v3317
    %3435 = vmatprep.subr.bf16.mxu0 %v3322
    %3436 = vmatpush1.bf16.msra.mxu0 %v3321
    %3437 = vmatprep.subr.bf16.mxu0 %v3326
    %3438 = vmatpush1.bf16.msra.mxu0 %v3325
    %3439 = vmatprep.subr.bf16.mxu0 %v3330
    %3440 = vmatpush1.bf16.msra.mxu0 %v3329
    %3441 = vmatprep.subr.bf16.mxu0 %v3334
    %3442 = vmatpush1.bf16.msra.mxu0 %v3333
    %3443 = vmatprep.subr.bf16.mxu0 %v3338
    %3444 = vmatpush1.bf16.msra.mxu0 %v3337
    %3445 = vmatprep.subr.bf16.mxu0 %v3342
    %3446 = vmatpush1.bf16.msra.mxu0 %v3341
    %3447 = vmatprep.subr.bf16.mxu0 %v3346
    %3448 = vmatpush1.bf16.msra.mxu0 %v3345
    %3449 = vmatprep.subr.bf16.mxu0 %v3350
    %3450 = vmatpush1.bf16.msra.mxu0 %v3349
    %3451 = vmatprep.subr.bf16.mxu0 %v3354
    %3452 = vmatpush1.bf16.msra.mxu0 %v3353
    %3453 = vmatprep.mubr.bf16.mxu0 %v3079
    %3454 = vmatmul.mubr.bf16.gmra.mrb[0].mxu0 %v2793
    %v3455 = vpop.f32.mrb[0].mxu0
    %v3456 = vadd.f32 %v3084, %v3455
    %v3457 = vpop.f32.mrb[0].mxu0
    %v3458 = vadd.f32 %v3088, %v3457
    %v3459 = vpop.f32.mrb[0].mxu0
    %v3460 = vpop.f32.mrb[0].mxu0
    %3461 = vdwg.mxu0
    %3462 = vmatprep.subr.bf16.mxu0 %v3296
    %3463 = vmatpush1.bf16.msra.mxu0 %v3295
    %3464 = vmatprep.subr.bf16.mxu0 %v3300
    %3465 = vmatpush1.bf16.msra.mxu0 %v3299
    %3466 = vmatprep.subr.bf16.mxu0 %v3304
    %3467 = vmatpush1.bf16.msra.mxu0 %v3303
    %3468 = vmatprep.subr.bf16.mxu0 %v3308
    %3469 = vmatpush1.bf16.msra.mxu0 %v3307
    %3470 = vmatprep.subr.bf16.mxu0 %v3312
    %3471 = vmatpush1.bf16.msra.mxu0 %v3311
    %3472 = vmatprep.subr.bf16.mxu0 %v3316
    %3473 = vmatpush1.bf16.msra.mxu0 %v3315
    %3474 = vmatprep.subr.bf16.mxu0 %v3320
    %3475 = vmatpush1.bf16.msra.mxu0 %v3319
    %3476 = vmatprep.subr.bf16.mxu0 %v3324
    %3477 = vmatpush1.bf16.msra.mxu0 %v3323
    %3478 = vmatprep.subr.bf16.mxu0 %v3328
    %3479 = vmatpush1.bf16.msra.mxu0 %v3327
    %3480 = vmatprep.subr.bf16.mxu0 %v3332
    %3481 = vmatpush1.bf16.msra.mxu0 %v3331
    %3482 = vmatprep.subr.bf16.mxu0 %v3336
    %3483 = vmatpush1.bf16.msra.mxu0 %v3335
    %3484 = vmatprep.subr.bf16.mxu0 %v3340
    %3485 = vmatpush1.bf16.msra.mxu0 %v3339
    %3486 = vmatprep.subr.bf16.mxu0 %v3344
    %3487 = vmatpush1.bf16.msra.mxu0 %v3343
    %3488 = vmatprep.subr.bf16.mxu0 %v3348
    %3489 = vmatpush1.bf16.msra.mxu0 %v3347
    %3490 = vmatprep.subr.bf16.mxu0 %v3352
    %3491 = vmatpush1.bf16.msra.mxu0 %v3351
    %3492 = vmatprep.subr.bf16.mxu0 %v3356
    %3493 = vmatpush1.bf16.msra.mxu0 %v3355
    %3494 = vmatprep.mubr.bf16.mxu0 %v3079
    %3495 = vmatmul.mubr.bf16.gmra.mrb[0].mxu0 %v2793
    %v3496 = vpop.f32.mrb[0].mxu0
    %v3497 = vadd.f32 %v3092, %v3496
    %v3498 = vpop.f32.mrb[0].mxu0
    %v3499 = vadd.f32 %v3096, %v3498
    %v3500 = vpop.f32.mrb[0].mxu0
    %v3501 = vpop.f32.mrb[0].mxu0
    %3502 = vdwg.mxu0
    %v3503 = vxor.u32 %v3456, 2147483648
    %v3504 = vxor.u32 %v3458, 2147483648
    %v3505 = vxor.u32 %v3497, 2147483648
    %v3506 = vmul.f32 %v3503, 1.442695
    %v3507 = vpow.pop %v3506
    %v3508 = vmul.f32 %v3504, 1.442695
    %v3509 = vpow.pop %v3508
    %v3510 = vmul.f32 %v3505, 1.442695
    %v3511 = vpow.pop %v3510
    %v3512 = vadd.f32 %v3507, 1.0
    %v3513 = vadd.f32 %v3509, 1.0
    %v3514 = vadd.f32 %v3511, 1.0
    %v3515 = vrcp.pop %v3512
    %v3516 = vmul.f32 1.0, %v3515
    %v3517 = vrcp.pop %v3513
    %v3518 = vmul.f32 1.0, %v3517
    %v3519 = vrcp.pop %v3514
    %v3520 = vmul.f32 1.0, %v3519
    %v3521 = vtanh.pop %v3499
    %v3522 = vmul.f32 %v3518, %v3078
    %v3523 = vmul.f32 %v3516, %v3521
    %v3524 = vadd.f32 %v3522, %v3523
    %v3525 = vtanh.pop %v3524
    %v3526 = vmul.f32 %v3520, %v3525
    %v3527 = vpack.c.bf16 %v3526, %v3526
    %3528 = vmatprep.subr.bf16.mxu0 %v3294
    %3529 = vmatpush1.bf16.msra.mxu0 %v3293
    %3530 = vmatprep.subr.bf16.mxu0 %v3298
    %3531 = vmatpush1.bf16.msra.mxu0 %v3297
    %3532 = vmatprep.subr.bf16.mxu0 %v3302
    %3533 = vmatpush1.bf16.msra.mxu0 %v3301
    %3534 = vmatprep.subr.bf16.mxu0 %v3306
    %3535 = vmatpush1.bf16.msra.mxu0 %v3305
    %3536 = vmatprep.subr.bf16.mxu0 %v3310
    %3537 = vmatpush1.bf16.msra.mxu0 %v3309
    %3538 = vmatprep.subr.bf16.mxu0 %v3314
    %3539 = vmatpush1.bf16.msra.mxu0 %v3313
    %3540 = vmatprep.subr.bf16.mxu0 %v3318
    %3541 = vmatpush1.bf16.msra.mxu0 %v3317
    %3542 = vmatprep.subr.bf16.mxu0 %v3322
    %3543 = vmatpush1.bf16.msra.mxu0 %v3321
    %3544 = vmatprep.subr.bf16.mxu0 %v3326
    %3545 = vmatpush1.bf16.msra.mxu0 %v3325
    %3546 = vmatprep.subr.bf16.mxu0 %v3330
    %3547 = vmatpush1.bf16.msra.mxu0 %v3329
    %3548 = vmatprep.subr.bf16.mxu0 %v3334
    %3549 = vmatpush1.bf16.msra.mxu0 %v3333
    %3550 = vmatprep.subr.bf16.mxu0 %v3338
    %3551 = vmatpush1.bf16.msra.mxu0 %v3337
    %3552 = vmatprep.subr.bf16.mxu0 %v3342
    %3553 = vmatpush1.bf16.msra.mxu0 %v3341
    %3554 = vmatprep.subr.bf16.mxu0 %v3346
    %3555 = vmatpush1.bf16.msra.mxu0 %v3345
    %3556 = vmatprep.subr.bf16.mxu0 %v3350
    %3557 = vmatpush1.bf16.msra.mxu0 %v3349
    %3558 = vmatprep.subr.bf16.mxu0 %v3354
    %3559 = vmatpush1.bf16.msra.mxu0 %v3353
    %3560 = vmatprep.mubr.bf16.mxu0 %v3527
    %3561 = vmatmul.mubr.bf16.gmra.mrb[0].mxu0 %v2901
    %v3562 = vpop.f32.mrb[0].mxu0
    %v3563 = vadd.f32 %v3084, %v3562
    %v3564 = vpop.f32.mrb[0].mxu0
    %v3565 = vadd.f32 %v3088, %v3564
    %v3566 = vpop.f32.mrb[0].mxu0
    %v3567 = vpop.f32.mrb[0].mxu0
    %3568 = vdwg.mxu0
    %3569 = vmatprep.subr.bf16.mxu0 %v3296
    %3570 = vmatpush1.bf16.msra.mxu0 %v3295
    %3571 = vmatprep.subr.bf16.mxu0 %v3300
    %3572 = vmatpush1.bf16.msra.mxu0 %v3299
    %3573 = vmatprep.subr.bf16.mxu0 %v3304
    %3574 = vmatpush1.bf16.msra.mxu0 %v3303
    %3575 = vmatprep.subr.bf16.mxu0 %v3308
    %3576 = vmatpush1.bf16.msra.mxu0 %v3307
    %3577 = vmatprep.subr.bf16.mxu0 %v3312
    %3578 = vmatpush1.bf16.msra.mxu0 %v3311
    %3579 = vmatprep.subr.bf16.mxu0 %v3316
    %3580 = vmatpush1.bf16.msra.mxu0 %v3315
    %3581 = vmatprep.subr.bf16.mxu0 %v3320
    %3582 = vmatpush1.bf16.msra.mxu0 %v3319
    %3583 = vmatprep.subr.bf16.mxu0 %v3324
    %3584 = vmatpush1.bf16.msra.mxu0 %v3323
    %3585 = vmatprep.subr.bf16.mxu0 %v3328
    %3586 = vmatpush1.bf16.msra.mxu0 %v3327
    %3587 = vmatprep.subr.bf16.mxu0 %v3332
    %3588 = vmatpush1.bf16.msra.mxu0 %v3331
    %3589 = vmatprep.subr.bf16.mxu0 %v3336
    %3590 = vmatpush1.bf16.msra.mxu0 %v3335
    %3591 = vmatprep.subr.bf16.mxu0 %v3340
    %3592 = vmatpush1.bf16.msra.mxu0 %v3339
    %3593 = vmatprep.subr.bf16.mxu0 %v3344
    %3594 = vmatpush1.bf16.msra.mxu0 %v3343
    %3595 = vmatprep.subr.bf16.mxu0 %v3348
    %3596 = vmatpush1.bf16.msra.mxu0 %v3347
    %3597 = vmatprep.subr.bf16.mxu0 %v3352
    %3598 = vmatpush1.bf16.msra.mxu0 %v3351
    %3599 = vmatprep.subr.bf16.mxu0 %v3356
    %3600 = vmatpush1.bf16.msra.mxu0 %v3355
    %3601 = vmatprep.mubr.bf16.mxu0 %v3527
    %3602 = vmatmul.mubr.bf16.gmra.mrb[0].mxu0 %v2901
    %v3603 = vpop.f32.mrb[0].mxu0
    %v3604 = vadd.f32 %v3092, %v3603
    %v3605 = vpop.f32.mrb[0].mxu0
    %v3606 = vadd.f32 %v3096, %v3605
    %v3607 = vpop.f32.mrb[0].mxu0
    %v3608 = vpop.f32.mrb[0].mxu0
    %3609 = vdwg.mxu0
    %v3610 = vxor.u32 %v3563, 2147483648
    %v3611 = vxor.u32 %v3565, 2147483648
    %v3612 = vxor.u32 %v3604, 2147483648
    %v3613 = vmul.f32 %v3610, 1.442695
    %v3614 = vpow.pop %v3613
    %v3615 = vmul.f32 %v3611, 1.442695
    %v3616 = vpow.pop %v3615
    %v3617 = vmul.f32 %v3612, 1.442695
    %v3618 = vpow.pop %v3617
    %v3619 = vadd.f32 %v3614, 1.0
    %v3620 = vadd.f32 %v3616, 1.0
    %v3621 = vadd.f32 %v3618, 1.0
    %v3622 = vrcp.pop %v3619
    %v3623 = vmul.f32 1.0, %v3622
    %v3624 = vrcp.pop %v3620
    %v3625 = vmul.f32 1.0, %v3624
    %v3626 = vrcp.pop %v3621
    %v3627 = vmul.f32 1.0, %v3626
    %v3628 = vtanh.pop %v3606
    %v3629 = vmul.f32 %v3625, %v3524
    %v3630 = vmul.f32 %v3623, %v3628
    %v3631 = vadd.f32 %v3629, %v3630
    %v3632 = vtanh.pop %v3631
    %v3633 = vmul.f32 %v3627, %v3632
    %v3634 = vpack.c.bf16 %v3007, %v3007
    %v3635 = vpack.c.bf16 %v3633, %v3633
    %3636 = vmatprep.subr.bf16.mxu0 %v3294
    %3637 = vmatpush1.bf16.msra.mxu0 %v3293
    %3638 = vmatprep.subr.bf16.mxu0 %v3298
    %3639 = vmatpush1.bf16.msra.mxu0 %v3297
    %3640 = vmatprep.subr.bf16.mxu0 %v3302
    %3641 = vmatpush1.bf16.msra.mxu0 %v3301
    %3642 = vmatprep.subr.bf16.mxu0 %v3306
    %3643 = vmatpush1.bf16.msra.mxu0 %v3305
    %3644 = vmatprep.subr.bf16.mxu0 %v3310
    %3645 = vmatpush1.bf16.msra.mxu0 %v3309
    %3646 = vmatprep.subr.bf16.mxu0 %v3314
    %3647 = vmatpush1.bf16.msra.mxu0 %v3313
    %3648 = vmatprep.subr.bf16.mxu0 %v3318
    %3649 = vmatpush1.bf16.msra.mxu0 %v3317
    %3650 = vmatprep.subr.bf16.mxu0 %v3322
    %3651 = vmatpush1.bf16.msra.mxu0 %v3321
    %3652 = vmatprep.subr.bf16.mxu0 %v3326
    %3653 = vmatpush1.bf16.msra.mxu0 %v3325
    %3654 = vmatprep.subr.bf16.mxu0 %v3330
    %3655 = vmatpush1.bf16.msra.mxu0 %v3329
    %3656 = vmatprep.subr.bf16.mxu0 %v3334
    %3657 = vmatpush1.bf16.msra.mxu0 %v3333
    %3658 = vmatprep.subr.bf16.mxu0 %v3338
    %3659 = vmatpush1.bf16.msra.mxu0 %v3337
    %3660 = vmatprep.subr.bf16.mxu0 %v3342
    %3661 = vmatpush1.bf16.msra.mxu0 %v3341
    %3662 = vmatprep.subr.bf16.mxu0 %v3346
    %3663 = vmatpush1.bf16.msra.mxu0 %v3345
    %3664 = vmatprep.subr.bf16.mxu0 %v3350
    %3665 = vmatpush1.bf16.msra.mxu0 %v3349
    %3666 = vmatprep.subr.bf16.mxu0 %v3354
    %3667 = vmatpush1.bf16.msra.mxu0 %v3353
    %3668 = vmatprep.mubr.bf16.mxu0 %v3635
    %3669 = vmatmul.mubr.bf16.gmra.mrb[0].mxu0 %v3634
    %v3670 = vpop.f32.mrb[0].mxu0
    %v3671 = vadd.f32 %v3084, %v3670
    %v3672 = vpop.f32.mrb[0].mxu0
    %v3673 = vadd.f32 %v3088, %v3672
    %v3674 = vpop.f32.mrb[0].mxu0
    %v3675 = vpop.f32.mrb[0].mxu0
    %3676 = vdwg.mxu0
    %3677 = vmatprep.subr.bf16.mxu0 %v3296
    %3678 = vmatpush1.bf16.msra.mxu0 %v3295
    %3679 = vmatprep.subr.bf16.mxu0 %v3300
    %3680 = vmatpush1.bf16.msra.mxu0 %v3299
    %3681 = vmatprep.subr.bf16.mxu0 %v3304
    %3682 = vmatpush1.bf16.msra.mxu0 %v3303
    %3683 = vmatprep.subr.bf16.mxu0 %v3308
    %3684 = vmatpush1.bf16.msra.mxu0 %v3307
    %3685 = vmatprep.subr.bf16.mxu0 %v3312
    %3686 = vmatpush1.bf16.msra.mxu0 %v3311
    %3687 = vmatprep.subr.bf16.mxu0 %v3316
    %3688 = vmatpush1.bf16.msra.mxu0 %v3315
    %3689 = vmatprep.subr.bf16.mxu0 %v3320
    %3690 = vmatpush1.bf16.msra.mxu0 %v3319
    %3691 = vmatprep.subr.bf16.mxu0 %v3324
    %3692 = vmatpush1.bf16.msra.mxu0 %v3323
    %3693 = vmatprep.subr.bf16.mxu0 %v3328
    %3694 = vmatpush1.bf16.msra.mxu0 %v3327
    %3695 = vmatprep.subr.bf16.mxu0 %v3332
    %3696 = vmatpush1.bf16.msra.mxu0 %v3331
    %3697 = vmatprep.subr.bf16.mxu0 %v3336
    %3698 = vmatpush1.bf16.msra.mxu0 %v3335
    %3699 = vmatprep.subr.bf16.mxu0 %v3340
    %3700 = vmatpush1.bf16.msra.mxu0 %v3339
    %3701 = vmatprep.subr.bf16.mxu0 %v3344
    %3702 = vmatpush1.bf16.msra.mxu0 %v3343
    %3703 = vmatprep.subr.bf16.mxu0 %v3348
    %3704 = vmatpush1.bf16.msra.mxu0 %v3347
    %3705 = vmatprep.subr.bf16.mxu0 %v3352
    %3706 = vmatpush1.bf16.msra.mxu0 %v3351
    %3707 = vmatprep.subr.bf16.mxu0 %v3356
    %3708 = vmatpush1.bf16.msra.mxu0 %v3355
    %3709 = vmatprep.mubr.bf16.mxu0 %v3635
    %3710 = vmatmul.mubr.bf16.gmra.mrb[0].mxu0 %v3634
    %v3711 = vpop.f32.mrb[0].mxu0
    %v3712 = vadd.f32 %v3092, %v3711
    %v3713 = vpop.f32.mrb[0].mxu0
    %v3714 = vadd.f32 %v3096, %v3713
    %v3715 = vpop.f32.mrb[0].mxu0
    %v3716 = vpop.f32.mrb[0].mxu0
    %3717 = vdwg.mxu0
    %v3718 = vxor.u32 %v3671, 2147483648
    %v3719 = vxor.u32 %v3673, 2147483648
    %v3720 = vxor.u32 %v3712, 2147483648
    %v3721 = vmul.f32 %v3718, 1.442695
    %v3722 = vpow.pop %v3721
    %v3723 = vmul.f32 %v3719, 1.442695
    %v3724 = vpow.pop %v3723
    %v3725 = vmul.f32 %v3720, 1.442695
    %v3726 = vpow.pop %v3725
    %v3727 = vadd.f32 %v3722, 1.0
    %v3728 = vadd.f32 %v3724, 1.0
    %v3729 = vadd.f32 %v3726, 1.0
    %v3730 = vrcp.pop %v3727
    %v3731 = vmul.f32 1.0, %v3730
    %v3732 = vrcp.pop %v3728
    %v3733 = vmul.f32 1.0, %v3732
    %v3734 = vrcp.pop %v3729
    %v3735 = vmul.f32 1.0, %v3734
    %v3736 = vtanh.pop %v3714
    %v3737 = vmul.f32 %v3733, %v3631
    %v3738 = vmul.f32 %v3731, %v3736
    %v3739 = vadd.f32 %v3737, %v3738
    %v3740 = vtanh.pop %v3739
    %v3741 = vmul.f32 %v3735, %v3740
    %s3742 = scalar_lea.vmem [#allocation3], 2560
    %v3743 = vld [vmem:[%s3742] sm:$0xff]
    %v3744 = vld [vmem:[%s3742 + $0x8] sm:$0xff]
    %v3745 = vld [vmem:[%s3742 + $0x10] sm:$0xff]
    %v3746 = vld [vmem:[%s3742 + $0x18] sm:$0xff]
    %v3747 = vld [vmem:[%s3742 + $0x20] sm:$0xff]
    %v3748 = vld [vmem:[%s3742 + $0x28] sm:$0xff]
    %v3749 = vld [vmem:[%s3742 + $0x30] sm:$0xff]
    %v3750 = vld [vmem:[%s3742 + $0x38] sm:$0xff]
    %v3751 = vld [vmem:[%s3742 + $0x40] sm:$0xff]
    %v3752 = vld [vmem:[%s3742 + $0x48] sm:$0xff]
    %v3753 = vld [vmem:[%s3742 + $0x50] sm:$0xff]
    %v3754 = vld [vmem:[%s3742 + $0x58] sm:$0xff]
    %v3755 = vld [vmem:[%s3742 + $0x60] sm:$0xff]
    %v3756 = vld [vmem:[%s3742 + $0x68] sm:$0xff]
    %v3757 = vld [vmem:[%s3742 + $0x70] sm:$0xff]
    %v3758 = vld [vmem:[%s3742 + $0x78] sm:$0xff]
    %v3759 = vld [vmem:[%s3742 + $0x80] sm:$0xff]
    %v3760 = vld [vmem:[%s3742 + $0x88] sm:$0xff]
    %v3761 = vld [vmem:[%s3742 + $0x90] sm:$0xff]
    %v3762 = vld [vmem:[%s3742 + $0x98] sm:$0xff]
    %v3763 = vld [vmem:[%s3742 + $0xa0] sm:$0xff]
    %v3764 = vld [vmem:[%s3742 + $0xa8] sm:$0xff]
    %v3765 = vld [vmem:[%s3742 + $0xb0] sm:$0xff]
    %v3766 = vld [vmem:[%s3742 + $0xb8] sm:$0xff]
    %v3767 = vld [vmem:[%s3742 + $0xc0] sm:$0xff]
    %v3768 = vld [vmem:[%s3742 + $0xc8] sm:$0xff]
    %v3769 = vld [vmem:[%s3742 + $0xd0] sm:$0xff]
    %v3770 = vld [vmem:[%s3742 + $0xd8] sm:$0xff]
    %v3771 = vld [vmem:[%s3742 + $0xe0] sm:$0xff]
    %v3772 = vld [vmem:[%s3742 + $0xe8] sm:$0xff]
    %v3773 = vld [vmem:[%s3742 + $0xf0] sm:$0xff]
    %v3774 = vld [vmem:[%s3742 + $0xf8] sm:$0xff]
    %v3775 = vld [vmem:[%s3742 + $0x100] sm:$0xff]
    %v3776 = vld [vmem:[%s3742 + $0x108] sm:$0xff]
    %v3777 = vld [vmem:[%s3742 + $0x110] sm:$0xff]
    %v3778 = vld [vmem:[%s3742 + $0x118] sm:$0xff]
    %v3779 = vld [vmem:[%s3742 + $0x120] sm:$0xff]
    %v3780 = vld [vmem:[%s3742 + $0x128] sm:$0xff]
    %v3781 = vld [vmem:[%s3742 + $0x130] sm:$0xff]
    %v3782 = vld [vmem:[%s3742 + $0x138] sm:$0xff]
    %v3783 = vld [vmem:[%s3742 + $0x140] sm:$0xff]
    %v3784 = vld [vmem:[%s3742 + $0x148] sm:$0xff]
    %v3785 = vld [vmem:[%s3742 + $0x150] sm:$0xff]
    %v3786 = vld [vmem:[%s3742 + $0x158] sm:$0xff]
    %v3787 = vld [vmem:[%s3742 + $0x160] sm:$0xff]
    %v3788 = vld [vmem:[%s3742 + $0x168] sm:$0xff]
    %v3789 = vld [vmem:[%s3742 + $0x170] sm:$0xff]
    %v3790 = vld [vmem:[%s3742 + $0x178] sm:$0xff]
    %v3791 = vld [vmem:[%s3742 + $0x180] sm:$0xff]
    %v3792 = vld [vmem:[%s3742 + $0x188] sm:$0xff]
    %v3793 = vld [vmem:[%s3742 + $0x190] sm:$0xff]
    %v3794 = vld [vmem:[%s3742 + $0x198] sm:$0xff]
    %v3795 = vld [vmem:[%s3742 + $0x1a0] sm:$0xff]
    %v3796 = vld [vmem:[%s3742 + $0x1a8] sm:$0xff]
    %v3797 = vld [vmem:[%s3742 + $0x1b0] sm:$0xff]
    %v3798 = vld [vmem:[%s3742 + $0x1b8] sm:$0xff]
    %v3799 = vld [vmem:[%s3742 + $0x1c0] sm:$0xff]
    %v3800 = vld [vmem:[%s3742 + $0x1c8] sm:$0xff]
    %v3801 = vld [vmem:[%s3742 + $0x1d0] sm:$0xff]
    %v3802 = vld [vmem:[%s3742 + $0x1d8] sm:$0xff]
    %v3803 = vld [vmem:[%s3742 + $0x1e0] sm:$0xff]
    %v3804 = vld [vmem:[%s3742 + $0x1e8] sm:$0xff]
    %v3805 = vld [vmem:[%s3742 + $0x1f0] sm:$0xff]
    %v3806 = vld [vmem:[%s3742 + $0x1f8] sm:$0xff]
    %s3807 = scalar_lea.vmem [#allocation5], 20
    %v3808 = vld [vmem:[%s3807] sm:$0xf]
    %s3809 = scalar_lea.vmem %s3, 40
    %v3810 = vld [vmem:[%s3809] sm:$0xff]
    %s3811 = scalar_lea.vmem %s4, 40
    %v3812 = vld [vmem:[%s3811] sm:$0xff]
    %v3813 = vpack.c.bf16 %v3810, %v3810
    %v3815 = vlaneseq
    %v3816 = vshrl.u32 %v3815, 7
    %v3817 = vsub.s32 0, %v3816
    %v3818 = vrot.slane %v3808, %v3817
    %v3819 = vlaneseq
    %v3820 = vshrl.u32 %v3819, 7
    %v3821 = vsub.s32 1, %v3820
    %v3822 = vrot.slane %v3808, %v3821
    %v3823 = vlaneseq
    %v3824 = vshrl.u32 %v3823, 7
    %v3825 = vsub.s32 2, %v3824
    %v3826 = vrot.slane %v3808, %v3825
    %v3827 = vlaneseq
    %v3828 = vshrl.u32 %v3827, 7
    %v3829 = vsub.s32 3, %v3828
    %v3830 = vrot.slane %v3808, %v3829
    %v3899 = vunpack.c.l.b16 %v3743
    %v3900 = vunpack.c.h.b16 %v3743
    %v3901 = vunpack.c.l.b16 %v3744
    %v3902 = vunpack.c.h.b16 %v3744
    %v3903 = vunpack.c.l.b16 %v3745
    %v3904 = vunpack.c.h.b16 %v3745
    %v3905 = vunpack.c.l.b16 %v3746
    %v3906 = vunpack.c.h.b16 %v3746
    %v3907 = vunpack.c.l.b16 %v3747
    %v3908 = vunpack.c.h.b16 %v3747
    %v3909 = vunpack.c.l.b16 %v3748
    %v3910 = vunpack.c.h.b16 %v3748
    %v3911 = vunpack.c.l.b16 %v3749
    %v3912 = vunpack.c.h.b16 %v3749
    %v3913 = vunpack.c.l.b16 %v3750
    %v3914 = vunpack.c.h.b16 %v3750
    %v3915 = vunpack.c.l.b16 %v3751
    %v3916 = vunpack.c.h.b16 %v3751
    %v3917 = vunpack.c.l.b16 %v3752
    %v3918 = vunpack.c.h.b16 %v3752
    %v3919 = vunpack.c.l.b16 %v3753
    %v3920 = vunpack.c.h.b16 %v3753
    %v3921 = vunpack.c.l.b16 %v3754
    %v3922 = vunpack.c.h.b16 %v3754
    %v3923 = vunpack.c.l.b16 %v3755
    %v3924 = vunpack.c.h.b16 %v3755
    %v3925 = vunpack.c.l.b16 %v3756
    %v3926 = vunpack.c.h.b16 %v3756
    %v3927 = vunpack.c.l.b16 %v3757
    %v3928 = vunpack.c.h.b16 %v3757
    %v3929 = vunpack.c.l.b16 %v3758
    %v3930 = vunpack.c.h.b16 %v3758
    %v3931 = vunpack.c.l.b16 %v3759
    %v3932 = vunpack.c.h.b16 %v3759
    %v3933 = vunpack.c.l.b16 %v3760
    %v3934 = vunpack.c.h.b16 %v3760
    %v3935 = vunpack.c.l.b16 %v3761
    %v3936 = vunpack.c.h.b16 %v3761
    %v3937 = vunpack.c.l.b16 %v3762
    %v3938 = vunpack.c.h.b16 %v3762
    %v3939 = vunpack.c.l.b16 %v3763
    %v3940 = vunpack.c.h.b16 %v3763
    %v3941 = vunpack.c.l.b16 %v3764
    %v3942 = vunpack.c.h.b16 %v3764
    %v3943 = vunpack.c.l.b16 %v3765
    %v3944 = vunpack.c.h.b16 %v3765
    %v3945 = vunpack.c.l.b16 %v3766
    %v3946 = vunpack.c.h.b16 %v3766
    %v3947 = vunpack.c.l.b16 %v3767
    %v3948 = vunpack.c.h.b16 %v3767
    %v3949 = vunpack.c.l.b16 %v3768
    %v3950 = vunpack.c.h.b16 %v3768
    %v3951 = vunpack.c.l.b16 %v3769
    %v3952 = vunpack.c.h.b16 %v3769
    %v3953 = vunpack.c.l.b16 %v3770
    %v3954 = vunpack.c.h.b16 %v3770
    %v3955 = vunpack.c.l.b16 %v3771
    %v3956 = vunpack.c.h.b16 %v3771
    %v3957 = vunpack.c.l.b16 %v3772
    %v3958 = vunpack.c.h.b16 %v3772
    %v3959 = vunpack.c.l.b16 %v3773
    %v3960 = vunpack.c.h.b16 %v3773
    %v3961 = vunpack.c.l.b16 %v3774
    %v3962 = vunpack.c.h.b16 %v3774
    %v3963 = vunpack.c.l.b16 %v3775
    %v3964 = vunpack.c.h.b16 %v3775
    %v3965 = vunpack.c.l.b16 %v3776
    %v3966 = vunpack.c.h.b16 %v3776
    %v3967 = vunpack.c.l.b16 %v3777
    %v3968 = vunpack.c.h.b16 %v3777
    %v3969 = vunpack.c.l.b16 %v3778
    %v3970 = vunpack.c.h.b16 %v3778
    %v3971 = vunpack.c.l.b16 %v3779
    %v3972 = vunpack.c.h.b16 %v3779
    %v3973 = vunpack.c.l.b16 %v3780
    %v3974 = vunpack.c.h.b16 %v3780
    %v3975 = vunpack.c.l.b16 %v3781
    %v3976 = vunpack.c.h.b16 %v3781
    %v3977 = vunpack.c.l.b16 %v3782
    %v3978 = vunpack.c.h.b16 %v3782
    %v3979 = vunpack.c.l.b16 %v3783
    %v3980 = vunpack.c.h.b16 %v3783
    %v3981 = vunpack.c.l.b16 %v3784
    %v3982 = vunpack.c.h.b16 %v3784
    %v3983 = vunpack.c.l.b16 %v3785
    %v3984 = vunpack.c.h.b16 %v3785
    %v3985 = vunpack.c.l.b16 %v3786
    %v3986 = vunpack.c.h.b16 %v3786
    %v3987 = vunpack.c.l.b16 %v3787
    %v3988 = vunpack.c.h.b16 %v3787
    %v3989 = vunpack.c.l.b16 %v3788
    %v3990 = vunpack.c.h.b16 %v3788
    %v3991 = vunpack.c.l.b16 %v3789
    %v3992 = vunpack.c.h.b16 %v3789
    %v3993 = vunpack.c.l.b16 %v3790
    %v3994 = vunpack.c.h.b16 %v3790
    %v3995 = vunpack.c.l.b16 %v3791
    %v3996 = vunpack.c.h.b16 %v3791
    %v3997 = vunpack.c.l.b16 %v3792
    %v3998 = vunpack.c.h.b16 %v3792
    %v3999 = vunpack.c.l.b16 %v3793
    %v4000 = vunpack.c.h.b16 %v3793
    %v4001 = vunpack.c.l.b16 %v3794
    %v4002 = vunpack.c.h.b16 %v3794
    %v4003 = vunpack.c.l.b16 %v3795
    %v4004 = vunpack.c.h.b16 %v3795
    %v4005 = vunpack.c.l.b16 %v3796
    %v4006 = vunpack.c.h.b16 %v3796
    %v4007 = vunpack.c.l.b16 %v3797
    %v4008 = vunpack.c.h.b16 %v3797
    %v4009 = vunpack.c.l.b16 %v3798
    %v4010 = vunpack.c.h.b16 %v3798
    %v4011 = vunpack.c.l.b16 %v3799
    %v4012 = vunpack.c.h.b16 %v3799
    %v4013 = vunpack.c.l.b16 %v3800
    %v4014 = vunpack.c.h.b16 %v3800
    %v4015 = vunpack.c.l.b16 %v3801
    %v4016 = vunpack.c.h.b16 %v3801
    %v4017 = vunpack.c.l.b16 %v3802
    %v4018 = vunpack.c.h.b16 %v3802
    %v4019 = vunpack.c.l.b16 %v3803
    %v4020 = vunpack.c.h.b16 %v3803
    %v4021 = vunpack.c.l.b16 %v3804
    %v4022 = vunpack.c.h.b16 %v3804
    %v4023 = vunpack.c.l.b16 %v3805
    %v4024 = vunpack.c.h.b16 %v3805
    %v4025 = vunpack.c.l.b16 %v3806
    %v4026 = vunpack.c.h.b16 %v3806
    %v4027 = vpack.c.b16 %v3903, %v3899
    %v4028 = vpack.c.b16 %v3904, %v3900
    %v4029 = vpack.c.b16 %v3905, %v3901
    %v4030 = vpack.c.b16 %v3906, %v3902
    %v4031 = vpack.c.b16 %v3911, %v3907
    %v4032 = vpack.c.b16 %v3912, %v3908
    %v4033 = vpack.c.b16 %v3913, %v3909
    %v4034 = vpack.c.b16 %v3914, %v3910
    %v4035 = vpack.c.b16 %v3919, %v3915
    %v4036 = vpack.c.b16 %v3920, %v3916
    %v4037 = vpack.c.b16 %v3921, %v3917
    %v4038 = vpack.c.b16 %v3922, %v3918
    %v4039 = vpack.c.b16 %v3927, %v3923
    %v4040 = vpack.c.b16 %v3928, %v3924
    %v4041 = vpack.c.b16 %v3929, %v3925
    %v4042 = vpack.c.b16 %v3930, %v3926
    %v4043 = vpack.c.b16 %v3935, %v3931
    %v4044 = vpack.c.b16 %v3936, %v3932
    %v4045 = vpack.c.b16 %v3937, %v3933
    %v4046 = vpack.c.b16 %v3938, %v3934
    %v4047 = vpack.c.b16 %v3943, %v3939
    %v4048 = vpack.c.b16 %v3944, %v3940
    %v4049 = vpack.c.b16 %v3945, %v3941
    %v4050 = vpack.c.b16 %v3946, %v3942
    %v4051 = vpack.c.b16 %v3951, %v3947
    %v4052 = vpack.c.b16 %v3952, %v3948
    %v4053 = vpack.c.b16 %v3953, %v3949
    %v4054 = vpack.c.b16 %v3954, %v3950
    %v4055 = vpack.c.b16 %v3959, %v3955
    %v4056 = vpack.c.b16 %v3960, %v3956
    %v4057 = vpack.c.b16 %v3961, %v3957
    %v4058 = vpack.c.b16 %v3962, %v3958
    %v4059 = vpack.c.b16 %v3967, %v3963
    %v4060 = vpack.c.b16 %v3968, %v3964
    %v4061 = vpack.c.b16 %v3969, %v3965
    %v4062 = vpack.c.b16 %v3970, %v3966
    %v4063 = vpack.c.b16 %v3975, %v3971
    %v4064 = vpack.c.b16 %v3976, %v3972
    %v4065 = vpack.c.b16 %v3977, %v3973
    %v4066 = vpack.c.b16 %v3978, %v3974
    %v4067 = vpack.c.b16 %v3983, %v3979
    %v4068 = vpack.c.b16 %v3984, %v3980
    %v4069 = vpack.c.b16 %v3985, %v3981
    %v4070 = vpack.c.b16 %v3986, %v3982
    %v4071 = vpack.c.b16 %v3991, %v3987
    %v4072 = vpack.c.b16 %v3992, %v3988
    %v4073 = vpack.c.b16 %v3993, %v3989
    %v4074 = vpack.c.b16 %v3994, %v3990
    %v4075 = vpack.c.b16 %v3999, %v3995
    %v4076 = vpack.c.b16 %v4000, %v3996
    %v4077 = vpack.c.b16 %v4001, %v3997
    %v4078 = vpack.c.b16 %v4002, %v3998
    %v4079 = vpack.c.b16 %v4007, %v4003
    %v4080 = vpack.c.b16 %v4008, %v4004
    %v4081 = vpack.c.b16 %v4009, %v4005
    %v4082 = vpack.c.b16 %v4010, %v4006
    %v4083 = vpack.c.b16 %v4015, %v4011
    %v4084 = vpack.c.b16 %v4016, %v4012
    %v4085 = vpack.c.b16 %v4017, %v4013
    %v4086 = vpack.c.b16 %v4018, %v4014
    %v4087 = vpack.c.b16 %v4023, %v4019
    %v4088 = vpack.c.b16 %v4024, %v4020
    %v4089 = vpack.c.b16 %v4025, %v4021
    %v4090 = vpack.c.b16 %v4026, %v4022
    %4155 = vmatprep.subr.bf16.mxu0 %v4028
    %4156 = vmatpush1.bf16.msra.mxu0 %v4027
    %4157 = vmatprep.subr.bf16.mxu0 %v4032
    %4158 = vmatpush1.bf16.msra.mxu0 %v4031
    %4159 = vmatprep.subr.bf16.mxu0 %v4036
    %4160 = vmatpush1.bf16.msra.mxu0 %v4035
    %4161 = vmatprep.subr.bf16.mxu0 %v4040
    %4162 = vmatpush1.bf16.msra.mxu0 %v4039
    %4163 = vmatprep.subr.bf16.mxu0 %v4044
    %4164 = vmatpush1.bf16.msra.mxu0 %v4043
    %4165 = vmatprep.subr.bf16.mxu0 %v4048
    %4166 = vmatpush1.bf16.msra.mxu0 %v4047
    %4167 = vmatprep.subr.bf16.mxu0 %v4052
    %4168 = vmatpush1.bf16.msra.mxu0 %v4051
    %4169 = vmatprep.subr.bf16.mxu0 %v4056
    %4170 = vmatpush1.bf16.msra.mxu0 %v4055
    %4171 = vmatprep.subr.bf16.mxu0 %v4060
    %4172 = vmatpush1.bf16.msra.mxu0 %v4059
    %4173 = vmatprep.subr.bf16.mxu0 %v4064
    %4174 = vmatpush1.bf16.msra.mxu0 %v4063
    %4175 = vmatprep.subr.bf16.mxu0 %v4068
    %4176 = vmatpush1.bf16.msra.mxu0 %v4067
    %4177 = vmatprep.subr.bf16.mxu0 %v4072
    %4178 = vmatpush1.bf16.msra.mxu0 %v4071
    %4179 = vmatprep.subr.bf16.mxu0 %v4076
    %4180 = vmatpush1.bf16.msra.mxu0 %v4075
    %4181 = vmatprep.subr.bf16.mxu0 %v4080
    %4182 = vmatpush1.bf16.msra.mxu0 %v4079
    %4183 = vmatprep.subr.bf16.mxu0 %v4084
    %4184 = vmatpush1.bf16.msra.mxu0 %v4083
    %4185 = vmatprep.subr.bf16.mxu0 %v4088
    %4186 = vmatpush1.bf16.msra.mxu0 %v4087
    %4187 = vmatprep.mubr.bf16.mxu0 %v3813
    %4188 = vmatmul.mubr.bf16.gmra.mrb[0].mxu0 %v3527
    %v4189 = vpop.f32.mrb[0].mxu0
    %v4190 = vadd.f32 %v3818, %v4189
    %v4191 = vpop.f32.mrb[0].mxu0
    %v4192 = vadd.f32 %v3822, %v4191
    %v4193 = vpop.f32.mrb[0].mxu0
    %v4194 = vpop.f32.mrb[0].mxu0
    %4195 = vdwg.mxu0
    %4196 = vmatprep.subr.bf16.mxu0 %v4030
    %4197 = vmatpush1.bf16.msra.mxu0 %v4029
    %4198 = vmatprep.subr.bf16.mxu0 %v4034
    %4199 = vmatpush1.bf16.msra.mxu0 %v4033
    %4200 = vmatprep.subr.bf16.mxu0 %v4038
    %4201 = vmatpush1.bf16.msra.mxu0 %v4037
    %4202 = vmatprep.subr.bf16.mxu0 %v4042
    %4203 = vmatpush1.bf16.msra.mxu0 %v4041
    %4204 = vmatprep.subr.bf16.mxu0 %v4046
    %4205 = vmatpush1.bf16.msra.mxu0 %v4045
    %4206 = vmatprep.subr.bf16.mxu0 %v4050
    %4207 = vmatpush1.bf16.msra.mxu0 %v4049
    %4208 = vmatprep.subr.bf16.mxu0 %v4054
    %4209 = vmatpush1.bf16.msra.mxu0 %v4053
    %4210 = vmatprep.subr.bf16.mxu0 %v4058
    %4211 = vmatpush1.bf16.msra.mxu0 %v4057
    %4212 = vmatprep.subr.bf16.mxu0 %v4062
    %4213 = vmatpush1.bf16.msra.mxu0 %v4061
    %4214 = vmatprep.subr.bf16.mxu0 %v4066
    %4215 = vmatpush1.bf16.msra.mxu0 %v4065
    %4216 = vmatprep.subr.bf16.mxu0 %v4070
    %4217 = vmatpush1.bf16.msra.mxu0 %v4069
    %4218 = vmatprep.subr.bf16.mxu0 %v4074
    %4219 = vmatpush1.bf16.msra.mxu0 %v4073
    %4220 = vmatprep.subr.bf16.mxu0 %v4078
    %4221 = vmatpush1.bf16.msra.mxu0 %v4077
    %4222 = vmatprep.subr.bf16.mxu0 %v4082
    %4223 = vmatpush1.bf16.msra.mxu0 %v4081
    %4224 = vmatprep.subr.bf16.mxu0 %v4086
    %4225 = vmatpush1.bf16.msra.mxu0 %v4085
    %4226 = vmatprep.subr.bf16.mxu0 %v4090
    %4227 = vmatpush1.bf16.msra.mxu0 %v4089
    %4228 = vmatprep.mubr.bf16.mxu0 %v3813
    %4229 = vmatmul.mubr.bf16.gmra.mrb[0].mxu0 %v3527
    %v4230 = vpop.f32.mrb[0].mxu0
    %v4231 = vadd.f32 %v3826, %v4230
    %v4232 = vpop.f32.mrb[0].mxu0
    %v4233 = vadd.f32 %v3830, %v4232
    %v4234 = vpop.f32.mrb[0].mxu0
    %v4235 = vpop.f32.mrb[0].mxu0
    %4236 = vdwg.mxu0
    %v4237 = vxor.u32 %v4190, 2147483648
    %v4238 = vxor.u32 %v4192, 2147483648
    %v4239 = vxor.u32 %v4231, 2147483648
    %v4240 = vmul.f32 %v4237, 1.442695
    %v4241 = vpow.pop %v4240
    %v4242 = vmul.f32 %v4238, 1.442695
    %v4243 = vpow.pop %v4242
    %v4244 = vmul.f32 %v4239, 1.442695
    %v4245 = vpow.pop %v4244
    %v4246 = vadd.f32 %v4241, 1.0
    %v4247 = vadd.f32 %v4243, 1.0
    %v4248 = vadd.f32 %v4245, 1.0
    %v4249 = vrcp.pop %v4246
    %v4250 = vmul.f32 1.0, %v4249
    %v4251 = vrcp.pop %v4247
    %v4252 = vmul.f32 1.0, %v4251
    %v4253 = vrcp.pop %v4248
    %v4254 = vmul.f32 1.0, %v4253
    %v4255 = vtanh.pop %v4233
    %v4256 = vmul.f32 %v4252, %v3812
    %v4257 = vmul.f32 %v4250, %v4255
    %v4258 = vadd.f32 %v4256, %v4257
    %v4259 = vtanh.pop %v4258
    %v4260 = vmul.f32 %v4254, %v4259
    %v4261 = vpack.c.bf16 %v4260, %v4260
    %4262 = vmatprep.subr.bf16.mxu0 %v4028
    %4263 = vmatpush1.bf16.msra.mxu0 %v4027
    %4264 = vmatprep.subr.bf16.mxu0 %v4032
    %4265 = vmatpush1.bf16.msra.mxu0 %v4031
    %4266 = vmatprep.subr.bf16.mxu0 %v4036
    %4267 = vmatpush1.bf16.msra.mxu0 %v4035
    %4268 = vmatprep.subr.bf16.mxu0 %v4040
    %4269 = vmatpush1.bf16.msra.mxu0 %v4039
    %4270 = vmatprep.subr.bf16.mxu0 %v4044
    %4271 = vmatpush1.bf16.msra.mxu0 %v4043
    %4272 = vmatprep.subr.bf16.mxu0 %v4048
    %4273 = vmatpush1.bf16.msra.mxu0 %v4047
    %4274 = vmatprep.subr.bf16.mxu0 %v4052
    %4275 = vmatpush1.bf16.msra.mxu0 %v4051
    %4276 = vmatprep.subr.bf16.mxu0 %v4056
    %4277 = vmatpush1.bf16.msra.mxu0 %v4055
    %4278 = vmatprep.subr.bf16.mxu0 %v4060
    %4279 = vmatpush1.bf16.msra.mxu0 %v4059
    %4280 = vmatprep.subr.bf16.mxu0 %v4064
    %4281 = vmatpush1.bf16.msra.mxu0 %v4063
    %4282 = vmatprep.subr.bf16.mxu0 %v4068
    %4283 = vmatpush1.bf16.msra.mxu0 %v4067
    %4284 = vmatprep.subr.bf16.mxu0 %v4072
    %4285 = vmatpush1.bf16.msra.mxu0 %v4071
    %4286 = vmatprep.subr.bf16.mxu0 %v4076
    %4287 = vmatpush1.bf16.msra.mxu0 %v4075
    %4288 = vmatprep.subr.bf16.mxu0 %v4080
    %4289 = vmatpush1.bf16.msra.mxu0 %v4079
    %4290 = vmatprep.subr.bf16.mxu0 %v4084
    %4291 = vmatpush1.bf16.msra.mxu0 %v4083
    %4292 = vmatprep.subr.bf16.mxu0 %v4088
    %4293 = vmatpush1.bf16.msra.mxu0 %v4087
    %4294 = vmatprep.mubr.bf16.mxu0 %v4261
    %4295 = vmatmul.mubr.bf16.gmra.mrb[0].mxu0 %v3635
    %v4296 = vpop.f32.mrb[0].mxu0
    %v4297 = vadd.f32 %v3818, %v4296
    %v4298 = vpop.f32.mrb[0].mxu0
    %v4299 = vadd.f32 %v3822, %v4298
    %v4300 = vpop.f32.mrb[0].mxu0
    %v4301 = vpop.f32.mrb[0].mxu0
    %4302 = vdwg.mxu0
    %4303 = vmatprep.subr.bf16.mxu0 %v4030
    %4304 = vmatpush1.bf16.msra.mxu0 %v4029
    %4305 = vmatprep.subr.bf16.mxu0 %v4034
    %4306 = vmatpush1.bf16.msra.mxu0 %v4033
    %4307 = vmatprep.subr.bf16.mxu0 %v4038
    %4308 = vmatpush1.bf16.msra.mxu0 %v4037
    %4309 = vmatprep.subr.bf16.mxu0 %v4042
    %4310 = vmatpush1.bf16.msra.mxu0 %v4041
    %4311 = vmatprep.subr.bf16.mxu0 %v4046
    %4312 = vmatpush1.bf16.msra.mxu0 %v4045
    %4313 = vmatprep.subr.bf16.mxu0 %v4050
    %4314 = vmatpush1.bf16.msra.mxu0 %v4049
    %4315 = vmatprep.subr.bf16.mxu0 %v4054
    %4316 = vmatpush1.bf16.msra.mxu0 %v4053
    %4317 = vmatprep.subr.bf16.mxu0 %v4058
    %4318 = vmatpush1.bf16.msra.mxu0 %v4057
    %4319 = vmatprep.subr.bf16.mxu0 %v4062
    %4320 = vmatpush1.bf16.msra.mxu0 %v4061
    %4321 = vmatprep.subr.bf16.mxu0 %v4066
    %4322 = vmatpush1.bf16.msra.mxu0 %v4065
    %4323 = vmatprep.subr.bf16.mxu0 %v4070
    %4324 = vmatpush1.bf16.msra.mxu0 %v4069
    %4325 = vmatprep.subr.bf16.mxu0 %v4074
    %4326 = vmatpush1.bf16.msra.mxu0 %v4073
    %4327 = vmatprep.subr.bf16.mxu0 %v4078
    %4328 = vmatpush1.bf16.msra.mxu0 %v4077
    %4329 = vmatprep.subr.bf16.mxu0 %v4082
    %4330 = vmatpush1.bf16.msra.mxu0 %v4081
    %4331 = vmatprep.subr.bf16.mxu0 %v4086
    %4332 = vmatpush1.bf16.msra.mxu0 %v4085
    %4333 = vmatprep.subr.bf16.mxu0 %v4090
    %4334 = vmatpush1.bf16.msra.mxu0 %v4089
    %4335 = vmatprep.mubr.bf16.mxu0 %v4261
    %4336 = vmatmul.mubr.bf16.gmra.mrb[0].mxu0 %v3635
    %v4337 = vpop.f32.mrb[0].mxu0
    %v4338 = vadd.f32 %v3826, %v4337
    %v4339 = vpop.f32.mrb[0].mxu0
    %v4340 = vadd.f32 %v3830, %v4339
    %v4341 = vpop.f32.mrb[0].mxu0
    %v4342 = vpop.f32.mrb[0].mxu0
    %4343 = vdwg.mxu0
    %v4344 = vxor.u32 %v4297, 2147483648
    %v4345 = vxor.u32 %v4299, 2147483648
    %v4346 = vxor.u32 %v4338, 2147483648
    %v4347 = vmul.f32 %v4344, 1.442695
    %v4348 = vpow.pop %v4347
    %v4349 = vmul.f32 %v4345, 1.442695
    %v4350 = vpow.pop %v4349
    %v4351 = vmul.f32 %v4346, 1.442695
    %v4352 = vpow.pop %v4351
    %v4353 = vadd.f32 %v4348, 1.0
    %v4354 = vadd.f32 %v4350, 1.0
    %v4355 = vadd.f32 %v4352, 1.0
    %v4356 = vrcp.pop %v4353
    %v4357 = vmul.f32 1.0, %v4356
    %v4358 = vrcp.pop %v4354
    %v4359 = vmul.f32 1.0, %v4358
    %v4360 = vrcp.pop %v4355
    %v4361 = vmul.f32 1.0, %v4360
    %v4362 = vtanh.pop %v4340
    %v4363 = vmul.f32 %v4359, %v4258
    %v4364 = vmul.f32 %v4357, %v4362
    %v4365 = vadd.f32 %v4363, %v4364
    %v4366 = vtanh.pop %v4365
    %v4367 = vmul.f32 %v4361, %v4366
    %v4368 = vpack.c.bf16 %v3741, %v3741
    %v4369 = vpack.c.bf16 %v4367, %v4367
    %4370 = vmatprep.subr.bf16.mxu0 %v4028
    %4371 = vmatpush1.bf16.msra.mxu0 %v4027
    %4372 = vmatprep.subr.bf16.mxu0 %v4032
    %4373 = vmatpush1.bf16.msra.mxu0 %v4031
    %4374 = vmatprep.subr.bf16.mxu0 %v4036
    %4375 = vmatpush1.bf16.msra.mxu0 %v4035
    %4376 = vmatprep.subr.bf16.mxu0 %v4040
    %4377 = vmatpush1.bf16.msra.mxu0 %v4039
    %4378 = vmatprep.subr.bf16.mxu0 %v4044
    %4379 = vmatpush1.bf16.msra.mxu0 %v4043
    %4380 = vmatprep.subr.bf16.mxu0 %v4048
    %4381 = vmatpush1.bf16.msra.mxu0 %v4047
    %4382 = vmatprep.subr.bf16.mxu0 %v4052
    %4383 = vmatpush1.bf16.msra.mxu0 %v4051
    %4384 = vmatprep.subr.bf16.mxu0 %v4056
    %4385 = vmatpush1.bf16.msra.mxu0 %v4055
    %4386 = vmatprep.subr.bf16.mxu0 %v4060
    %4387 = vmatpush1.bf16.msra.mxu0 %v4059
    %4388 = vmatprep.subr.bf16.mxu0 %v4064
    %4389 = vmatpush1.bf16.msra.mxu0 %v4063
    %4390 = vmatprep.subr.bf16.mxu0 %v4068
    %4391 = vmatpush1.bf16.msra.mxu0 %v4067
    %4392 = vmatprep.subr.bf16.mxu0 %v4072
    %4393 = vmatpush1.bf16.msra.mxu0 %v4071
    %4394 = vmatprep.subr.bf16.mxu0 %v4076
    %4395 = vmatpush1.bf16.msra.mxu0 %v4075
    %4396 = vmatprep.subr.bf16.mxu0 %v4080
    %4397 = vmatpush1.bf16.msra.mxu0 %v4079
    %4398 = vmatprep.subr.bf16.mxu0 %v4084
    %4399 = vmatpush1.bf16.msra.mxu0 %v4083
    %4400 = vmatprep.subr.bf16.mxu0 %v4088
    %4401 = vmatpush1.bf16.msra.mxu0 %v4087
    %4402 = vmatprep.mubr.bf16.mxu0 %v4369
    %4403 = vmatmul.mubr.bf16.gmra.mrb[0].mxu0 %v4368
    %v4404 = vpop.f32.mrb[0].mxu0
    %v4405 = vadd.f32 %v3818, %v4404
    %v4406 = vpop.f32.mrb[0].mxu0
    %v4407 = vadd.f32 %v3822, %v4406
    %v4408 = vpop.f32.mrb[0].mxu0
    %v4409 = vpop.f32.mrb[0].mxu0
    %4410 = vdwg.mxu0
    %4411 = vmatprep.subr.bf16.mxu0 %v4030
    %4412 = vmatpush1.bf16.msra.mxu0 %v4029
    %4413 = vmatprep.subr.bf16.mxu0 %v4034
    %4414 = vmatpush1.bf16.msra.mxu0 %v4033
    %4415 = vmatprep.subr.bf16.mxu0 %v4038
    %4416 = vmatpush1.bf16.msra.mxu0 %v4037
    %4417 = vmatprep.subr.bf16.mxu0 %v4042
    %4418 = vmatpush1.bf16.msra.mxu0 %v4041
    %4419 = vmatprep.subr.bf16.mxu0 %v4046
    %4420 = vmatpush1.bf16.msra.mxu0 %v4045
    %4421 = vmatprep.subr.bf16.mxu0 %v4050
    %4422 = vmatpush1.bf16.msra.mxu0 %v4049
    %4423 = vmatprep.subr.bf16.mxu0 %v4054
    %4424 = vmatpush1.bf16.msra.mxu0 %v4053
    %4425 = vmatprep.subr.bf16.mxu0 %v4058
    %4426 = vmatpush1.bf16.msra.mxu0 %v4057
    %4427 = vmatprep.subr.bf16.mxu0 %v4062
    %4428 = vmatpush1.bf16.msra.mxu0 %v4061
    %4429 = vmatprep.subr.bf16.mxu0 %v4066
    %4430 = vmatpush1.bf16.msra.mxu0 %v4065
    %4431 = vmatprep.subr.bf16.mxu0 %v4070
    %4432 = vmatpush1.bf16.msra.mxu0 %v4069
    %4433 = vmatprep.subr.bf16.mxu0 %v4074
    %4434 = vmatpush1.bf16.msra.mxu0 %v4073
    %4435 = vmatprep.subr.bf16.mxu0 %v4078
    %4436 = vmatpush1.bf16.msra.mxu0 %v4077
    %4437 = vmatprep.subr.bf16.mxu0 %v4082
    %4438 = vmatpush1.bf16.msra.mxu0 %v4081
    %4439 = vmatprep.subr.bf16.mxu0 %v4086
    %4440 = vmatpush1.bf16.msra.mxu0 %v4085
    %4441 = vmatprep.subr.bf16.mxu0 %v4090
    %4442 = vmatpush1.bf16.msra.mxu0 %v4089
    %4443 = vmatprep.mubr.bf16.mxu0 %v4369
    %4444 = vmatmul.mubr.bf16.gmra.mrb[0].mxu0 %v4368
    %v4445 = vpop.f32.mrb[0].mxu0
    %v4446 = vadd.f32 %v3826, %v4445
    %v4447 = vpop.f32.mrb[0].mxu0
    %v4448 = vadd.f32 %v3830, %v4447
    %v4449 = vpop.f32.mrb[0].mxu0
    %v4450 = vpop.f32.mrb[0].mxu0
    %4451 = vdwg.mxu0
    %v4452 = vxor.u32 %v4405, 2147483648
    %v4453 = vxor.u32 %v4407, 2147483648
    %v4454 = vxor.u32 %v4446, 2147483648
    %v4455 = vmul.f32 %v4452, 1.442695
    %v4456 = vpow.pop %v4455
    %v4457 = vmul.f32 %v4453, 1.442695
    %v4458 = vpow.pop %v4457
    %v4459 = vmul.f32 %v4454, 1.442695
    %v4460 = vpow.pop %v4459
    %v4461 = vadd.f32 %v4456, 1.0
    %v4462 = vadd.f32 %v4458, 1.0
    %v4463 = vadd.f32 %v4460, 1.0
    %v4464 = vrcp.pop %v4461
    %v4465 = vmul.f32 1.0, %v4464
    %v4466 = vrcp.pop %v4462
    %v4467 = vmul.f32 1.0, %v4466
    %v4468 = vrcp.pop %v4463
    %v4469 = vmul.f32 1.0, %v4468
    %v4470 = vtanh.pop %v4448
    %v4471 = vmul.f32 %v4467, %v4365
    %v4472 = vmul.f32 %v4465, %v4470
    %v4473 = vadd.f32 %v4471, %v4472
    %v4474 = vtanh.pop %v4473
    %v4475 = vmul.f32 %v4469, %v4474
    %v4476 = vpack.c.bf16 %v4475, %v4475
    %v4477 = vld [vmem:[#allocation7] sm:$0xf]
    %v4478 = vld [vmem:[#allocation7 + $0x4] sm:$0xf]
    %v4479 = vld [vmem:[#allocation7 + $0x8] sm:$0xf]
    %v4480 = vld [vmem:[#allocation7 + $0xc] sm:$0xf]
    %v4481 = vld [vmem:[#allocation7 + $0x10] sm:$0xf]
    %v4482 = vld [vmem:[#allocation7 + $0x14] sm:$0xf]
    %v4483 = vld [vmem:[#allocation7 + $0x18] sm:$0xf]
    %v4484 = vld [vmem:[#allocation7 + $0x1c] sm:$0xf]
    %v4485 = vld [vmem:[#allocation7 + $0x20] sm:$0xf]
    %v4486 = vld [vmem:[#allocation7 + $0x24] sm:$0xf]
    %v4487 = vld [vmem:[#allocation7 + $0x28] sm:$0xf]
    %v4488 = vld [vmem:[#allocation7 + $0x2c] sm:$0xf]
    %v4489 = vld [vmem:[#allocation7 + $0x30] sm:$0xf]
    %v4490 = vld [vmem:[#allocation7 + $0x34] sm:$0xf]
    %v4491 = vld [vmem:[#allocation7 + $0x38] sm:$0xf]
    %v4492 = vld [vmem:[#allocation7 + $0x3c] sm:$0xf]
    %s4493 = sld [smem:[#allocation2]]
    %v4494 = vstv %s4493
    %v4511 = vunpack.c.l.b16 %v4477
    %v4512 = vunpack.c.l.b16 %v4478
    %v4513 = vunpack.c.l.b16 %v4479
    %v4514 = vunpack.c.l.b16 %v4480
    %v4515 = vunpack.c.l.b16 %v4481
    %v4516 = vunpack.c.l.b16 %v4482
    %v4517 = vunpack.c.l.b16 %v4483
    %v4518 = vunpack.c.l.b16 %v4484
    %v4519 = vunpack.c.l.b16 %v4485
    %v4520 = vunpack.c.l.b16 %v4486
    %v4521 = vunpack.c.l.b16 %v4487
    %v4522 = vunpack.c.l.b16 %v4488
    %v4523 = vunpack.c.l.b16 %v4489
    %v4524 = vunpack.c.l.b16 %v4490
    %v4525 = vunpack.c.l.b16 %v4491
    %v4526 = vunpack.c.l.b16 %v4492
    %v4527 = vpack.c.b16 %v4512, %v4511
    %v4528 = vpack.c.b16 %v4514, %v4513
    %v4529 = vpack.c.b16 %v4516, %v4515
    %v4530 = vpack.c.b16 %v4518, %v4517
    %v4531 = vpack.c.b16 %v4520, %v4519
    %v4532 = vpack.c.b16 %v4522, %v4521
    %v4533 = vpack.c.b16 %v4524, %v4523
    %v4534 = vpack.c.b16 %v4526, %v4525
    %4543 = vmatprep.subr.bf16.mxu0 0
    %4544 = vmatpush1.bf16.msra.mxu0 %v4527
    %4545 = vmatprep.subr.bf16.mxu0 0
    %4546 = vmatpush1.bf16.msra.mxu0 %v4528
    %4547 = vmatprep.subr.bf16.mxu0 0
    %4548 = vmatpush1.bf16.msra.mxu0 %v4529
    %4549 = vmatprep.subr.bf16.mxu0 0
    %4550 = vmatpush1.bf16.msra.mxu0 %v4530
    %4551 = vmatprep.subr.bf16.mxu0 0
    %4552 = vmatpush1.bf16.msra.mxu0 %v4531
    %4553 = vmatprep.subr.bf16.mxu0 0
    %4554 = vmatpush1.bf16.msra.mxu0 %v4532
    %4555 = vmatprep.subr.bf16.mxu0 0
    %4556 = vmatpush1.bf16.msra.mxu0 %v4533
    %4557 = vmatprep.subr.bf16.mxu0 0
    %4558 = vmatpush1.bf16.msra.mxu0 %v4534
    %4559 = vmatprep.subr.bf16.mxu0 0
    %4560 = vmatpush1.bf16.msra.mxu0 0
    %4561 = vmatprep.subr.bf16.mxu0 0
    %4562 = vmatpush1.bf16.msra.mxu0 0
    %4563 = vmatprep.subr.bf16.mxu0 0
    %4564 = vmatpush1.bf16.msra.mxu0 0
    %4565 = vmatprep.subr.bf16.mxu0 0
    %4566 = vmatpush1.bf16.msra.mxu0 0
    %4567 = vmatprep.subr.bf16.mxu0 0
    %4568 = vmatpush1.bf16.msra.mxu0 0
    %4569 = vmatprep.subr.bf16.mxu0 0
    %4570 = vmatpush1.bf16.msra.mxu0 0
    %4571 = vmatprep.subr.bf16.mxu0 0
    %4572 = vmatpush1.bf16.msra.mxu0 0
    %4573 = vmatprep.subr.bf16.mxu0 0
    %4574 = vmatpush1.bf16.msra.mxu0 0
    %4575 = vmatprep.mubr.bf16.mxu0 0
    %4576 = vmatmul.mubr.bf16.gmra.mrb[0].mxu0 %v4476
    %v4577 = vpop.f32.mrb[0].mxu0
    %v4578 = vadd.f32 %v4494, %v4577
    %v4579 = vpop.f32.mrb[0].mxu0
    %v4580 = vpop.f32.mrb[0].mxu0
    %v4581 = vpop.f32.mrb[0].mxu0
    %4582 = vdwg.mxu0
    %4583 = vst [vmem:[%s7] sm:$0xff] %v4578
    // Predicated region
    $region42: #{net_forward.1} parent=1 // pred_check
      _
    $region43: #{net_forward.1} parent=1 // pred_check_branch
      %4585 = sbr.rel (0) target = $region45
    $region44: #{net_forward.1} parent=1 // pred_region
      _
    $region45: #{net_forward.1} parent=1 // pred_fallthru
      _
    // Predicated region
    $region46: #{net_forward.1} parent=1 // pred_check
      _
    $region47: #{net_forward.1} parent=1 // pred_check_branch
      %4587 = sbr.rel (0) target = $region49
    $region48: #{net_forward.1} parent=1 // pred_region
      _
    $region49: #{net_forward.1} parent=1 // pred_fallthru
      _
    %4588 = vsyncpa [#allocation4], 1
    %4589 = vsyncpa [#allocation6], 1

</llo_original>
